<compile_context>
chip_gen: v5e
topology: v5e:2x2
jax: 0.10.0
libtpu: 0.0.40
codegen_flags: <defaults>
</compile_context>

<pallas_src>
import functools

import jax
import jax.numpy as jnp
from jax.experimental import pallas as pl
from jax.experimental.pallas import tpu as pltpu

EPS = 0.1                      # FAConv default eps
TILE_M = 256                   # propagation row tile (output rows per grid step)
TILE_K = 256                   # propagation column/reduction tile (fills 256-wide MXU)
H_PAD = 128                    # hidden dim padded to a full lane width
C_PAD = 128                    # class dim padded so the output store is lane-dense
MXU_DTYPE = jnp.bfloat16       # matmul operand dtype (accumulation stays f32)
VMEM_LIMIT = 32 * 1024 * 1024  # live blocks here are ~1.5 MiB; 32 MiB is <= the scoped
                               # default on v5e/v6e/v7x (v7x physical is only 64 MiB).


def _use_bf16_gate():
    """bf16 gate math only where bf16 VPU/EUP exist (v6e/v7x); f32 elsewhere (v5e etc.)."""
    try:
        kind = jax.devices()[0].device_kind.lower()
    except Exception:
        return False
    return ("v6" in kind) or ("v7" in kind)


# ---------------------------------------------------------------------------
# Kernel 1: Linear(F,H) + ReLU, plus layer-1 attention scalars (VPU reductions).
# Emits h0 (f32 residual) and the bf16 copy of h consumed by the first propagation.
# ---------------------------------------------------------------------------
def prologue_kernel(x_ref, w1_ref, b1_ref, al_ref, ar_ref,
                    h0_ref, hbf_ref, a_l_ref, a_r_ref):
    h = jnp.dot(x_ref[...].astype(MXU_DTYPE), w1_ref[...],
                preferred_element_type=jnp.float32) + b1_ref[...]
    h = jnp.maximum(h, 0.0)                       # ReLU (dropout = identity in eval)
    h0_ref[...] = h
    hbf_ref[...] = h.astype(MXU_DTYPE)
    # Attention scalars: VPU mul + lane reduction, no 1-lane-wide MXU matmul.
    a_l_ref[...] = jnp.sum(h * al_ref[...], axis=1, keepdims=True)
    a_r_ref[...] = jnp.sum(h * ar_ref[...], axis=1, keepdims=True)


# ---------------------------------------------------------------------------
# Shared FAConv accumulation step over one (row_tile, col_block) pair.
# ---------------------------------------------------------------------------
def _faconv_accumulate(a_r_ref, a_l_ref, adj_ref, h_ref, acc_ref, gate_bf16):
    if gate_bf16:
        # bf16 broadcast-add + bf16 tanh (EUP) + bf16 mul: v6e/v7x only.
        a = a_r_ref[...].astype(MXU_DTYPE) + a_l_ref[...].astype(MXU_DTYPE)
        ga = jnp.tanh(a) * adj_ref[...]
    else:
        a = a_r_ref[...] + a_l_ref[...]
        ga = (jnp.tanh(a) * adj_ref[...].astype(jnp.float32)).astype(MXU_DTYPE)
    acc_ref[...] += jnp.dot(ga, h_ref[...], preferred_element_type=jnp.float32)


# ---------------------------------------------------------------------------
# Kernel 2: one FAConv layer (non-final).  grid = (row_tiles, col_block_slots).
# Also emits the NEXT layer's attention scalars at the last slot (hoisted out of
# the next layer's tile loop).  Empty adjacency blocks are skipped via pl.when.
# ---------------------------------------------------------------------------
def faconv_kernel(ids_ref, cnt_ref,
                  a_r_ref, a_l_ref, adj_ref, h_ref, h0_ref,
                  al_nxt_ref, ar_nxt_ref,
                  h_out_ref, a_l_out_ref, a_r_out_ref,
                  acc_ref, *, gate_bf16):
    del ids_ref  # consumed by the index_maps only
    i = pl.program_id(0)
    j = pl.program_id(1)

    @pl.when(j == 0)
    def _():
        acc_ref[...] = jnp.zeros_like(acc_ref)

    @pl.when(j < cnt_ref[i])                       # skip empty adjacency blocks
    def _():
        _faconv_accumulate(a_r_ref, a_l_ref, adj_ref, h_ref, acc_ref, gate_bf16)

    @pl.when(j == pl.num_programs(1) - 1)
    def _():
        h_new = acc_ref[...] + EPS * h0_ref[...]
        h_out_ref[...] = h_new.astype(h_out_ref.dtype)     # bf16 stream to next layer
        a_l_out_ref[...] = jnp.sum(h_new * al_nxt_ref[...], axis=1, keepdims=True)
        a_r_out_ref[...] = jnp.sum(h_new * ar_nxt_ref[...], axis=1, keepdims=True)


# ---------------------------------------------------------------------------
# Kernel 3: final FAConv layer with the epilogue fused into its last slot:
#   logits = (acc + eps*h0) @ W2 + b2 ; mask padded classes ; log_softmax.
# ---------------------------------------------------------------------------
def faconv_final_kernel(ids_ref, cnt_ref,
                        a_r_ref, a_l_ref, adj_ref, h_ref, h0_ref,
                        w2_ref, b2_ref,
                        out_ref,
                        acc_ref, *, gate_bf16, num_classes):
    del ids_ref
    i = pl.program_id(0)
    j = pl.program_id(1)

    @pl.when(j == 0)
    def _():
        acc_ref[...] = jnp.zeros_like(acc_ref)

    @pl.when(j < cnt_ref[i])
    def _():
        _faconv_accumulate(a_r_ref, a_l_ref, adj_ref, h_ref, acc_ref, gate_bf16)

    @pl.when(j == pl.num_programs(1) - 1)
    def _():
        h_new = acc_ref[...] + EPS * h0_ref[...]
        logits = jnp.dot(h_new.astype(MXU_DTYPE), w2_ref[...],
                         preferred_element_type=jnp.float32) + b2_ref[...]
        col = jax.lax.broadcasted_iota(jnp.int32, logits.shape, 1)
        logits = jnp.where(col < num_classes, logits, jnp.float32(-1e30))
        m = jnp.max(logits, axis=1, keepdims=True)
        z = logits - m
        lse = jnp.log(jnp.sum(jnp.exp(z), axis=1, keepdims=True))
        out_ref[...] = z - lse


# ---------------------------------------------------------------------------
# Wrapper
# ---------------------------------------------------------------------------
def _pad2(a, rows, cols, dtype=None):
    dtype = a.dtype if dtype is None else dtype
    return jnp.zeros((rows, cols), dtype).at[:a.shape[0], :a.shape[1]].set(a.astype(dtype))


def fagcn_forward(x, adj, params):
    w1, b1, al1, ar1, al2, ar2, w2, b2 = params
    n, f = x.shape
    c = w2.shape[1]
    tile = max(TILE_M, TILE_K)                        # TILE_M == TILE_K == 256
    n_p = ((n + tile - 1) // tile) * tile
    ni = n_p // TILE_M
    nj = n_p // TILE_K
    gate_bf16 = _use_bf16_gate()

    x_p = _pad2(x, n_p, f)
    # bf16 adjacency (dominant HBM term).  NOTE: ~0.4% relative rounding on edge weights
    # on top of the bf16 gate rounding -- fine for ~2e-2 accuracy, revisit if edge weights
    # carry >3 significant digits.
    adj_p = _pad2(adj, n_p, n_p, MXU_DTYPE)
    w1_p = _pad2(w1, f, H_PAD, MXU_DTYPE)
    b1_p = _pad2(b1, 1, H_PAD)
    w2_p = _pad2(w2, H_PAD, C_PAD, MXU_DTYPE)
    b2_p = _pad2(b2, 1, C_PAD)
    al1_r = _pad2(al1.reshape(1, -1), 1, H_PAD)       # att vectors as (1,H) rows (VPU form)
    ar1_r = _pad2(ar1.reshape(1, -1), 1, H_PAD)
    al2_r = _pad2(al2.reshape(1, -1), 1, H_PAD)
    ar2_r = _pad2(ar2.reshape(1, -1), 1, H_PAD)

    # --- block-sparse metadata: per row tile, compacted list of nonzero column blocks ---
    # Tail slots repeat the last valid id so their DMAs are skipped (index unchanged) and
    # their compute is pl.when-guarded out.  Grid extent stays nj (static under jit).
    # TODO(synk): shrink the slot axis to max-nnz-blocks with host-side CSR preprocessing
    # so per-step loop overhead also scales with E instead of N^2.
    nzb = jnp.any((adj_p != 0).reshape(ni, TILE_M, nj, TILE_K), axis=(1, 3))   # (ni, nj)
    col = jnp.arange(nj, dtype=jnp.int32)
    key = jnp.where(nzb, col, col + nj)               # valid blocks first, in column order
    order = jnp.argsort(key, axis=1).astype(jnp.int32)
    blk_cnt = jnp.sum(nzb, axis=1).astype(jnp.int32)                          # (ni,)
    slot = jnp.minimum(col[None, :], jnp.maximum(blk_cnt - 1, 0)[:, None])
    blk_ids = jnp.take_along_axis(order, slot, axis=1).reshape(-1)            # (ni*nj,) i32

    cp_rows = pltpu.CompilerParams(dimension_semantics=("parallel",),
                                   vmem_limit_bytes=VMEM_LIMIT)
    cp_prop = pltpu.CompilerParams(dimension_semantics=("parallel", "arbitrary"),
                                   vmem_limit_bytes=VMEM_LIMIT)

    # ---- prologue: h0 = relu(x@w1 + b1), bf16 h copy, layer-1 alphas ----
    h0, h0_bf, a_l1, a_r1 = pl.pallas_call(
        prologue_kernel,
        grid=(ni,),
        in_specs=[
            pl.BlockSpec((TILE_M, f), lambda i: (i, 0)),
            pl.BlockSpec((f, H_PAD), lambda i: (0, 0)),
            pl.BlockSpec((1, H_PAD), lambda i: (0, 0)),
            pl.BlockSpec((1, H_PAD), lambda i: (0, 0)),
            pl.BlockSpec((1, H_PAD), lambda i: (0, 0)),
        ],
        out_specs=[
            pl.BlockSpec((TILE_M, H_PAD), lambda i: (i, 0)),
            pl.BlockSpec((TILE_M, H_PAD), lambda i: (i, 0)),
            pl.BlockSpec((TILE_M, 1), lambda i: (i, 0)),
            pl.BlockSpec((TILE_M, 1), lambda i: (i, 0)),
        ],
        out_shape=[
            jax.ShapeDtypeStruct((n_p, H_PAD), jnp.float32),
            jax.ShapeDtypeStruct((n_p, H_PAD), MXU_DTYPE),
            jax.ShapeDtypeStruct((n_p, 1), jnp.float32),
            jax.ShapeDtypeStruct((n_p, 1), jnp.float32),
        ],
        compiler_params=cp_rows,
    )(x_p, w1_p, b1_p, al1_r, ar1_r)

    # Cost estimate (dense upper bound): includes adj, re-streamed bf16 h, h0, outputs, alphas.
    prop_bytes = (n_p * n_p * 2                    # adj (bf16)
                  + ni * n_p * H_PAD * 2           # h re-streamed per row tile (bf16)
                  + n_p * H_PAD * (4 + 2)          # h0 read (f32) + h_out write (bf16)
                  + ni * n_p * 4 + 4 * n_p * 4)    # alpha_l row re-reads + alpha cols in/out
    prop_cost = pl.CostEstimate(
        flops=2 * n_p * n_p * H_PAD + 6 * n_p * n_p,
        transcendentals=n_p * n_p,
        bytes_accessed=prop_bytes,
    )

    def _prop_in_specs():
        # Index maps follow the compacted nonzero-block ids (scalar-prefetched).
        return [
            pl.BlockSpec((TILE_M, 1), lambda i, j, ids, cnt: (i, 0)),                # alpha_r
            pl.BlockSpec((1, TILE_K), lambda i, j, ids, cnt: (0, ids[i * nj + j])),  # alpha_l
            pl.BlockSpec((TILE_M, TILE_K),
                         lambda i, j, ids, cnt: (i, ids[i * nj + j])),               # adj
            pl.BlockSpec((TILE_K, H_PAD),
                         lambda i, j, ids, cnt: (ids[i * nj + j], 0)),               # h (bf16)
            pl.BlockSpec((TILE_M, H_PAD), lambda i, j, ids, cnt: (i, 0)),            # h0 (f32)
        ]
        # NOTE: pipeline_mode=pl.Buffered(3) on adj/h is an optional knob to deepen
        # pipelining; left at the default double-buffering here.

    def faconv(h_in, a_l_col, a_r_col, al_nxt, ar_nxt):
        # One-time (N,1)->(1,N) relayout, outside the (i,j) tile loop (layout plumbing).
        a_l_row = a_l_col.reshape(1, n_p)
        return pl.pallas_call(
            functools.partial(faconv_kernel, gate_bf16=gate_bf16),
            grid_spec=pltpu.PrefetchScalarGridSpec(
                num_scalar_prefetch=2,
                grid=(ni, nj),                                       # reduction axis last
                in_specs=_prop_in_specs() + [
                    pl.BlockSpec((1, H_PAD), lambda i, j, ids, cnt: (0, 0)),  # next att_l
                    pl.BlockSpec((1, H_PAD), lambda i, j, ids, cnt: (0, 0)),  # next att_r
                ],
                out_specs=[
                    pl.BlockSpec((TILE_M, H_PAD), lambda i, j, ids, cnt: (i, 0)),
                    pl.BlockSpec((TILE_M, 1), lambda i, j, ids, cnt: (i, 0)),
                    pl.BlockSpec((TILE_M, 1), lambda i, j, ids, cnt: (i, 0)),
                ],
                scratch_shapes=[pltpu.VMEM((TILE_M, H_PAD), jnp.float32)],
            ),
            out_shape=[
                jax.ShapeDtypeStruct((n_p, H_PAD), MXU_DTYPE),       # bf16 h stream
                jax.ShapeDtypeStruct((n_p, 1), jnp.float32),
                jax.ShapeDtypeStruct((n_p, 1), jnp.float32),
            ],
            compiler_params=cp_prop,
            cost_estimate=prop_cost,
        )(blk_ids, blk_cnt, a_r_col, a_l_row, adj_p, h_in, h0, al_nxt, ar_nxt)

    def faconv_final(h_in, a_l_col, a_r_col):
        a_l_row = a_l_col.reshape(1, n_p)
        return pl.pallas_call(
            functools.partial(faconv_final_kernel, gate_bf16=gate_bf16, num_classes=c),
            grid_spec=pltpu.PrefetchScalarGridSpec(
                num_scalar_prefetch=2,
                grid=(ni, nj),
                in_specs=_prop_in_specs() + [
                    pl.BlockSpec((H_PAD, C_PAD), lambda i, j, ids, cnt: (0, 0)),  # W2 (bf16)
                    pl.BlockSpec((1, C_PAD), lambda i, j, ids, cnt: (0, 0)),      # b2
                ],
                out_specs=pl.BlockSpec((TILE_M, C_PAD), lambda i, j, ids, cnt: (i, 0)),
                scratch_shapes=[pltpu.VMEM((TILE_M, H_PAD), jnp.float32)],
            ),
            out_shape=jax.ShapeDtypeStruct((n_p, C_PAD), jnp.float32),
            compiler_params=cp_prop,
            cost_estimate=prop_cost,
        )(blk_ids, blk_cnt, a_r_col, a_l_row, adj_p, h_in, h0, w2_p, b2_p)

    # FAConv layer 1 (also produces layer-2's attention scalars).
    h1, a_l2, a_r2 = faconv(h0_bf, a_l1, a_r1, al2_r, ar2_r)
    # FAConv layer 2 with the Linear(H,C) + log_softmax epilogue fused into its last slot.
    out_p = faconv_final(h1, a_l2, a_r2)

    return out_p[:n, :c]


def fagcn_reference(x, edge_index, edge_weight, params):
    """Pure-JAX edge-list (gather/scatter) reference matching PyG FAConv semantics (f32)."""
    w1, b1, al1, ar1, al2, ar2, w2, b2 = params
    h = jax.nn.relu(x @ w1 + b1)
    h0 = h
    src, dst = edge_index[0], edge_index[1]
    for al, ar in ((al1, ar1), (al2, ar2)):
        alpha_l = (h @ al)[:, 0]
        alpha_r = (h @ ar)[:, 0]
        gate = jnp.tanh(alpha_l[src] + alpha_r[dst]) * edge_weight
        agg = jnp.zeros_like(h).at[dst].add(h[src] * gate[:, None])
        h = agg + EPS * h0
    logits = h @ w2 + b2
    return jax.nn.log_softmax(logits, axis=1)


if __name__ == "__main__":
    # Small synthetic graph: N nodes, F input features, H hidden, C classes, E edges.
    N, F, H, C, E = 16, 8, 32, 4, 48

    key = jax.random.PRNGKey(0)
    keys = jax.random.split(key, 12)

    w1 = jax.random.normal(keys[0], (F, H), jnp.float32) * 0.1
    b1 = jax.random.normal(keys[1], (1, H), jnp.float32) * 0.1
    al1 = jax.random.normal(keys[2], (H, 1), jnp.float32) * 0.1   # FAConv.att_l (no bias)
    ar1 = jax.random.normal(keys[3], (H, 1), jnp.float32) * 0.1   # FAConv.att_r (no bias)
    al2 = jax.random.normal(keys[4], (H, 1), jnp.float32) * 0.1
    ar2 = jax.random.normal(keys[5], (H, 1), jnp.float32) * 0.1
    w2 = jax.random.normal(keys[6], (H, C), jnp.float32) * 0.1
    b2 = jax.random.normal(keys[7], (1, C), jnp.float32) * 0.1
    params = (w1, b1, al1, ar1, al2, ar2, w2, b2)

    x = jax.random.normal(keys[8], (N, F), jnp.float32)
    src = jax.random.randint(keys[9], (E,), 0, N)
    dst = jax.random.randint(keys[10], (E,), 0, N)
    edge_index = jnp.stack([src, dst], axis=0)
    edge_attr = jax.random.uniform(keys[11], (E,), jnp.float32, 0.1, 1.0)

    # Glue: dense scatter of edge weights -> adjacency used by the kernels.
    adj = jnp.zeros((N, N), jnp.float32).at[dst, src].add(edge_attr)

    fwd = jax.jit(fagcn_forward)
    out = jax.block_until_ready(fwd(x, adj, params))

    ref = fagcn_reference(x, edge_index, edge_attr, params)
    assert out.shape == (N, C)
    # bf16 MXU operands / bf16 h stream (f32 accumulation) -> loose tolerance vs f32 ref.
    assert jnp.allclose(out, ref, rtol=2e-2, atol=2e-2), "Pallas kernel mismatch vs reference"
    assert bool(jnp.all(jnp.isfinite(out)))

    print("KERNEL_OK")
</pallas_src>

<mosaic_0001>
module attributes {stable_mosaic.version = 11 : i64} {
  func.func @prologue_kernel(%arg0: i32, %arg1: memref<256x8xf32, #tpu.memory_space<vmem>>, %arg2: memref<8x128xbf16, #tpu.memory_space<vmem>>, %arg3: memref<1x128xf32, #tpu.memory_space<vmem>>, %arg4: memref<1x128xf32, #tpu.memory_space<vmem>>, %arg5: memref<1x128xf32, #tpu.memory_space<vmem>>, %arg6: memref<256x128xf32, #tpu.memory_space<vmem>>, %arg7: memref<256x128xbf16, #tpu.memory_space<vmem>>, %arg8: memref<256x1xf32, #tpu.memory_space<vmem>>, %arg9: memref<256x1xf32, #tpu.memory_space<vmem>>) attributes {dimension_semantics = [#tpu.dimension_semantics<parallel>], iteration_bounds = array<i64: 1>, scalar_prefetch = 0 : i64, scratch_operands = 0 : i64, tpu.core_type = #tpu.core_type<tc>, window_params = [{transform_indices = @transform_0, window_bounds = array<i64: 256, 8>}, {pipeline_mode = #tpu.pipeline_mode<synchronous>, transform_indices = @transform_1, window_bounds = array<i64: 8, 128>}, {pipeline_mode = #tpu.pipeline_mode<synchronous>, transform_indices = @transform_2, window_bounds = array<i64: 1, 128>}, {pipeline_mode = #tpu.pipeline_mode<synchronous>, transform_indices = @transform_3, window_bounds = array<i64: 1, 128>}, {pipeline_mode = #tpu.pipeline_mode<synchronous>, transform_indices = @transform_4, window_bounds = array<i64: 1, 128>}, {transform_indices = @transform_5, window_bounds = array<i64: 256, 128>}, {transform_indices = @transform_6, window_bounds = array<i64: 256, 128>}, {transform_indices = @transform_7, window_bounds = array<i64: 256, 1>}, {transform_indices = @transform_8, window_bounds = array<i64: 256, 1>}]} {
    %c0 = arith.constant 0 : index
    %c0_0 = arith.constant 0 : index
    %0 = vector.load %arg1[%c0, %c0_0] : memref<256x8xf32, #tpu.memory_space<vmem>>, vector<256x8xf32>
    %1 = arith.truncf %0 : vector<256x8xf32> to vector<256x8xbf16>
    %c0_1 = arith.constant 0 : index
    %c0_2 = arith.constant 0 : index
    %2 = vector.load %arg2[%c0_1, %c0_2] : memref<8x128xbf16, #tpu.memory_space<vmem>>, vector<8x128xbf16>
    %cst = arith.constant dense<0.000000e+00> : vector<256x128xf32>
    %3 = tpu.matmul %1, %2, %cst {dimension_numbers = #tpu.dot_dimension_numbers<[1], [0], [0], [1], [0, 0, 1, 1], [], []>} : vector<256x8xbf16>, vector<8x128xbf16>, vector<256x128xf32> -> vector<256x128xf32>
    %c0_3 = arith.constant 0 : index
    %c0_4 = arith.constant 0 : index
    %4 = vector.load %arg3[%c0_3, %c0_4] : memref<1x128xf32, #tpu.memory_space<vmem>>, vector<1x128xf32>
    %5 = vector.broadcast %4 : vector<1x128xf32> to vector<256x128xf32>
    %6 = arith.addf %3, %5 : vector<256x128xf32>
    %cst_5 = arith.constant 0.000000e+00 : f32
    %7 = vector.broadcast %cst_5 : f32 to vector<256x128xf32>
    %8 = arith.maximumf %6, %7 : vector<256x128xf32>
    %c0_6 = arith.constant 0 : index
    %c0_7 = arith.constant 0 : index
    %9 = vector.load %arg6[%c0_6, %c0_7] : memref<256x128xf32, #tpu.memory_space<vmem>>, vector<256x128xf32>
    tpu.vector_store %arg6[%c0_6, %c0_7], %8 {strides = array<i32>} : memref<256x128xf32, #tpu.memory_space<vmem>>, vector<256x128xf32>,
    %10 = arith.truncf %8 : vector<256x128xf32> to vector<256x128xbf16>
    %c0_8 = arith.constant 0 : index
    %c0_9 = arith.constant 0 : index
    %11 = vector.load %arg7[%c0_8, %c0_9] : memref<256x128xbf16, #tpu.memory_space<vmem>>, vector<256x128xbf16>
    tpu.vector_store %arg7[%c0_8, %c0_9], %10 {strides = array<i32>} : memref<256x128xbf16, #tpu.memory_space<vmem>>, vector<256x128xbf16>,
    %c0_10 = arith.constant 0 : index
    %c0_11 = arith.constant 0 : index
    %12 = vector.load %arg4[%c0_10, %c0_11] : memref<1x128xf32, #tpu.memory_space<vmem>>, vector<1x128xf32>
    %13 = vector.broadcast %12 : vector<1x128xf32> to vector<256x128xf32>
    %14 = arith.mulf %8, %13 : vector<256x128xf32>
    %cst_12 = arith.constant dense<0.000000e+00> : vector<256xf32>
    %15 = vector.multi_reduction <add>, %14, %cst_12 [1] : vector<256x128xf32> to vector<256xf32>
    %16 = vector.shape_cast %15 : vector<256xf32> to vector<256x1xf32>
    %c0_13 = arith.constant 0 : index
    %c0_14 = arith.constant 0 : index
    %17 = vector.load %arg8[%c0_13, %c0_14] : memref<256x1xf32, #tpu.memory_space<vmem>>, vector<256x1xf32>
    tpu.vector_store %arg8[%c0_13, %c0_14], %16 {strides = array<i32>} : memref<256x1xf32, #tpu.memory_space<vmem>>, vector<256x1xf32>,
    %c0_15 = arith.constant 0 : index
    %c0_16 = arith.constant 0 : index
    %18 = vector.load %arg5[%c0_15, %c0_16] : memref<1x128xf32, #tpu.memory_space<vmem>>, vector<1x128xf32>
    %19 = vector.broadcast %18 : vector<1x128xf32> to vector<256x128xf32>
    %20 = arith.mulf %8, %19 : vector<256x128xf32>
    %cst_17 = arith.constant dense<0.000000e+00> : vector<256xf32>
    %21 = vector.multi_reduction <add>, %20, %cst_17 [1] : vector<256x128xf32> to vector<256xf32>
    %22 = vector.shape_cast %21 : vector<256xf32> to vector<256x1xf32>
    %c0_18 = arith.constant 0 : index
    %c0_19 = arith.constant 0 : index
    %23 = vector.load %arg9[%c0_18, %c0_19] : memref<256x1xf32, #tpu.memory_space<vmem>>, vector<256x1xf32>
    tpu.vector_store %arg9[%c0_18, %c0_19], %22 {strides = array<i32>} : memref<256x1xf32, #tpu.memory_space<vmem>>, vector<256x1xf32>,
    return
  }
  func.func @transform_0(%arg0: i32) -> (i32, i32) {
    %c0_i32 = arith.constant 0 : i32
    %c0_i32_0 = arith.constant 0 : i32
    return %arg0, %c0_i32 : i32, i32
  }
  func.func @transform_1(%arg0: i32) -> (i32, i32) {
    %c0_i32 = arith.constant 0 : i32
    %c0_i32_0 = arith.constant 0 : i32
    %c0_i32_1 = arith.constant 0 : i32
    return %c0_i32, %c0_i32_0 : i32, i32
  }
  func.func @transform_2(%arg0: i32) -> (i32, i32) {
    %c0_i32 = arith.constant 0 : i32
    %c0_i32_0 = arith.constant 0 : i32
    %c0_i32_1 = arith.constant 0 : i32
    return %c0_i32, %c0_i32_0 : i32, i32
  }
  func.func @transform_3(%arg0: i32) -> (i32, i32) {
    %c0_i32 = arith.constant 0 : i32
    %c0_i32_0 = arith.constant 0 : i32
    %c0_i32_1 = arith.constant 0 : i32
    return %c0_i32, %c0_i32_0 : i32, i32
  }
  func.func @transform_4(%arg0: i32) -> (i32, i32) {
    %c0_i32 = arith.constant 0 : i32
    %c0_i32_0 = arith.constant 0 : i32
    %c0_i32_1 = arith.constant 0 : i32
    return %c0_i32, %c0_i32_0 : i32, i32
  }
  func.func @transform_5(%arg0: i32) -> (i32, i32) {
    %c0_i32 = arith.constant 0 : i32
    %c0_i32_0 = arith.constant 0 : i32
    return %arg0, %c0_i32 : i32, i32
  }
  func.func @transform_6(%arg0: i32) -> (i32, i32) {
    %c0_i32 = arith.constant 0 : i32
    %c0_i32_0 = arith.constant 0 : i32
    return %arg0, %c0_i32 : i32, i32
  }
  func.func @transform_7(%arg0: i32) -> (i32, i32) {
    %c0_i32 = arith.constant 0 : i32
    %c0_i32_0 = arith.constant 0 : i32
    return %arg0, %c0_i32 : i32, i32
  }
  func.func @transform_8(%arg0: i32) -> (i32, i32) {
    %c0_i32 = arith.constant 0 : i32
    %c0_i32_0 = arith.constant 0 : i32
    return %arg0, %c0_i32 : i32, i32
  }
}

module attributes {stable_mosaic.version = 11 : i64} {
  func.func @faconv_kernel(%arg0: i32, %arg1: i32, %arg2: memref<1xi32, #tpu.memory_space<smem>>, %arg3: memref<1xi32, #tpu.memory_space<smem>>, %arg4: memref<256x1xf32, #tpu.memory_space<vmem>>, %arg5: memref<1x256xf32, #tpu.memory_space<vmem>>, %arg6: memref<256x256xbf16, #tpu.memory_space<vmem>>, %arg7: memref<256x128xbf16, #tpu.memory_space<vmem>>, %arg8: memref<256x128xf32, #tpu.memory_space<vmem>>, %arg9: memref<1x128xf32, #tpu.memory_space<vmem>>, %arg10: memref<1x128xf32, #tpu.memory_space<vmem>>, %arg11: memref<256x128xbf16, #tpu.memory_space<vmem>>, %arg12: memref<256x1xf32, #tpu.memory_space<vmem>>, %arg13: memref<256x1xf32, #tpu.memory_space<vmem>>, %arg14: memref<256x128xf32, #tpu.memory_space<vmem>>) attributes {dimension_semantics = [#tpu.dimension_semantics<parallel>, #tpu.dimension_semantics<arbitrary>], iteration_bounds = array<i64: 1, 1>, scalar_prefetch = 2 : i64, scratch_operands = 1 : i64, tpu.core_type = #tpu.core_type<tc>, window_params = [{transform_indices = @transform_0, window_bounds = array<i64: 256, 1>}, {transform_indices = @transform_1, window_bounds = array<i64: 1, 256>}, {transform_indices = @transform_2, window_bounds = array<i64: 256, 256>}, {transform_indices = @transform_3, window_bounds = array<i64: 256, 128>}, {transform_indices = @transform_4, window_bounds = array<i64: 256, 128>}, {pipeline_mode = #tpu.pipeline_mode<synchronous>, transform_indices = @transform_5, window_bounds = array<i64: 1, 128>}, {pipeline_mode = #tpu.pipeline_mode<synchronous>, transform_indices = @transform_6, window_bounds = array<i64: 1, 128>}, {transform_indices = @transform_7, window_bounds = array<i64: 256, 128>}, {transform_indices = @transform_8, window_bounds = array<i64: 256, 1>}, {transform_indices = @transform_9, window_bounds = array<i64: 256, 1>}]} {
    %c0_i32 = arith.constant 0 : i32
    %0 = arith.cmpi eq, %arg1, %c0_i32 : i32
    %1 = arith.extui %0 : i1 to i32
    %c0_i32_0 = arith.constant 0 : i32
    %2 = arith.cmpi ne, %1, %c0_i32_0 : i32
    scf.if %2 {
      %cst = arith.constant 0.000000e+00 : f32
      %11 = vector.broadcast %cst : f32 to vector<256x128xf32>
      %c0 = arith.constant 0 : index
      %c0_4 = arith.constant 0 : index
      %12 = vector.load %arg14[%c0, %c0_4] : memref<256x128xf32, #tpu.memory_space<vmem>>, vector<256x128xf32>
      tpu.vector_store %arg14[%c0, %c0_4], %11 {strides = array<i32>} : memref<256x128xf32, #tpu.memory_space<vmem>>, vector<256x128xf32>,
    } else {
    }
    %3 = arith.index_cast %arg0 : i32 to index
    %4 = memref.load %arg3[%3] : memref<1xi32, #tpu.memory_space<smem>>
    %5 = arith.cmpi slt, %arg1, %4 : i32
    %6 = arith.extui %5 : i1 to i32
    %c0_i32_1 = arith.constant 0 : i32
    %7 = arith.cmpi ne, %6, %c0_i32_1 : i32
    scf.if %7 {
      %c0 = arith.constant 0 : index
      %c0_4 = arith.constant 0 : index
      %11 = vector.load %arg4[%c0, %c0_4] : memref<256x1xf32, #tpu.memory_space<vmem>>, vector<256x1xf32>
      %c0_5 = arith.constant 0 : index
      %c0_6 = arith.constant 0 : index
      %12 = vector.load %arg5[%c0_5, %c0_6] : memref<1x256xf32, #tpu.memory_space<vmem>>, vector<1x256xf32>
      %13 = vector.broadcast %11 : vector<256x1xf32> to vector<256x256xf32>
      %14 = vector.broadcast %12 : vector<1x256xf32> to vector<256x256xf32>
      %15 = arith.addf %13, %14 : vector<256x256xf32>
      %16 = math.tanh %15 : vector<256x256xf32>
      %c0_7 = arith.constant 0 : index
      %c0_8 = arith.constant 0 : index
      %17 = vector.load %arg6[%c0_7, %c0_8] : memref<256x256xbf16, #tpu.memory_space<vmem>>, vector<256x256xbf16>
      %18 = arith.extf %17 : vector<256x256xbf16> to vector<256x256xf32>
      %19 = arith.mulf %16, %18 : vector<256x256xf32>
      %20 = arith.truncf %19 : vector<256x256xf32> to vector<256x256xbf16>
      %c0_9 = arith.constant 0 : index
      %c0_10 = arith.constant 0 : index
      %21 = vector.load %arg14[%c0_9, %c0_10] : memref<256x128xf32, #tpu.memory_space<vmem>>, vector<256x128xf32>
      %c0_11 = arith.constant 0 : index
      %c0_12 = arith.constant 0 : index
      %22 = vector.load %arg7[%c0_11, %c0_12] : memref<256x128xbf16, #tpu.memory_space<vmem>>, vector<256x128xbf16>
      %cst = arith.constant dense<0.000000e+00> : vector<256x128xf32>
      %23 = tpu.matmul %20, %22, %cst {dimension_numbers = #tpu.dot_dimension_numbers<[1], [0], [0], [1], [0, 0, 1, 1], [], []>} : vector<256x256xbf16>, vector<256x128xbf16>, vector<256x128xf32> -> vector<256x128xf32>
      %24 = arith.addf %21, %23 : vector<256x128xf32>
      %c0_13 = arith.constant 0 : index
      %c0_14 = arith.constant 0 : index
      %25 = vector.load %arg14[%c0_13, %c0_14] : memref<256x128xf32, #tpu.memory_space<vmem>>, vector<256x128xf32>
      tpu.vector_store %arg14[%c0_13, %c0_14], %24 {strides = array<i32>} : memref<256x128xf32, #tpu.memory_space<vmem>>, vector<256x128xf32>,
    } else {
    }
    %c0_i32_2 = arith.constant 0 : i32
    %8 = arith.cmpi eq, %arg1, %c0_i32_2 : i32
    %9 = arith.extui %8 : i1 to i32
    %c0_i32_3 = arith.constant 0 : i32
    %10 = arith.cmpi ne, %9, %c0_i32_3 : i32
    scf.if %10 {
      %c0 = arith.constant 0 : index
      %c0_4 = arith.constant 0 : index
      %11 = vector.load %arg14[%c0, %c0_4] : memref<256x128xf32, #tpu.memory_space<vmem>>, vector<256x128xf32>
      %c0_5 = arith.constant 0 : index
      %c0_6 = arith.constant 0 : index
      %12 = vector.load %arg8[%c0_5, %c0_6] : memref<256x128xf32, #tpu.memory_space<vmem>>, vector<256x128xf32>
      %cst = arith.constant 1.000000e-01 : f32
      %13 = vector.broadcast %cst : f32 to vector<256x128xf32>
      %14 = arith.mulf %13, %12 : vector<256x128xf32>
      %15 = arith.addf %11, %14 : vector<256x128xf32>
      %16 = arith.truncf %15 : vector<256x128xf32> to vector<256x128xbf16>
      %c0_7 = arith.constant 0 : index
      %c0_8 = arith.constant 0 : index
      %17 = vector.load %arg11[%c0_7, %c0_8] : memref<256x128xbf16, #tpu.memory_space<vmem>>, vector<256x128xbf16>
      tpu.vector_store %arg11[%c0_7, %c0_8], %16 {strides = array<i32>} : memref<256x128xbf16, #tpu.memory_space<vmem>>, vector<256x128xbf16>,
      %c0_9 = arith.constant 0 : index
      %c0_10 = arith.constant 0 : index
      %18 = vector.load %arg9[%c0_9, %c0_10] : memref<1x128xf32, #tpu.memory_space<vmem>>, vector<1x128xf32>
      %19 = vector.broadcast %18 : vector<1x128xf32> to vector<256x128xf32>
      %20 = arith.mulf %15, %19 : vector<256x128xf32>
      %cst_11 = arith.constant dense<0.000000e+00> : vector<256xf32>
      %21 = vector.multi_reduction <add>, %20, %cst_11 [1] : vector<256x128xf32> to vector<256xf32>
      %22 = vector.shape_cast %21 : vector<256xf32> to vector<256x1xf32>
      %c0_12 = arith.constant 0 : index
      %c0_13 = arith.constant 0 : index
      %23 = vector.load %arg12[%c0_12, %c0_13] : memref<256x1xf32, #tpu.memory_space<vmem>>, vector<256x1xf32>
      tpu.vector_store %arg12[%c0_12, %c0_13], %22 {strides = array<i32>} : memref<256x1xf32, #tpu.memory_space<vmem>>, vector<256x1xf32>,
      %c0_14 = arith.constant 0 : index
      %c0_15 = arith.constant 0 : index
      %24 = vector.load %arg10[%c0_14, %c0_15] : memref<1x128xf32, #tpu.memory_space<vmem>>, vector<1x128xf32>
      %25 = vector.broadcast %24 : vector<1x128xf32> to vector<256x128xf32>
      %26 = arith.mulf %15, %25 : vector<256x128xf32>
      %cst_16 = arith.constant dense<0.000000e+00> : vector<256xf32>
      %27 = vector.multi_reduction <add>, %26, %cst_16 [1] : vector<256x128xf32> to vector<256xf32>
      %28 = vector.shape_cast %27 : vector<256xf32> to vector<256x1xf32>
      %c0_17 = arith.constant 0 : index
      %c0_18 = arith.constant 0 : index
      %29 = vector.load %arg13[%c0_17, %c0_18] : memref<256x1xf32, #tpu.memory_space<vmem>>, vector<256x1xf32>
      tpu.vector_store %arg13[%c0_17, %c0_18], %28 {strides = array<i32>} : memref<256x1xf32, #tpu.memory_space<vmem>>, vector<256x1xf32>,
    } else {
    }
    return
  }
  func.func @transform_0(%arg0: i32, %arg1: i32, %arg2: memref<1xi32, #tpu.memory_space<smem>>, %arg3: memref<1xi32, #tpu.memory_space<smem>>) -> (i32, i32) {
    %c0_i32 = arith.constant 0 : i32
    %c0_i32_0 = arith.constant 0 : i32
    return %arg0, %c0_i32 : i32, i32
  }
  func.func @transform_1(%arg0: i32, %arg1: i32, %arg2: memref<1xi32, #tpu.memory_space<smem>>, %arg3: memref<1xi32, #tpu.memory_space<smem>>) -> (i32, i32) {
    %c1_i32 = arith.constant 1 : i32
    %0 = arith.muli %arg0, %c1_i32 : i32
    %1 = arith.addi %0, %arg1 : i32
    %2 = arith.index_cast %1 : i32 to index
    %3 = memref.load %arg2[%2] : memref<1xi32, #tpu.memory_space<smem>>
    %c0_i32 = arith.constant 0 : i32
    %c0_i32_0 = arith.constant 0 : i32
    return %c0_i32, %3 : i32, i32
  }
  func.func @transform_2(%arg0: i32, %arg1: i32, %arg2: memref<1xi32, #tpu.memory_space<smem>>, %arg3: memref<1xi32, #tpu.memory_space<smem>>) -> (i32, i32) {
    %c1_i32 = arith.constant 1 : i32
    %0 = arith.muli %arg0, %c1_i32 : i32
    %1 = arith.addi %0, %arg1 : i32
    %2 = arith.index_cast %1 : i32 to index
    %3 = memref.load %arg2[%2] : memref<1xi32, #tpu.memory_space<smem>>
    %c0_i32 = arith.constant 0 : i32
    return %arg0, %3 : i32, i32
  }
  func.func @transform_3(%arg0: i32, %arg1: i32, %arg2: memref<1xi32, #tpu.memory_space<smem>>, %arg3: memref<1xi32, #tpu.memory_space<smem>>) -> (i32, i32) {
    %c1_i32 = arith.constant 1 : i32
    %0 = arith.muli %arg0, %c1_i32 : i32
    %1 = arith.addi %0, %arg1 : i32
    %2 = arith.index_cast %1 : i32 to index
    %3 = memref.load %arg2[%2] : memref<1xi32, #tpu.memory_space<smem>>
    %c0_i32 = arith.constant 0 : i32
    %c0_i32_0 = arith.constant 0 : i32
    return %3, %c0_i32 : i32, i32
  }
  func.func @transform_4(%arg0: i32, %arg1: i32, %arg2: memref<1xi32, #tpu.memory_space<smem>>, %arg3: memref<1xi32, #tpu.memory_space<smem>>) -> (i32, i32) {
    %c0_i32 = arith.constant 0 : i32
    %c0_i32_0 = arith.constant 0 : i32
    return %arg0, %c0_i32 : i32, i32
  }
  func.func @transform_5(%arg0: i32, %arg1: i32, %arg2: memref<1xi32, #tpu.memory_space<smem>>, %arg3: memref<1xi32, #tpu.memory_space<smem>>) -> (i32, i32) {
    %c0_i32 = arith.constant 0 : i32
    %c0_i32_0 = arith.constant 0 : i32
    %c0_i32_1 = arith.constant 0 : i32
    return %c0_i32, %c0_i32_0 : i32, i32
  }
  func.func @transform_6(%arg0: i32, %arg1: i32, %arg2: memref<1xi32, #tpu.memory_space<smem>>, %arg3: memref<1xi32, #tpu.memory_space<smem>>) -> (i32, i32) {
    %c0_i32 = arith.constant 0 : i32
    %c0_i32_0 = arith.constant 0 : i32
    %c0_i32_1 = arith.constant 0 : i32
    return %c0_i32, %c0_i32_0 : i32, i32
  }
  func.func @transform_7(%arg0: i32, %arg1: i32, %arg2: memref<1xi32, #tpu.memory_space<smem>>, %arg3: memref<1xi32, #tpu.memory_space<smem>>) -> (i32, i32) {
    %c0_i32 = arith.constant 0 : i32
    %c0_i32_0 = arith.constant 0 : i32
    return %arg0, %c0_i32 : i32, i32
  }
  func.func @transform_8(%arg0: i32, %arg1: i32, %arg2: memref<1xi32, #tpu.memory_space<smem>>, %arg3: memref<1xi32, #tpu.memory_space<smem>>) -> (i32, i32) {
    %c0_i32 = arith.constant 0 : i32
    %c0_i32_0 = arith.constant 0 : i32
    return %arg0, %c0_i32 : i32, i32
  }
  func.func @transform_9(%arg0: i32, %arg1: i32, %arg2: memref<1xi32, #tpu.memory_space<smem>>, %arg3: memref<1xi32, #tpu.memory_space<smem>>) -> (i32, i32) {
    %c0_i32 = arith.constant 0 : i32
    %c0_i32_0 = arith.constant 0 : i32
    return %arg0, %c0_i32 : i32, i32
  }
}

module attributes {stable_mosaic.version = 11 : i64} {
  func.func @faconv_final_kernel(%arg0: i32, %arg1: i32, %arg2: memref<1xi32, #tpu.memory_space<smem>>, %arg3: memref<1xi32, #tpu.memory_space<smem>>, %arg4: memref<256x1xf32, #tpu.memory_space<vmem>>, %arg5: memref<1x256xf32, #tpu.memory_space<vmem>>, %arg6: memref<256x256xbf16, #tpu.memory_space<vmem>>, %arg7: memref<256x128xbf16, #tpu.memory_space<vmem>>, %arg8: memref<256x128xf32, #tpu.memory_space<vmem>>, %arg9: memref<128x128xbf16, #tpu.memory_space<vmem>>, %arg10: memref<1x128xf32, #tpu.memory_space<vmem>>, %arg11: memref<256x128xf32, #tpu.memory_space<vmem>>, %arg12: memref<256x128xf32, #tpu.memory_space<vmem>>) attributes {dimension_semantics = [#tpu.dimension_semantics<parallel>, #tpu.dimension_semantics<arbitrary>], iteration_bounds = array<i64: 1, 1>, scalar_prefetch = 2 : i64, scratch_operands = 1 : i64, tpu.core_type = #tpu.core_type<tc>, window_params = [{transform_indices = @transform_0, window_bounds = array<i64: 256, 1>}, {transform_indices = @transform_1, window_bounds = array<i64: 1, 256>}, {transform_indices = @transform_2, window_bounds = array<i64: 256, 256>}, {transform_indices = @transform_3, window_bounds = array<i64: 256, 128>}, {transform_indices = @transform_4, window_bounds = array<i64: 256, 128>}, {pipeline_mode = #tpu.pipeline_mode<synchronous>, transform_indices = @transform_5, window_bounds = array<i64: 128, 128>}, {pipeline_mode = #tpu.pipeline_mode<synchronous>, transform_indices = @transform_6, window_bounds = array<i64: 1, 128>}, {transform_indices = @transform_7, window_bounds = array<i64: 256, 128>}]} {
    %c0_i32 = arith.constant 0 : i32
    %0 = arith.cmpi eq, %arg1, %c0_i32 : i32
    %1 = arith.extui %0 : i1 to i32
    %c0_i32_0 = arith.constant 0 : i32
    %2 = arith.cmpi ne, %1, %c0_i32_0 : i32
    scf.if %2 {
      %cst = arith.constant 0.000000e+00 : f32
      %11 = vector.broadcast %cst : f32 to vector<256x128xf32>
      %c0 = arith.constant 0 : index
      %c0_4 = arith.constant 0 : index
      %12 = vector.load %arg12[%c0, %c0_4] : memref<256x128xf32, #tpu.memory_space<vmem>>, vector<256x128xf32>
      tpu.vector_store %arg12[%c0, %c0_4], %11 {strides = array<i32>} : memref<256x128xf32, #tpu.memory_space<vmem>>, vector<256x128xf32>,
    } else {
    }
    %3 = arith.index_cast %arg0 : i32 to index
    %4 = memref.load %arg3[%3] : memref<1xi32, #tpu.memory_space<smem>>
    %5 = arith.cmpi slt, %arg1, %4 : i32
    %6 = arith.extui %5 : i1 to i32
    %c0_i32_1 = arith.constant 0 : i32
    %7 = arith.cmpi ne, %6, %c0_i32_1 : i32
    scf.if %7 {
      %c0 = arith.constant 0 : index
      %c0_4 = arith.constant 0 : index
      %11 = vector.load %arg4[%c0, %c0_4] : memref<256x1xf32, #tpu.memory_space<vmem>>, vector<256x1xf32>
      %c0_5 = arith.constant 0 : index
      %c0_6 = arith.constant 0 : index
      %12 = vector.load %arg5[%c0_5, %c0_6] : memref<1x256xf32, #tpu.memory_space<vmem>>, vector<1x256xf32>
      %13 = vector.broadcast %11 : vector<256x1xf32> to vector<256x256xf32>
      %14 = vector.broadcast %12 : vector<1x256xf32> to vector<256x256xf32>
      %15 = arith.addf %13, %14 : vector<256x256xf32>
      %16 = math.tanh %15 : vector<256x256xf32>
      %c0_7 = arith.constant 0 : index
      %c0_8 = arith.constant 0 : index
      %17 = vector.load %arg6[%c0_7, %c0_8] : memref<256x256xbf16, #tpu.memory_space<vmem>>, vector<256x256xbf16>
      %18 = arith.extf %17 : vector<256x256xbf16> to vector<256x256xf32>
      %19 = arith.mulf %16, %18 : vector<256x256xf32>
      %20 = arith.truncf %19 : vector<256x256xf32> to vector<256x256xbf16>
      %c0_9 = arith.constant 0 : index
      %c0_10 = arith.constant 0 : index
      %21 = vector.load %arg12[%c0_9, %c0_10] : memref<256x128xf32, #tpu.memory_space<vmem>>, vector<256x128xf32>
      %c0_11 = arith.constant 0 : index
      %c0_12 = arith.constant 0 : index
      %22 = vector.load %arg7[%c0_11, %c0_12] : memref<256x128xbf16, #tpu.memory_space<vmem>>, vector<256x128xbf16>
      %cst = arith.constant dense<0.000000e+00> : vector<256x128xf32>
      %23 = tpu.matmul %20, %22, %cst {dimension_numbers = #tpu.dot_dimension_numbers<[1], [0], [0], [1], [0, 0, 1, 1], [], []>} : vector<256x256xbf16>, vector<256x128xbf16>, vector<256x128xf32> -> vector<256x128xf32>
      %24 = arith.addf %21, %23 : vector<256x128xf32>
      %c0_13 = arith.constant 0 : index
      %c0_14 = arith.constant 0 : index
      %25 = vector.load %arg12[%c0_13, %c0_14] : memref<256x128xf32, #tpu.memory_space<vmem>>, vector<256x128xf32>
      tpu.vector_store %arg12[%c0_13, %c0_14], %24 {strides = array<i32>} : memref<256x128xf32, #tpu.memory_space<vmem>>, vector<256x128xf32>,
    } else {
    }
    %c0_i32_2 = arith.constant 0 : i32
    %8 = arith.cmpi eq, %arg1, %c0_i32_2 : i32
    %9 = arith.extui %8 : i1 to i32
    %c0_i32_3 = arith.constant 0 : i32
    %10 = arith.cmpi ne, %9, %c0_i32_3 : i32
    scf.if %10 {
      %c0 = arith.constant 0 : index
      %c0_4 = arith.constant 0 : index
      %11 = vector.load %arg12[%c0, %c0_4] : memref<256x128xf32, #tpu.memory_space<vmem>>, vector<256x128xf32>
      %c0_5 = arith.constant 0 : index
      %c0_6 = arith.constant 0 : index
      %12 = vector.load %arg8[%c0_5, %c0_6] : memref<256x128xf32, #tpu.memory_space<vmem>>, vector<256x128xf32>
      %cst = arith.constant 1.000000e-01 : f32
      %13 = vector.broadcast %cst : f32 to vector<256x128xf32>
      %14 = arith.mulf %13, %12 : vector<256x128xf32>
      %15 = arith.addf %11, %14 : vector<256x128xf32>
      %16 = arith.truncf %15 : vector<256x128xf32> to vector<256x128xbf16>
      %c0_7 = arith.constant 0 : index
      %c0_8 = arith.constant 0 : index
      %17 = vector.load %arg9[%c0_7, %c0_8] : memref<128x128xbf16, #tpu.memory_space<vmem>>, vector<128x128xbf16>
      %cst_9 = arith.constant dense<0.000000e+00> : vector<256x128xf32>
      %18 = tpu.matmul %16, %17, %cst_9 {dimension_numbers = #tpu.dot_dimension_numbers<[1], [0], [0], [1], [0, 0, 1, 1], [], []>} : vector<256x128xbf16>, vector<128x128xbf16>, vector<256x128xf32> -> vector<256x128xf32>
      %c0_10 = arith.constant 0 : index
      %c0_11 = arith.constant 0 : index
      %19 = vector.load %arg10[%c0_10, %c0_11] : memref<1x128xf32, #tpu.memory_space<vmem>>, vector<1x128xf32>
      %20 = vector.broadcast %19 : vector<1x128xf32> to vector<256x128xf32>
      %21 = arith.addf %18, %20 : vector<256x128xf32>
      %22 = tpu.iota {dimensions = array<i32: 1>} : vector<256x128xi32>
      %c4_i32 = arith.constant 4 : i32
      %23 = vector.broadcast %c4_i32 : i32 to vector<256x128xi32>
      %24 = arith.cmpi slt, %22, %23 : vector<256x128xi32>
      %cst_12 = arith.constant -1.000000e+30 : f32
      %25 = vector.broadcast %cst_12 : f32 to vector<256x128xf32>
      %26 = arith.select %24, %21, %25 : vector<256x128xi1>, vector<256x128xf32>
      %cst_13 = arith.constant dense<0xFF800000> : vector<256xf32>
      %27 = vector.multi_reduction <maximumf>, %26, %cst_13 [1] : vector<256x128xf32> to vector<256xf32>
      %28 = vector.shape_cast %27 : vector<256xf32> to vector<256x1xf32>
      %29 = vector.broadcast %28 : vector<256x1xf32> to vector<256x128xf32>
      %30 = arith.subf %26, %29 : vector<256x128xf32>
      %31 = math.exp %30 : vector<256x128xf32>
      %cst_14 = arith.constant dense<0.000000e+00> : vector<256xf32>
      %32 = vector.multi_reduction <add>, %31, %cst_14 [1] : vector<256x128xf32> to vector<256xf32>
      %33 = vector.shape_cast %32 : vector<256xf32> to vector<256x1xf32>
      %34 = math.log %33 : vector<256x1xf32>
      %35 = vector.broadcast %34 : vector<256x1xf32> to vector<256x128xf32>
      %36 = arith.subf %30, %35 : vector<256x128xf32>
      %c0_15 = arith.constant 0 : index
      %c0_16 = arith.constant 0 : index
      %37 = vector.load %arg11[%c0_15, %c0_16] : memref<256x128xf32, #tpu.memory_space<vmem>>, vector<256x128xf32>
      tpu.vector_store %arg11[%c0_15, %c0_16], %36 {strides = array<i32>} : memref<256x128xf32, #tpu.memory_space<vmem>>, vector<256x128xf32>,
    } else {
    }
    return
  }
  func.func @transform_0(%arg0: i32, %arg1: i32, %arg2: memref<1xi32, #tpu.memory_space<smem>>, %arg3: memref<1xi32, #tpu.memory_space<smem>>) -> (i32, i32) {
    %c0_i32 = arith.constant 0 : i32
    %c0_i32_0 = arith.constant 0 : i32
    return %arg0, %c0_i32 : i32, i32
  }
  func.func @transform_1(%arg0: i32, %arg1: i32, %arg2: memref<1xi32, #tpu.memory_space<smem>>, %arg3: memref<1xi32, #tpu.memory_space<smem>>) -> (i32, i32) {
    %c1_i32 = arith.constant 1 : i32
    %0 = arith.muli %arg0, %c1_i32 : i32
    %1 = arith.addi %0, %arg1 : i32
    %2 = arith.index_cast %1 : i32 to index
    %3 = memref.load %arg2[%2] : memref<1xi32, #tpu.memory_space<smem>>
    %c0_i32 = arith.constant 0 : i32
    %c0_i32_0 = arith.constant 0 : i32
    return %c0_i32, %3 : i32, i32
  }
  func.func @transform_2(%arg0: i32, %arg1: i32, %arg2: memref<1xi32, #tpu.memory_space<smem>>, %arg3: memref<1xi32, #tpu.memory_space<smem>>) -> (i32, i32) {
    %c1_i32 = arith.constant 1 : i32
    %0 = arith.muli %arg0, %c1_i32 : i32
    %1 = arith.addi %0, %arg1 : i32
    %2 = arith.index_cast %1 : i32 to index
    %3 = memref.load %arg2[%2] : memref<1xi32, #tpu.memory_space<smem>>
    %c0_i32 = arith.constant 0 : i32
    return %arg0, %3 : i32, i32
  }
  func.func @transform_3(%arg0: i32, %arg1: i32, %arg2: memref<1xi32, #tpu.memory_space<smem>>, %arg3: memref<1xi32, #tpu.memory_space<smem>>) -> (i32, i32) {
    %c1_i32 = arith.constant 1 : i32
    %0 = arith.muli %arg0, %c1_i32 : i32
    %1 = arith.addi %0, %arg1 : i32
    %2 = arith.index_cast %1 : i32 to index
    %3 = memref.load %arg2[%2] : memref<1xi32, #tpu.memory_space<smem>>
    %c0_i32 = arith.constant 0 : i32
    %c0_i32_0 = arith.constant 0 : i32
    return %3, %c0_i32 : i32, i32
  }
  func.func @transform_4(%arg0: i32, %arg1: i32, %arg2: memref<1xi32, #tpu.memory_space<smem>>, %arg3: memref<1xi32, #tpu.memory_space<smem>>) -> (i32, i32) {
    %c0_i32 = arith.constant 0 : i32
    %c0_i32_0 = arith.constant 0 : i32
    return %arg0, %c0_i32 : i32, i32
  }
  func.func @transform_5(%arg0: i32, %arg1: i32, %arg2: memref<1xi32, #tpu.memory_space<smem>>, %arg3: memref<1xi32, #tpu.memory_space<smem>>) -> (i32, i32) {
    %c0_i32 = arith.constant 0 : i32
    %c0_i32_0 = arith.constant 0 : i32
    %c0_i32_1 = arith.constant 0 : i32
    return %c0_i32, %c0_i32_0 : i32, i32
  }
  func.func @transform_6(%arg0: i32, %arg1: i32, %arg2: memref<1xi32, #tpu.memory_space<smem>>, %arg3: memref<1xi32, #tpu.memory_space<smem>>) -> (i32, i32) {
    %c0_i32 = arith.constant 0 : i32
    %c0_i32_0 = arith.constant 0 : i32
    %c0_i32_1 = arith.constant 0 : i32
    return %c0_i32, %c0_i32_0 : i32, i32
  }
  func.func @transform_7(%arg0: i32, %arg1: i32, %arg2: memref<1xi32, #tpu.memory_space<smem>>, %arg3: memref<1xi32, #tpu.memory_space<smem>>) -> (i32, i32) {
    %c0_i32 = arith.constant 0 : i32
    %c0_i32_0 = arith.constant 0 : i32
    return %arg0, %c0_i32 : i32, i32
  }
}

</mosaic_0001>

<llo_original>
// kernel: fagcn_forward.3
$region0: #{fagcn_forward.3}
  #allocation0 [shape = 'u32[]', space=smem, size = 0x4, offset = 0x4, fixed_abs, tag = 'smem constant byte address 0x4 - core index']
  #allocation1 [shape = 'u32[72,128]{1,0:T(1,128)}', space=vmem, size = 0x9000, scoped, tag = 'internal scratch']
  %s0 = inlined_call_operand.vmem [shape: f32[256,8], index: 0, kind: input, shape index: {}]
  %s1 = inlined_call_operand.vmem [shape: bf16[8,128], index: 1, kind: input, shape index: {}]
  %s2 = inlined_call_operand.vmem [shape: f32[1,128], index: 2, kind: input, shape index: {}]
  %s3 = inlined_call_operand.vmem [shape: f32[1,128], index: 3, kind: input, shape index: {}]
  %s4 = inlined_call_operand.vmem [shape: f32[1,128], index: 4, kind: input, shape index: {}]
  %s5 = inlined_call_operand.vmem [shape: f32[256,128], index: 5, kind: output, shape index: {0}]
  %s6 = inlined_call_operand.vmem [shape: bf16[256,128], index: 6, kind: output, shape index: {1}]
  %s7 = inlined_call_operand.vmem [shape: f32[256,1], index: 7, kind: output, shape index: {2}]
  %s8 = inlined_call_operand.vmem [shape: f32[256,1], index: 8, kind: output, shape index: {3}]
  %9 = xla_tuple %s5, %s6, %s7, %s8
  %s10 = sld [smem:[#allocation0]]
  $region54: #{fagcn_forward.3} parent=0
    _
  %s12 = ssub.s32 1, %s10
  %s13 = scalar_select 0, %s12, %s10
  // Predicated region
  $region2: #{fagcn_forward.3} parent=0 // pred_check
    _
  $region3: #{fagcn_forward.3} parent=0 // pred_check_branch
    %15 = sbr.rel (0) target = $region5
  $region4: #{fagcn_forward.3} parent=0 // pred_region
    _
  $region5: #{fagcn_forward.3} parent=0 // pred_fallthru
    _
  // Predicated region
  $region6: #{fagcn_forward.3} parent=0 // pred_check
    _
  $region7: #{fagcn_forward.3} parent=0 // pred_check_branch
    %17 = sbr.rel (0) target = $region9
  $region8: #{fagcn_forward.3} parent=0 // pred_region
    _
  $region9: #{fagcn_forward.3} parent=0 // pred_fallthru
    _
  // Predicated region
  $region10: #{fagcn_forward.3} parent=0 // pred_check
    _
  $region11: #{fagcn_forward.3} parent=0 // pred_check_branch
    %19 = sbr.rel (0) target = $region13
  $region12: #{fagcn_forward.3} parent=0 // pred_region
    _
  $region13: #{fagcn_forward.3} parent=0 // pred_fallthru
    _
  // Predicated region
  $region14: #{fagcn_forward.3} parent=0 // pred_check
    _
  $region15: #{fagcn_forward.3} parent=0 // pred_check_branch
    %21 = sbr.rel (0) target = $region17
  $region16: #{fagcn_forward.3} parent=0 // pred_region
    _
  $region17: #{fagcn_forward.3} parent=0 // pred_fallthru
    _
  // Predicated region
  $region18: #{fagcn_forward.3} parent=0 // pred_check
    _
  $region19: #{fagcn_forward.3} parent=0 // pred_check_branch
    %23 = sbr.rel (0) target = $region21
  $region20: #{fagcn_forward.3} parent=0 // pred_region
    _
  $region21: #{fagcn_forward.3} parent=0 // pred_fallthru
    _
  %v25 = vld [vmem:[%s0] sm:$0xff]
  %v26 = vld [vmem:[%s0 + $0x8] sm:$0xff]
  %v27 = vld [vmem:[%s0 + $0x10] sm:$0xff]
  %v28 = vld [vmem:[%s0 + $0x18] sm:$0xff]
  %v29 = vld [vmem:[%s0 + $0x20] sm:$0xff]
  %v30 = vld [vmem:[%s0 + $0x28] sm:$0xff]
  %v31 = vld [vmem:[%s0 + $0x30] sm:$0xff]
  %v32 = vld [vmem:[%s0 + $0x38] sm:$0xff]
  %v33 = vld [vmem:[%s0 + $0x40] sm:$0xff]
  %v34 = vld [vmem:[%s0 + $0x48] sm:$0xff]
  %v35 = vld [vmem:[%s0 + $0x50] sm:$0xff]
  %v36 = vld [vmem:[%s0 + $0x58] sm:$0xff]
  %v37 = vld [vmem:[%s0 + $0x60] sm:$0xff]
  %v38 = vld [vmem:[%s0 + $0x68] sm:$0xff]
  %v39 = vld [vmem:[%s0 + $0x70] sm:$0xff]
  %v40 = vld [vmem:[%s0 + $0x78] sm:$0xff]
  %v41 = vld [vmem:[%s0 + $0x80] sm:$0xff]
  %v42 = vld [vmem:[%s0 + $0x88] sm:$0xff]
  %v43 = vld [vmem:[%s0 + $0x90] sm:$0xff]
  %v44 = vld [vmem:[%s0 + $0x98] sm:$0xff]
  %v45 = vld [vmem:[%s0 + $0xa0] sm:$0xff]
  %v46 = vld [vmem:[%s0 + $0xa8] sm:$0xff]
  %v47 = vld [vmem:[%s0 + $0xb0] sm:$0xff]
  %v48 = vld [vmem:[%s0 + $0xb8] sm:$0xff]
  %v49 = vld [vmem:[%s0 + $0xc0] sm:$0xff]
  %v50 = vld [vmem:[%s0 + $0xc8] sm:$0xff]
  %v51 = vld [vmem:[%s0 + $0xd0] sm:$0xff]
  %v52 = vld [vmem:[%s0 + $0xd8] sm:$0xff]
  %v53 = vld [vmem:[%s0 + $0xe0] sm:$0xff]
  %v54 = vld [vmem:[%s0 + $0xe8] sm:$0xff]
  %v55 = vld [vmem:[%s0 + $0xf0] sm:$0xff]
  %v56 = vld [vmem:[%s0 + $0xf8] sm:$0xff]
  %v57 = vpack.c.bf16 %v26, %v25
  %v58 = vpack.c.bf16 %v28, %v27
  %v59 = vpack.c.bf16 %v30, %v29
  %v60 = vpack.c.bf16 %v32, %v31
  %v61 = vpack.c.bf16 %v34, %v33
  %v62 = vpack.c.bf16 %v36, %v35
  %v63 = vpack.c.bf16 %v38, %v37
  %v64 = vpack.c.bf16 %v40, %v39
  %v65 = vpack.c.bf16 %v42, %v41
  %v66 = vpack.c.bf16 %v44, %v43
  %v67 = vpack.c.bf16 %v46, %v45
  %v68 = vpack.c.bf16 %v48, %v47
  %v69 = vpack.c.bf16 %v50, %v49
  %v70 = vpack.c.bf16 %v52, %v51
  %v71 = vpack.c.bf16 %v54, %v53
  %v72 = vpack.c.bf16 %v56, %v55
  %v73 = vld [vmem:[%s1] sm:$0xf]
  %v74 = vld [vmem:[%s2] sm:$0x1]
  %v76 = vperm.slane %v74, 0
  %vm78 = vcmask 64512
  %v80 = vsel %vm78, %v57, 0
  %v83 = vsel %vm78, %v58, 0
  %v86 = vsel %vm78, %v59, 0
  %v89 = vsel %vm78, %v60, 0
  %v92 = vsel %vm78, %v61, 0
  %v95 = vsel %vm78, %v62, 0
  %v98 = vsel %vm78, %v63, 0
  %v101 = vsel %vm78, %v64, 0
  %v104 = vsel %vm78, %v65, 0
  %v107 = vsel %vm78, %v66, 0
  %v110 = vsel %vm78, %v67, 0
  %v113 = vsel %vm78, %v68, 0
  %v116 = vsel %vm78, %v69, 0
  %v119 = vsel %vm78, %v70, 0
  %v122 = vsel %vm78, %v71, 0
  %v125 = vsel %vm78, %v72, 0
  %vm127 = vcmask 1043456
  %v129 = vsel %vm127, %v73, 0
  %131 = vmatpush.bf16.msra.mxu0 0
  %132 = vmatpush.bf16.msra.mxu0 0
  %133 = vmatpush.bf16.msra.mxu0 0
  %134 = vmatpush.bf16.msra.mxu0 0
  %135 = vmatpush.bf16.msra.mxu0 0
  %136 = vmatpush.bf16.msra.mxu0 0
  %137 = vmatpush.bf16.msra.mxu0 0
  %138 = vmatpush.bf16.msra.mxu0 %v129
  %139 = vmatmul.bf16.gmra.mxu0 %v80
  %v140 = vpop.f32.mrf.mxu0
  %v141 = vadd.f32 %v76, %v140
  %v142 = vpop.f32.mrf.mxu0
  %v143 = vadd.f32 %v76, %v142
  %144 = vmatmul.bf16.gmra.mxu0 %v83
  %v145 = vpop.f32.mrf.mxu0
  %v146 = vadd.f32 %v76, %v145
  %v147 = vpop.f32.mrf.mxu0
  %v148 = vadd.f32 %v76, %v147
  %149 = vmatmul.bf16.gmra.mxu0 %v86
  %v150 = vpop.f32.mrf.mxu0
  %v151 = vadd.f32 %v76, %v150
  %v152 = vpop.f32.mrf.mxu0
  %v153 = vadd.f32 %v76, %v152
  %154 = vmatmul.bf16.gmra.mxu0 %v89
  %v155 = vpop.f32.mrf.mxu0
  %v156 = vadd.f32 %v76, %v155
  %v157 = vpop.f32.mrf.mxu0
  %v158 = vadd.f32 %v76, %v157
  %159 = vmatmul.bf16.gmra.mxu0 %v92
  %v160 = vpop.f32.mrf.mxu0
  %v161 = vadd.f32 %v76, %v160
  %v162 = vpop.f32.mrf.mxu0
  %v163 = vadd.f32 %v76, %v162
  %164 = vmatmul.bf16.gmra.mxu0 %v95
  %v165 = vpop.f32.mrf.mxu0
  %v166 = vadd.f32 %v76, %v165
  %v167 = vpop.f32.mrf.mxu0
  %v168 = vadd.f32 %v76, %v167
  %169 = vmatmul.bf16.gmra.mxu0 %v98
  %v170 = vpop.f32.mrf.mxu0
  %v171 = vadd.f32 %v76, %v170
  %v172 = vpop.f32.mrf.mxu0
  %v173 = vadd.f32 %v76, %v172
  %174 = vmatmul.bf16.gmra.mxu0 %v101
  %v175 = vpop.f32.mrf.mxu0
  %v176 = vadd.f32 %v76, %v175
  %v177 = vpop.f32.mrf.mxu0
  %v178 = vadd.f32 %v76, %v177
  %179 = vmatmul.bf16.gmra.mxu0 %v104
  %v180 = vpop.f32.mrf.mxu0
  %v181 = vadd.f32 %v76, %v180
  %v182 = vpop.f32.mrf.mxu0
  %v183 = vadd.f32 %v76, %v182
  %184 = vmatmul.bf16.gmra.mxu0 %v107
  %v185 = vpop.f32.mrf.mxu0
  %v186 = vadd.f32 %v76, %v185
  %v187 = vpop.f32.mrf.mxu0
  %v188 = vadd.f32 %v76, %v187
  %189 = vmatmul.bf16.gmra.mxu0 %v110
  %v190 = vpop.f32.mrf.mxu0
  %v191 = vadd.f32 %v76, %v190
  %v192 = vpop.f32.mrf.mxu0
  %v193 = vadd.f32 %v76, %v192
  %194 = vmatmul.bf16.gmra.mxu0 %v113
  %v195 = vpop.f32.mrf.mxu0
  %v196 = vadd.f32 %v76, %v195
  %v197 = vpop.f32.mrf.mxu0
  %v198 = vadd.f32 %v76, %v197
  %199 = vmatmul.bf16.gmra.mxu0 %v116
  %v200 = vpop.f32.mrf.mxu0
  %v201 = vadd.f32 %v76, %v200
  %v202 = vpop.f32.mrf.mxu0
  %v203 = vadd.f32 %v76, %v202
  %204 = vmatmul.bf16.gmra.mxu0 %v119
  %v205 = vpop.f32.mrf.mxu0
  %v206 = vadd.f32 %v76, %v205
  %v207 = vpop.f32.mrf.mxu0
  %v208 = vadd.f32 %v76, %v207
  %209 = vmatmul.bf16.gmra.mxu0 %v122
  %v210 = vpop.f32.mrf.mxu0
  %v211 = vadd.f32 %v76, %v210
  %v212 = vpop.f32.mrf.mxu0
  %v213 = vadd.f32 %v76, %v212
  %214 = vmatmul.bf16.gmra.mxu0 %v125
  %v215 = vpop.f32.mrf.mxu0
  %v216 = vadd.f32 %v76, %v215
  %v217 = vpop.f32.mrf.mxu0
  %v218 = vadd.f32 %v76, %v217
  %219 = vdwg.mxu0
  %v220 = vmax.f32 %v141, 0.0
  %v221 = vmax.f32 %v143, 0.0
  %v222 = vmax.f32 %v146, 0.0
  %v223 = vmax.f32 %v148, 0.0
  %v224 = vmax.f32 %v151, 0.0
  %v225 = vmax.f32 %v153, 0.0
  %v226 = vmax.f32 %v156, 0.0
  %v227 = vmax.f32 %v158, 0.0
  %v228 = vmax.f32 %v161, 0.0
  %v229 = vmax.f32 %v163, 0.0
  %v230 = vmax.f32 %v166, 0.0
  %v231 = vmax.f32 %v168, 0.0
  %v232 = vmax.f32 %v171, 0.0
  %v233 = vmax.f32 %v173, 0.0
  %v234 = vmax.f32 %v176, 0.0
  %v235 = vmax.f32 %v178, 0.0
  %v236 = vmax.f32 %v181, 0.0
  %v237 = vmax.f32 %v183, 0.0
  %v238 = vmax.f32 %v186, 0.0
  %v239 = vmax.f32 %v188, 0.0
  %v240 = vmax.f32 %v191, 0.0
  %v241 = vmax.f32 %v193, 0.0
  %v242 = vmax.f32 %v196, 0.0
  %v243 = vmax.f32 %v198, 0.0
  %v244 = vmax.f32 %v201, 0.0
  %v245 = vmax.f32 %v203, 0.0
  %v246 = vmax.f32 %v206, 0.0
  %v247 = vmax.f32 %v208, 0.0
  %v248 = vmax.f32 %v211, 0.0
  %v249 = vmax.f32 %v213, 0.0
  %v250 = vmax.f32 %v216, 0.0
  %v251 = vmax.f32 %v218, 0.0
  %252 = vst [vmem:[%s5] sm:$0xff] %v220
  %253 = vst [vmem:[%s5 + $0x8] sm:$0xff] %v221
  %254 = vst [vmem:[%s5 + $0x10] sm:$0xff] %v222
  %255 = vst [vmem:[%s5 + $0x18] sm:$0xff] %v223
  %256 = vst [vmem:[%s5 + $0x20] sm:$0xff] %v224
  %257 = vst [vmem:[%s5 + $0x28] sm:$0xff] %v225
  %258 = vst [vmem:[%s5 + $0x30] sm:$0xff] %v226
  %259 = vst [vmem:[%s5 + $0x38] sm:$0xff] %v227
  %260 = vst [vmem:[%s5 + $0x40] sm:$0xff] %v228
  %261 = vst [vmem:[%s5 + $0x48] sm:$0xff] %v229
  %262 = vst [vmem:[%s5 + $0x50] sm:$0xff] %v230
  %263 = vst [vmem:[%s5 + $0x58] sm:$0xff] %v231
  %264 = vst [vmem:[%s5 + $0x60] sm:$0xff] %v232
  %265 = vst [vmem:[%s5 + $0x68] sm:$0xff] %v233
  %266 = vst [vmem:[%s5 + $0x70] sm:$0xff] %v234
  %267 = vst [vmem:[%s5 + $0x78] sm:$0xff] %v235
  %268 = vst [vmem:[%s5 + $0x80] sm:$0xff] %v236
  %269 = vst [vmem:[%s5 + $0x88] sm:$0xff] %v237
  %270 = vst [vmem:[%s5 + $0x90] sm:$0xff] %v238
  %271 = vst [vmem:[%s5 + $0x98] sm:$0xff] %v239
  %272 = vst [vmem:[%s5 + $0xa0] sm:$0xff] %v240
  %273 = vst [vmem:[%s5 + $0xa8] sm:$0xff] %v241
  %274 = vst [vmem:[%s5 + $0xb0] sm:$0xff] %v242
  %275 = vst [vmem:[%s5 + $0xb8] sm:$0xff] %v243
  %276 = vst [vmem:[%s5 + $0xc0] sm:$0xff] %v244
  %277 = vst [vmem:[%s5 + $0xc8] sm:$0xff] %v245
  %278 = vst [vmem:[%s5 + $0xd0] sm:$0xff] %v246
  %279 = vst [vmem:[%s5 + $0xd8] sm:$0xff] %v247
  %280 = vst [vmem:[%s5 + $0xe0] sm:$0xff] %v248
  %281 = vst [vmem:[%s5 + $0xe8] sm:$0xff] %v249
  %282 = vst [vmem:[%s5 + $0xf0] sm:$0xff] %v250
  %283 = vst [vmem:[%s5 + $0xf8] sm:$0xff] %v251
  %v284 = vpack.c.bf16 %v220, %v220
  %v285 = vpack.c.bf16 %v221, %v221
  %v286 = vpack.c.bf16 %v222, %v222
  %v287 = vpack.c.bf16 %v223, %v223
  %v288 = vpack.c.bf16 %v224, %v224
  %v289 = vpack.c.bf16 %v225, %v225
  %v290 = vpack.c.bf16 %v226, %v226
  %v291 = vpack.c.bf16 %v227, %v227
  %v292 = vpack.c.bf16 %v228, %v228
  %v293 = vpack.c.bf16 %v229, %v229
  %v294 = vpack.c.bf16 %v230, %v230
  %v295 = vpack.c.bf16 %v231, %v231
  %v296 = vpack.c.bf16 %v232, %v232
  %v297 = vpack.c.bf16 %v233, %v233
  %v298 = vpack.c.bf16 %v234, %v234
  %v299 = vpack.c.bf16 %v235, %v235
  %v300 = vpack.c.bf16 %v236, %v236
  %v301 = vpack.c.bf16 %v237, %v237
  %v302 = vpack.c.bf16 %v238, %v238
  %v303 = vpack.c.bf16 %v239, %v239
  %v304 = vpack.c.bf16 %v240, %v240
  %v305 = vpack.c.bf16 %v241, %v241
  %v306 = vpack.c.bf16 %v242, %v242
  %v307 = vpack.c.bf16 %v243, %v243
  %v308 = vpack.c.bf16 %v244, %v244
  %v309 = vpack.c.bf16 %v245, %v245
  %v310 = vpack.c.bf16 %v246, %v246
  %v311 = vpack.c.bf16 %v247, %v247
  %v312 = vpack.c.bf16 %v248, %v248
  %v313 = vpack.c.bf16 %v249, %v249
  %v314 = vpack.c.bf16 %v250, %v250
  %v315 = vpack.c.bf16 %v251, %v251
  %316 = vst [vmem:[%s6] sm:$0xf] %v284
  %317 = vst [vmem:[%s6 + $0x4] sm:$0xf] %v285
  %318 = vst [vmem:[%s6 + $0x8] sm:$0xf] %v286
  %319 = vst [vmem:[%s6 + $0xc] sm:$0xf] %v287
  %320 = vst [vmem:[%s6 + $0x10] sm:$0xf] %v288
  %321 = vst [vmem:[%s6 + $0x14] sm:$0xf] %v289
  %322 = vst [vmem:[%s6 + $0x18] sm:$0xf] %v290
  %323 = vst [vmem:[%s6 + $0x1c] sm:$0xf] %v291
  %324 = vst [vmem:[%s6 + $0x20] sm:$0xf] %v292
  %325 = vst [vmem:[%s6 + $0x24] sm:$0xf] %v293
  %326 = vst [vmem:[%s6 + $0x28] sm:$0xf] %v294
  %327 = vst [vmem:[%s6 + $0x2c] sm:$0xf] %v295
  %328 = vst [vmem:[%s6 + $0x30] sm:$0xf] %v296
  %329 = vst [vmem:[%s6 + $0x34] sm:$0xf] %v297
  %330 = vst [vmem:[%s6 + $0x38] sm:$0xf] %v298
  %331 = vst [vmem:[%s6 + $0x3c] sm:$0xf] %v299
  %332 = vst [vmem:[%s6 + $0x40] sm:$0xf] %v300
  %333 = vst [vmem:[%s6 + $0x44] sm:$0xf] %v301
  %334 = vst [vmem:[%s6 + $0x48] sm:$0xf] %v302
  %335 = vst [vmem:[%s6 + $0x4c] sm:$0xf] %v303
  %336 = vst [vmem:[%s6 + $0x50] sm:$0xf] %v304
  %337 = vst [vmem:[%s6 + $0x54] sm:$0xf] %v305
  %338 = vst [vmem:[%s6 + $0x58] sm:$0xf] %v306
  %339 = vst [vmem:[%s6 + $0x5c] sm:$0xf] %v307
  %340 = vst [vmem:[%s6 + $0x60] sm:$0xf] %v308
  %341 = vst [vmem:[%s6 + $0x64] sm:$0xf] %v309
  %342 = vst [vmem:[%s6 + $0x68] sm:$0xf] %v310
  %343 = vst [vmem:[%s6 + $0x6c] sm:$0xf] %v311
  %344 = vst [vmem:[%s6 + $0x70] sm:$0xf] %v312
  %345 = vst [vmem:[%s6 + $0x74] sm:$0xf] %v313
  %346 = vst [vmem:[%s6 + $0x78] sm:$0xf] %v314
  %347 = vst [vmem:[%s6 + $0x7c] sm:$0xf] %v315
  %v348 = vld [vmem:[%s3] sm:$0x1]
  %v350 = vperm.slane %v348, 0
  %v352 = vmul.f32 %v220, %v350
  %v353 = vmul.f32 %v221, %v350
  %v354 = vmul.f32 %v222, %v350
  %v355 = vmul.f32 %v223, %v350
  %v356 = vmul.f32 %v224, %v350
  %v357 = vmul.f32 %v225, %v350
  %v358 = vmul.f32 %v226, %v350
  %v359 = vmul.f32 %v227, %v350
  %v360 = vmul.f32 %v228, %v350
  %v361 = vmul.f32 %v229, %v350
  %v362 = vmul.f32 %v230, %v350
  %v363 = vmul.f32 %v231, %v350
  %v364 = vmul.f32 %v232, %v350
  %v365 = vmul.f32 %v233, %v350
  %v366 = vmul.f32 %v234, %v350
  %v367 = vmul.f32 %v235, %v350
  %v368 = vmul.f32 %v236, %v350
  %v369 = vmul.f32 %v237, %v350
  %v370 = vmul.f32 %v238, %v350
  %v371 = vmul.f32 %v239, %v350
  %v372 = vmul.f32 %v240, %v350
  %v373 = vmul.f32 %v241, %v350
  %v374 = vmul.f32 %v242, %v350
  %v375 = vmul.f32 %v243, %v350
  %v376 = vmul.f32 %v244, %v350
  %v377 = vmul.f32 %v245, %v350
  %v378 = vmul.f32 %v246, %v350
  %v379 = vmul.f32 %v247, %v350
  %v380 = vmul.f32 %v248, %v350
  %v381 = vmul.f32 %v249, %v350
  %v382 = vmul.f32 %v250, %v350
  %v383 = vmul.f32 %v251, %v350
  %384 = vadd.xlane.f32.xlu0 %v352
  %v385 = vpop.xlane.xlu0 %384
  %386 = vadd.xlane.f32.xlu0 %v353
  %v387 = vpop.xlane.xlu0 %386
  %388 = vadd.xlane.f32.xlu0 %v354
  %v389 = vpop.xlane.xlu0 %388
  %390 = vadd.xlane.f32.xlu0 %v355
  %v391 = vpop.xlane.xlu0 %390
  %392 = vadd.xlane.f32.xlu0 %v356
  %v393 = vpop.xlane.xlu0 %392
  %394 = vadd.xlane.f32.xlu0 %v357
  %v395 = vpop.xlane.xlu0 %394
  %396 = vadd.xlane.f32.xlu0 %v358
  %v397 = vpop.xlane.xlu0 %396
  %398 = vadd.xlane.f32.xlu0 %v359
  %v399 = vpop.xlane.xlu0 %398
  %400 = vadd.xlane.f32.xlu0 %v360
  %v401 = vpop.xlane.xlu0 %400
  %402 = vadd.xlane.f32.xlu0 %v361
  %v403 = vpop.xlane.xlu0 %402
  %404 = vadd.xlane.f32.xlu0 %v362
  %v405 = vpop.xlane.xlu0 %404
  %406 = vadd.xlane.f32.xlu0 %v363
  %v407 = vpop.xlane.xlu0 %406
  %408 = vadd.xlane.f32.xlu0 %v364
  %v409 = vpop.xlane.xlu0 %408
  %410 = vadd.xlane.f32.xlu0 %v365
  %v411 = vpop.xlane.xlu0 %410
  %412 = vadd.xlane.f32.xlu0 %v366
  %v413 = vpop.xlane.xlu0 %412
  %414 = vadd.xlane.f32.xlu0 %v367
  %v415 = vpop.xlane.xlu0 %414
  %416 = vadd.xlane.f32.xlu0 %v368
  %v417 = vpop.xlane.xlu0 %416
  %418 = vadd.xlane.f32.xlu0 %v369
  %v419 = vpop.xlane.xlu0 %418
  %420 = vadd.xlane.f32.xlu0 %v370
  %v421 = vpop.xlane.xlu0 %420
  %422 = vadd.xlane.f32.xlu0 %v371
  %v423 = vpop.xlane.xlu0 %422
  %424 = vadd.xlane.f32.xlu0 %v372
  %v425 = vpop.xlane.xlu0 %424
  %426 = vadd.xlane.f32.xlu0 %v373
  %v427 = vpop.xlane.xlu0 %426
  %428 = vadd.xlane.f32.xlu0 %v374
  %v429 = vpop.xlane.xlu0 %428
  %430 = vadd.xlane.f32.xlu0 %v375
  %v431 = vpop.xlane.xlu0 %430
  %432 = vadd.xlane.f32.xlu0 %v376
  %v433 = vpop.xlane.xlu0 %432
  %434 = vadd.xlane.f32.xlu0 %v377
  %v435 = vpop.xlane.xlu0 %434
  %436 = vadd.xlane.f32.xlu0 %v378
  %v437 = vpop.xlane.xlu0 %436
  %438 = vadd.xlane.f32.xlu0 %v379
  %v439 = vpop.xlane.xlu0 %438
  %440 = vadd.xlane.f32.xlu0 %v380
  %v441 = vpop.xlane.xlu0 %440
  %442 = vadd.xlane.f32.xlu0 %v381
  %v443 = vpop.xlane.xlu0 %442
  %444 = vadd.xlane.f32.xlu0 %v382
  %v445 = vpop.xlane.xlu0 %444
  %446 = vadd.xlane.f32.xlu0 %v383
  %v447 = vpop.xlane.xlu0 %446
  %vm448 = vcmask 7168
  %449 = vst.msk [vmem:[%s7] sm:$0xff] %vm448, %v385
  %450 = vst.msk [vmem:[%s7 + $0x8] sm:$0xff] %vm448, %v387
  %451 = vst.msk [vmem:[%s7 + $0x10] sm:$0xff] %vm448, %v389
  %452 = vst.msk [vmem:[%s7 + $0x18] sm:$0xff] %vm448, %v391
  %453 = vst.msk [vmem:[%s7 + $0x20] sm:$0xff] %vm448, %v393
  %454 = vst.msk [vmem:[%s7 + $0x28] sm:$0xff] %vm448, %v395
  %455 = vst.msk [vmem:[%s7 + $0x30] sm:$0xff] %vm448, %v397
  %456 = vst.msk [vmem:[%s7 + $0x38] sm:$0xff] %vm448, %v399
  %457 = vst.msk [vmem:[%s7 + $0x40] sm:$0xff] %vm448, %v401
  %458 = vst.msk [vmem:[%s7 + $0x48] sm:$0xff] %vm448, %v403
  %459 = vst.msk [vmem:[%s7 + $0x50] sm:$0xff] %vm448, %v405
  %460 = vst.msk [vmem:[%s7 + $0x58] sm:$0xff] %vm448, %v407
  %461 = vst.msk [vmem:[%s7 + $0x60] sm:$0xff] %vm448, %v409
  %462 = vst.msk [vmem:[%s7 + $0x68] sm:$0xff] %vm448, %v411
  %463 = vst.msk [vmem:[%s7 + $0x70] sm:$0xff] %vm448, %v413
  %464 = vst.msk [vmem:[%s7 + $0x78] sm:$0xff] %vm448, %v415
  %465 = vst.msk [vmem:[%s7 + $0x80] sm:$0xff] %vm448, %v417
  %466 = vst.msk [vmem:[%s7 + $0x88] sm:$0xff] %vm448, %v419
  %467 = vst.msk [vmem:[%s7 + $0x90] sm:$0xff] %vm448, %v421
  %468 = vst.msk [vmem:[%s7 + $0x98] sm:$0xff] %vm448, %v423
  %469 = vst.msk [vmem:[%s7 + $0xa0] sm:$0xff] %vm448, %v425
  %470 = vst.msk [vmem:[%s7 + $0xa8] sm:$0xff] %vm448, %v427
  %471 = vst.msk [vmem:[%s7 + $0xb0] sm:$0xff] %vm448, %v429
  %472 = vst.msk [vmem:[%s7 + $0xb8] sm:$0xff] %vm448, %v431
  %473 = vst.msk [vmem:[%s7 + $0xc0] sm:$0xff] %vm448, %v433
  %474 = vst.msk [vmem:[%s7 + $0xc8] sm:$0xff] %vm448, %v435
  %475 = vst.msk [vmem:[%s7 + $0xd0] sm:$0xff] %vm448, %v437
  %476 = vst.msk [vmem:[%s7 + $0xd8] sm:$0xff] %vm448, %v439
  %477 = vst.msk [vmem:[%s7 + $0xe0] sm:$0xff] %vm448, %v441
  %478 = vst.msk [vmem:[%s7 + $0xe8] sm:$0xff] %vm448, %v443
  %479 = vst.msk [vmem:[%s7 + $0xf0] sm:$0xff] %vm448, %v445
  %480 = vst.msk [vmem:[%s7 + $0xf8] sm:$0xff] %vm448, %v447
  %v481 = vld [vmem:[%s4] sm:$0x1]
  %v483 = vperm.slane %v481, 0
  %v485 = vmul.f32 %v220, %v483
  %v486 = vmul.f32 %v221, %v483
  %v487 = vmul.f32 %v222, %v483
  %v488 = vmul.f32 %v223, %v483
  %v489 = vmul.f32 %v224, %v483
  %v490 = vmul.f32 %v225, %v483
  %v491 = vmul.f32 %v226, %v483
  %v492 = vmul.f32 %v227, %v483
  %v493 = vmul.f32 %v228, %v483
  %v494 = vmul.f32 %v229, %v483
  %v495 = vmul.f32 %v230, %v483
  %v496 = vmul.f32 %v231, %v483
  %v497 = vmul.f32 %v232, %v483
  %v498 = vmul.f32 %v233, %v483
  %v499 = vmul.f32 %v234, %v483
  %v500 = vmul.f32 %v235, %v483
  %v501 = vmul.f32 %v236, %v483
  %v502 = vmul.f32 %v237, %v483
  %v503 = vmul.f32 %v238, %v483
  %v504 = vmul.f32 %v239, %v483
  %v505 = vmul.f32 %v240, %v483
  %v506 = vmul.f32 %v241, %v483
  %v507 = vmul.f32 %v242, %v483
  %v508 = vmul.f32 %v243, %v483
  %v509 = vmul.f32 %v244, %v483
  %v510 = vmul.f32 %v245, %v483
  %v511 = vmul.f32 %v246, %v483
  %v512 = vmul.f32 %v247, %v483
  %v513 = vmul.f32 %v248, %v483
  %v514 = vmul.f32 %v249, %v483
  %v515 = vmul.f32 %v250, %v483
  %v516 = vmul.f32 %v251, %v483
  %517 = vadd.xlane.f32.xlu0 %v485
  %v518 = vpop.xlane.xlu0 %517
  %519 = vadd.xlane.f32.xlu0 %v486
  %v520 = vpop.xlane.xlu0 %519
  %521 = vadd.xlane.f32.xlu0 %v487
  %v522 = vpop.xlane.xlu0 %521
  %523 = vadd.xlane.f32.xlu0 %v488
  %v524 = vpop.xlane.xlu0 %523
  %525 = vadd.xlane.f32.xlu0 %v489
  %v526 = vpop.xlane.xlu0 %525
  %527 = vadd.xlane.f32.xlu0 %v490
  %v528 = vpop.xlane.xlu0 %527
  %529 = vadd.xlane.f32.xlu0 %v491
  %v530 = vpop.xlane.xlu0 %529
  %531 = vadd.xlane.f32.xlu0 %v492
  %v532 = vpop.xlane.xlu0 %531
  %533 = vadd.xlane.f32.xlu0 %v493
  %v534 = vpop.xlane.xlu0 %533
  %535 = vadd.xlane.f32.xlu0 %v494
  %v536 = vpop.xlane.xlu0 %535
  %537 = vadd.xlane.f32.xlu0 %v495
  %v538 = vpop.xlane.xlu0 %537
  %539 = vadd.xlane.f32.xlu0 %v496
  %v540 = vpop.xlane.xlu0 %539
  %541 = vadd.xlane.f32.xlu0 %v497
  %v542 = vpop.xlane.xlu0 %541
  %543 = vadd.xlane.f32.xlu0 %v498
  %v544 = vpop.xlane.xlu0 %543
  %545 = vadd.xlane.f32.xlu0 %v499
  %v546 = vpop.xlane.xlu0 %545
  %547 = vadd.xlane.f32.xlu0 %v500
  %v548 = vpop.xlane.xlu0 %547
  %549 = vadd.xlane.f32.xlu0 %v501
  %v550 = vpop.xlane.xlu0 %549
  %551 = vadd.xlane.f32.xlu0 %v502
  %v552 = vpop.xlane.xlu0 %551
  %553 = vadd.xlane.f32.xlu0 %v503
  %v554 = vpop.xlane.xlu0 %553
  %555 = vadd.xlane.f32.xlu0 %v504
  %v556 = vpop.xlane.xlu0 %555
  %557 = vadd.xlane.f32.xlu0 %v505
  %v558 = vpop.xlane.xlu0 %557
  %559 = vadd.xlane.f32.xlu0 %v506
  %v560 = vpop.xlane.xlu0 %559
  %561 = vadd.xlane.f32.xlu0 %v507
  %v562 = vpop.xlane.xlu0 %561
  %563 = vadd.xlane.f32.xlu0 %v508
  %v564 = vpop.xlane.xlu0 %563
  %565 = vadd.xlane.f32.xlu0 %v509
  %v566 = vpop.xlane.xlu0 %565
  %567 = vadd.xlane.f32.xlu0 %v510
  %v568 = vpop.xlane.xlu0 %567
  %569 = vadd.xlane.f32.xlu0 %v511
  %v570 = vpop.xlane.xlu0 %569
  %571 = vadd.xlane.f32.xlu0 %v512
  %v572 = vpop.xlane.xlu0 %571
  %573 = vadd.xlane.f32.xlu0 %v513
  %v574 = vpop.xlane.xlu0 %573
  %575 = vadd.xlane.f32.xlu0 %v514
  %v576 = vpop.xlane.xlu0 %575
  %577 = vadd.xlane.f32.xlu0 %v515
  %v578 = vpop.xlane.xlu0 %577
  %579 = vadd.xlane.f32.xlu0 %v516
  %v580 = vpop.xlane.xlu0 %579
  %581 = vst.msk [vmem:[%s8] sm:$0xff] %vm448, %v518
  %582 = vst.msk [vmem:[%s8 + $0x8] sm:$0xff] %vm448, %v520
  %583 = vst.msk [vmem:[%s8 + $0x10] sm:$0xff] %vm448, %v522
  %584 = vst.msk [vmem:[%s8 + $0x18] sm:$0xff] %vm448, %v524
  %585 = vst.msk [vmem:[%s8 + $0x20] sm:$0xff] %vm448, %v526
  %586 = vst.msk [vmem:[%s8 + $0x28] sm:$0xff] %vm448, %v528
  %587 = vst.msk [vmem:[%s8 + $0x30] sm:$0xff] %vm448, %v530
  %588 = vst.msk [vmem:[%s8 + $0x38] sm:$0xff] %vm448, %v532
  %589 = vst.msk [vmem:[%s8 + $0x40] sm:$0xff] %vm448, %v534
  %590 = vst.msk [vmem:[%s8 + $0x48] sm:$0xff] %vm448, %v536
  %591 = vst.msk [vmem:[%s8 + $0x50] sm:$0xff] %vm448, %v538
  %592 = vst.msk [vmem:[%s8 + $0x58] sm:$0xff] %vm448, %v540
  %593 = vst.msk [vmem:[%s8 + $0x60] sm:$0xff] %vm448, %v542
  %594 = vst.msk [vmem:[%s8 + $0x68] sm:$0xff] %vm448, %v544
  %595 = vst.msk [vmem:[%s8 + $0x70] sm:$0xff] %vm448, %v546
  %596 = vst.msk [vmem:[%s8 + $0x78] sm:$0xff] %vm448, %v548
  %597 = vst.msk [vmem:[%s8 + $0x80] sm:$0xff] %vm448, %v550
  %598 = vst.msk [vmem:[%s8 + $0x88] sm:$0xff] %vm448, %v552
  %599 = vst.msk [vmem:[%s8 + $0x90] sm:$0xff] %vm448, %v554
  %600 = vst.msk [vmem:[%s8 + $0x98] sm:$0xff] %vm448, %v556
  %601 = vst.msk [vmem:[%s8 + $0xa0] sm:$0xff] %vm448, %v558
  %602 = vst.msk [vmem:[%s8 + $0xa8] sm:$0xff] %vm448, %v560
  %603 = vst.msk [vmem:[%s8 + $0xb0] sm:$0xff] %vm448, %v562
  %604 = vst.msk [vmem:[%s8 + $0xb8] sm:$0xff] %vm448, %v564
  %605 = vst.msk [vmem:[%s8 + $0xc0] sm:$0xff] %vm448, %v566
  %606 = vst.msk [vmem:[%s8 + $0xc8] sm:$0xff] %vm448, %v568
  %607 = vst.msk [vmem:[%s8 + $0xd0] sm:$0xff] %vm448, %v570
  %608 = vst.msk [vmem:[%s8 + $0xd8] sm:$0xff] %vm448, %v572
  %609 = vst.msk [vmem:[%s8 + $0xe0] sm:$0xff] %vm448, %v574
  %610 = vst.msk [vmem:[%s8 + $0xe8] sm:$0xff] %vm448, %v576
  %611 = vst.msk [vmem:[%s8 + $0xf0] sm:$0xff] %vm448, %v578
  %612 = vst.msk [vmem:[%s8 + $0xf8] sm:$0xff] %vm448, %v580
  // Predicated region
  $region22: #{fagcn_forward.3} parent=0 // pred_check
    _
  $region23: #{fagcn_forward.3} parent=0 // pred_check_branch
    %614 = sbr.rel (0) target = $region25
  $region24: #{fagcn_forward.3} parent=0 // pred_region
    _
  $region25: #{fagcn_forward.3} parent=0 // pred_fallthru
    _
  // Predicated region
  $region26: #{fagcn_forward.3} parent=0 // pred_check
    _
  $region27: #{fagcn_forward.3} parent=0 // pred_check_branch
    %616 = sbr.rel (0) target = $region29
  $region28: #{fagcn_forward.3} parent=0 // pred_region
    _
  $region29: #{fagcn_forward.3} parent=0 // pred_fallthru
    _
  // Predicated region
  $region30: #{fagcn_forward.3} parent=0 // pred_check
    _
  $region31: #{fagcn_forward.3} parent=0 // pred_check_branch
    %618 = sbr.rel (0) target = $region33
  $region32: #{fagcn_forward.3} parent=0 // pred_region
    _
  $region33: #{fagcn_forward.3} parent=0 // pred_fallthru
    _
  // Predicated region
  $region34: #{fagcn_forward.3} parent=0 // pred_check
    _
  $region35: #{fagcn_forward.3} parent=0 // pred_check_branch
    %620 = sbr.rel (0) target = $region37
  $region36: #{fagcn_forward.3} parent=0 // pred_region
    _
  $region37: #{fagcn_forward.3} parent=0 // pred_fallthru
    _
  // Predicated region
  $region38: #{fagcn_forward.3} parent=0 // pred_check
    _
  $region39: #{fagcn_forward.3} parent=0 // pred_check_branch
    %622 = sbr.rel (0) target = $region41
  $region40: #{fagcn_forward.3} parent=0 // pred_region
    _
  $region41: #{fagcn_forward.3} parent=0 // pred_fallthru
    _
  // Predicated region
  $region42: #{fagcn_forward.3} parent=0 // pred_check
    _
  $region43: #{fagcn_forward.3} parent=0 // pred_check_branch
    %624 = sbr.rel (0) target = $region45
  $region44: #{fagcn_forward.3} parent=0 // pred_region
    _
  $region45: #{fagcn_forward.3} parent=0 // pred_fallthru
    _
  // Predicated region
  $region46: #{fagcn_forward.3} parent=0 // pred_check
    _
  $region47: #{fagcn_forward.3} parent=0 // pred_check_branch
    %626 = sbr.rel (0) target = $region49
  $region48: #{fagcn_forward.3} parent=0 // pred_region
    _
  $region49: #{fagcn_forward.3} parent=0 // pred_fallthru
    _
  // Predicated region
  $region50: #{fagcn_forward.3} parent=0 // pred_check
    _
  $region51: #{fagcn_forward.3} parent=0 // pred_check_branch
    %628 = sbr.rel (0) target = $region53
  $region52: #{fagcn_forward.3} parent=0 // pred_region
    _
  $region53: #{fagcn_forward.3} parent=0 // pred_fallthru
    _

// kernel: fagcn_forward.4
$region0: #{fagcn_forward.4}
  #allocation0 [shape = 'u32[]', space=smem, size = 0x4, offset = 0x4, fixed_abs, tag = 'smem constant byte address 0x4 - core index']
  #allocation1 [shape = 'u32[72,128]{1,0:T(1,128)}', space=vmem, size = 0x9000, scoped, tag = 'internal scratch']
  #allocation2 [shape = 'f32[256,128]{1,0:T(8,128)}', space=vmem, size = 0x20000, scoped, tag = 'scratch operand']
  #allocation3 [shape = 's32[1]{0}', space=sflag, size = 0x4, scoped, tag = 'scoped memory for fagcn_forward.4']
  #allocation4 [shape = 's32[1]{0:T(128)S(6)}', space=smem, size = 0x200, scoped, tag = 'prefetched SMEM operand 0']
  #allocation5 [shape = 's32[1]{0:T(128)S(6)}', space=smem, size = 0x200, scoped, tag = 'prefetched SMEM operand 1']
  %s0 = inlined_call_operand.<no memory space> [shape: s32[1], index: 0, kind: input, shape index: {}]
  %s1 = inlined_call_operand.<no memory space> [shape: s32[1], index: 1, kind: input, shape index: {}]
  %s2 = inlined_call_operand.vmem [shape: f32[256,1], index: 2, kind: input, shape index: {}]
  %s3 = inlined_call_operand.vmem [shape: f32[1,256], index: 3, kind: input, shape index: {}]
  %s4 = inlined_call_operand.vmem [shape: bf16[256,256], index: 4, kind: input, shape index: {}]
  %s5 = inlined_call_operand.vmem [shape: bf16[256,128], index: 5, kind: input, shape index: {}]
  %s6 = inlined_call_operand.vmem [shape: f32[256,128], index: 6, kind: input, shape index: {}]
  %s7 = inlined_call_operand.vmem [shape: f32[1,128], index: 7, kind: input, shape index: {}]
  %s8 = inlined_call_operand.vmem [shape: f32[1,128], index: 8, kind: input, shape index: {}]
  %s9 = inlined_call_operand.vmem [shape: bf16[256,128], index: 9, kind: output, shape index: {0}]
  %s10 = inlined_call_operand.vmem [shape: f32[256,1], index: 10, kind: output, shape index: {1}]
  %s11 = inlined_call_operand.vmem [shape: f32[256,1], index: 11, kind: output, shape index: {2}]
  %12 = xla_tuple %s9, %s10, %s11
  %s13 = sld [smem:[#allocation0]]
  $region66: #{fagcn_forward.4} parent=0
    _
  %s15 = ssub.s32 1, %s13
  %s16 = scalar_select 0, %s15, %s13
  %17 = sst [smem:[#allocation4]] %s0
  %18 = sst [smem:[#allocation5]] %s1
  // Predicated region
  $region2: #{fagcn_forward.4} parent=0 // pred_check
    _
  $region3: #{fagcn_forward.4} parent=0 // pred_check_branch
    %20 = sbr.rel (0) target = $region5
  $region4: #{fagcn_forward.4} parent=0 // pred_region
    _
  $region5: #{fagcn_forward.4} parent=0 // pred_fallthru
    _
  // Predicated region
  $region6: #{fagcn_forward.4} parent=0 // pred_check
    _
  $region7: #{fagcn_forward.4} parent=0 // pred_check_branch
    %22 = sbr.rel (0) target = $region9
  $region8: #{fagcn_forward.4} parent=0 // pred_region
    %s23 = sadd.s32 0, 0
    %s24 = sld [smem:[#allocation4 + %s23]]
    %s25 = smul.u32 2, %s24
    %p26 = scmp.lt.s32.totalorder %s25, 1
    %s27 = scalar_select %p26, %s25, 1
    %s28 = scalar_lea.vmem %s3, %s27
    %s29 = sadd.s32 0, 0
    %s30 = sld [smem:[#allocation4 + %s29]]
    %s31 = smul.u32 2, %s30
  $region9: #{fagcn_forward.4} parent=0 // pred_fallthru
    _
  // Predicated region
  $region10: #{fagcn_forward.4} parent=0 // pred_check
    _
  $region11: #{fagcn_forward.4} parent=0 // pred_check_branch
    %33 = sbr.rel (0) target = $region13
  $region12: #{fagcn_forward.4} parent=0 // pred_region
    %s34 = sadd.s32 0, 0
    %s35 = sld [smem:[#allocation4 + %s34]]
    %s36 = smul.u32 2, %s35
    %p37 = scmp.lt.s32.totalorder %s36, 1
    %s38 = scalar_select %p37, %s36, 1
    %s39 = smul.addr %s38, 4
    %s40 = scalar_lea.vmem %s4, %s39
    %s41 = sadd.s32 0, 0
    %s42 = sld [smem:[#allocation4 + %s41]]
    %s43 = smul.u32 2, %s42
  $region13: #{fagcn_forward.4} parent=0 // pred_fallthru
    _
  // Predicated region
  $region14: #{fagcn_forward.4} parent=0 // pred_check
    _
  $region15: #{fagcn_forward.4} parent=0 // pred_check_branch
    %45 = sbr.rel (0) target = $region17
  $region16: #{fagcn_forward.4} parent=0 // pred_region
    %s46 = sadd.s32 0, 0
    %s47 = sld [smem:[#allocation4 + %s46]]
    %s48 = smul.u32 32, %s47
    %p49 = scmp.lt.s32.totalorder %s48, 31
    %s50 = scalar_select %p49, %s48, 31
    %s51 = smul.addr %s50, 4
    %s52 = scalar_lea.vmem %s5, %s51
    %s53 = sadd.s32 0, 0
    %s54 = sld [smem:[#allocation4 + %s53]]
    %s55 = smul.u32 32, %s54
  $region17: #{fagcn_forward.4} parent=0 // pred_fallthru
    _
  // Predicated region
  $region18: #{fagcn_forward.4} parent=0 // pred_check
    _
  $region19: #{fagcn_forward.4} parent=0 // pred_check_branch
    %57 = sbr.rel (0) target = $region21
  $region20: #{fagcn_forward.4} parent=0 // pred_region
    _
  $region21: #{fagcn_forward.4} parent=0 // pred_fallthru
    _
  // Predicated region
  $region22: #{fagcn_forward.4} parent=0 // pred_check
    _
  $region23: #{fagcn_forward.4} parent=0 // pred_check_branch
    %59 = sbr.rel (0) target = $region25
  $region24: #{fagcn_forward.4} parent=0 // pred_region
    _
  $region25: #{fagcn_forward.4} parent=0 // pred_fallthru
    _
  // Predicated region
  $region26: #{fagcn_forward.4} parent=0 // pred_check
    _
  $region27: #{fagcn_forward.4} parent=0 // pred_check_branch
    %61 = sbr.rel (0) target = $region29
  $region28: #{fagcn_forward.4} parent=0 // pred_region
    _
  $region29: #{fagcn_forward.4} parent=0 // pred_fallthru
    _
  %s62 = sadd.s32 0, 0
  %s63 = sld [smem:[#allocation4 + %s62]]
  %s64 = smul.u32 2, %s63
  %p65 = scmp.lt.s32.totalorder %s64, 1
  %s66 = scalar_select %p65, %s64, 1
  %s67 = scalar_lea.vmem %s3, %s66
  %s68 = sadd.s32 0, 0
  %s69 = sld [smem:[#allocation4 + %s68]]
  %s70 = smul.u32 2, %s69
  %p71 = scmp.lt.s32.totalorder %s70, 1
  %s72 = scalar_select %p71, %s70, 1
  %s73 = smul.addr %s72, 4
  %s74 = scalar_lea.vmem %s4, %s73
  %s75 = sadd.s32 0, 0
  %s76 = sld [smem:[#allocation4 + %s75]]
  %s77 = smul.u32 32, %s76
  %p78 = scmp.lt.s32.totalorder %s77, 31
  %s79 = scalar_select %p78, %s77, 31
  %s80 = smul.addr %s79, 4
  %s81 = scalar_lea.vmem %s5, %s80
  %s82 = sadd.s32 0, 0
  %s83 = sld [smem:[#allocation4 + %s82]]
  %s84 = smul.u32 2, %s83
  %p85 = scmp.lt.s32.totalorder %s84, 1
  %s86 = scalar_select %p85, %s84, 1
  %s87 = scalar_lea.vmem %s3, %s86
  %s88 = sadd.s32 0, 0
  %s89 = sld [smem:[#allocation4 + %s88]]
  %s90 = smul.u32 2, %s89
  %s91 = sadd.s32 0, 0
  %s92 = sld [smem:[#allocation4 + %s91]]
  %s93 = smul.u32 2, %s92
  %p94 = scmp.lt.s32.totalorder %s93, 1
  %s95 = scalar_select %p94, %s93, 1
  %s96 = smul.addr %s95, 4
  %s97 = scalar_lea.vmem %s4, %s96
  %s98 = sadd.s32 0, 0
  %s99 = sld [smem:[#allocation4 + %s98]]
  %s100 = smul.u32 2, %s99
  %s101 = sadd.s32 0, 0
  %s102 = sld [smem:[#allocation4 + %s101]]
  %s103 = smul.u32 32, %s102
  %p104 = scmp.lt.s32.totalorder %s103, 31
  %s105 = scalar_select %p104, %s103, 31
  %s106 = smul.addr %s105, 4
  %s107 = scalar_lea.vmem %s5, %s106
  %s108 = sadd.s32 0, 0
  %s109 = sld [smem:[#allocation4 + %s108]]
  %s110 = smul.u32 32, %s109
  %p111 = scmp.eq.s32.totalorder 0, 0
  // Predicated region
  $region30: #{fagcn_forward.4} parent=0 // pred_check
    %p112 = pneg %p111
  $region31: #{fagcn_forward.4} parent=0 // pred_check_branch
    %114 = sbr.rel (%p112) target = $region33
  $region32: #{fagcn_forward.4} parent=0 // pred_region
    %115 = vst [vmem:[#allocation2] sm:$0xff] 0.0
    %116 = vst [vmem:[#allocation2 + $0x8] sm:$0xff] 0.0
    %117 = vst [vmem:[#allocation2 + $0x10] sm:$0xff] 0.0
    %118 = vst [vmem:[#allocation2 + $0x18] sm:$0xff] 0.0
    %119 = vst [vmem:[#allocation2 + $0x20] sm:$0xff] 0.0
    %120 = vst [vmem:[#allocation2 + $0x28] sm:$0xff] 0.0
    %121 = vst [vmem:[#allocation2 + $0x30] sm:$0xff] 0.0
    %122 = vst [vmem:[#allocation2 + $0x38] sm:$0xff] 0.0
    %123 = vst [vmem:[#allocation2 + $0x40] sm:$0xff] 0.0
    %124 = vst [vmem:[#allocation2 + $0x48] sm:$0xff] 0.0
    %125 = vst [vmem:[#allocation2 + $0x50] sm:$0xff] 0.0
    %126 = vst [vmem:[#allocation2 + $0x58] sm:$0xff] 0.0
    %127 = vst [vmem:[#allocation2 + $0x60] sm:$0xff] 0.0
    %128 = vst [vmem:[#allocation2 + $0x68] sm:$0xff] 0.0
    %129 = vst [vmem:[#allocation2 + $0x70] sm:$0xff] 0.0
    %130 = vst [vmem:[#allocation2 + $0x78] sm:$0xff] 0.0
    %131 = vst [vmem:[#allocation2 + $0x80] sm:$0xff] 0.0
    %132 = vst [vmem:[#allocation2 + $0x88] sm:$0xff] 0.0
    %133 = vst [vmem:[#allocation2 + $0x90] sm:$0xff] 0.0
    %134 = vst [vmem:[#allocation2 + $0x98] sm:$0xff] 0.0
    %135 = vst [vmem:[#allocation2 + $0xa0] sm:$0xff] 0.0
    %136 = vst [vmem:[#allocation2 + $0xa8] sm:$0xff] 0.0
    %137 = vst [vmem:[#allocation2 + $0xb0] sm:$0xff] 0.0
    %138 = vst [vmem:[#allocation2 + $0xb8] sm:$0xff] 0.0
    %139 = vst [vmem:[#allocation2 + $0xc0] sm:$0xff] 0.0
    %140 = vst [vmem:[#allocation2 + $0xc8] sm:$0xff] 0.0
    %141 = vst [vmem:[#allocation2 + $0xd0] sm:$0xff] 0.0
    %142 = vst [vmem:[#allocation2 + $0xd8] sm:$0xff] 0.0
    %143 = vst [vmem:[#allocation2 + $0xe0] sm:$0xff] 0.0
    %144 = vst [vmem:[#allocation2 + $0xe8] sm:$0xff] 0.0
    %145 = vst [vmem:[#allocation2 + $0xf0] sm:$0xff] 0.0
    %146 = vst [vmem:[#allocation2 + $0xf8] sm:$0xff] 0.0
  $region33: #{fagcn_forward.4} parent=0 // pred_fallthru
    _
  %s147 = sld [smem:[#allocation5]]
  %p148 = scmp.lt.s32.totalorder 0, %s147
  // Predicated region
  $region34: #{fagcn_forward.4} parent=0 // pred_check
    %p149 = pneg %p148
  $region35: #{fagcn_forward.4} parent=0 // pred_check_branch
    %151 = sbr.rel (%p149) target = $region37
  $region36: #{fagcn_forward.4} parent=0 // pred_region
    %v152 = vld [vmem:[%s2] sm:$0xff]
    %v153 = vld [vmem:[%s2 + $0x8] sm:$0xff]
    %v154 = vld [vmem:[%s2 + $0x10] sm:$0xff]
    %v155 = vld [vmem:[%s2 + $0x18] sm:$0xff]
    %v156 = vld [vmem:[%s2 + $0x20] sm:$0xff]
    %v157 = vld [vmem:[%s2 + $0x28] sm:$0xff]
    %v158 = vld [vmem:[%s2 + $0x30] sm:$0xff]
    %v159 = vld [vmem:[%s2 + $0x38] sm:$0xff]
    %v160 = vld [vmem:[%s2 + $0x40] sm:$0xff]
    %v161 = vld [vmem:[%s2 + $0x48] sm:$0xff]
    %v162 = vld [vmem:[%s2 + $0x50] sm:$0xff]
    %v163 = vld [vmem:[%s2 + $0x58] sm:$0xff]
    %v164 = vld [vmem:[%s2 + $0x60] sm:$0xff]
    %v165 = vld [vmem:[%s2 + $0x68] sm:$0xff]
    %v166 = vld [vmem:[%s2 + $0x70] sm:$0xff]
    %v167 = vld [vmem:[%s2 + $0x78] sm:$0xff]
    %v168 = vld [vmem:[%s2 + $0x80] sm:$0xff]
    %v169 = vld [vmem:[%s2 + $0x88] sm:$0xff]
    %v170 = vld [vmem:[%s2 + $0x90] sm:$0xff]
    %v171 = vld [vmem:[%s2 + $0x98] sm:$0xff]
    %v172 = vld [vmem:[%s2 + $0xa0] sm:$0xff]
    %v173 = vld [vmem:[%s2 + $0xa8] sm:$0xff]
    %v174 = vld [vmem:[%s2 + $0xb0] sm:$0xff]
    %v175 = vld [vmem:[%s2 + $0xb8] sm:$0xff]
    %v176 = vld [vmem:[%s2 + $0xc0] sm:$0xff]
    %v177 = vld [vmem:[%s2 + $0xc8] sm:$0xff]
    %v178 = vld [vmem:[%s2 + $0xd0] sm:$0xff]
    %v179 = vld [vmem:[%s2 + $0xd8] sm:$0xff]
    %v180 = vld [vmem:[%s2 + $0xe0] sm:$0xff]
    %v181 = vld [vmem:[%s2 + $0xe8] sm:$0xff]
    %v182 = vld [vmem:[%s2 + $0xf0] sm:$0xff]
    %v183 = vld [vmem:[%s2 + $0xf8] sm:$0xff]
    %v184 = vld [vmem:[%s87] sm:$0x3]
    %186 = vset.pattern.permute.xlu0 0
    %187 = vperm.xlu0 %186, %v152
    %v188 = vpop.permute.xlu0 %187
    %191 = vset.pattern.permute.xlu0 0
    %192 = vperm.xlu0 %191, %v153
    %v193 = vpop.permute.xlu0 %192
    %196 = vset.pattern.permute.xlu0 0
    %197 = vperm.xlu0 %196, %v154
    %v198 = vpop.permute.xlu0 %197
    %201 = vset.pattern.permute.xlu0 0
    %202 = vperm.xlu0 %201, %v155
    %v203 = vpop.permute.xlu0 %202
    %206 = vset.pattern.permute.xlu0 0
    %207 = vperm.xlu0 %206, %v156
    %v208 = vpop.permute.xlu0 %207
    %211 = vset.pattern.permute.xlu0 0
    %212 = vperm.xlu0 %211, %v157
    %v213 = vpop.permute.xlu0 %212
    %216 = vset.pattern.permute.xlu0 0
    %217 = vperm.xlu0 %216, %v158
    %v218 = vpop.permute.xlu0 %217
    %221 = vset.pattern.permute.xlu0 0
    %222 = vperm.xlu0 %221, %v159
    %v223 = vpop.permute.xlu0 %222
    %226 = vset.pattern.permute.xlu0 0
    %227 = vperm.xlu0 %226, %v160
    %v228 = vpop.permute.xlu0 %227
    %231 = vset.pattern.permute.xlu0 0
    %232 = vperm.xlu0 %231, %v161
    %v233 = vpop.permute.xlu0 %232
    %236 = vset.pattern.permute.xlu0 0
    %237 = vperm.xlu0 %236, %v162
    %v238 = vpop.permute.xlu0 %237
    %241 = vset.pattern.permute.xlu0 0
    %242 = vperm.xlu0 %241, %v163
    %v243 = vpop.permute.xlu0 %242
    %246 = vset.pattern.permute.xlu0 0
    %247 = vperm.xlu0 %246, %v164
    %v248 = vpop.permute.xlu0 %247
    %251 = vset.pattern.permute.xlu0 0
    %252 = vperm.xlu0 %251, %v165
    %v253 = vpop.permute.xlu0 %252
    %256 = vset.pattern.permute.xlu0 0
    %257 = vperm.xlu0 %256, %v166
    %v258 = vpop.permute.xlu0 %257
    %261 = vset.pattern.permute.xlu0 0
    %262 = vperm.xlu0 %261, %v167
    %v263 = vpop.permute.xlu0 %262
    %266 = vset.pattern.permute.xlu0 0
    %267 = vperm.xlu0 %266, %v168
    %v268 = vpop.permute.xlu0 %267
    %271 = vset.pattern.permute.xlu0 0
    %272 = vperm.xlu0 %271, %v169
    %v273 = vpop.permute.xlu0 %272
    %276 = vset.pattern.permute.xlu0 0
    %277 = vperm.xlu0 %276, %v170
    %v278 = vpop.permute.xlu0 %277
    %281 = vset.pattern.permute.xlu0 0
    %282 = vperm.xlu0 %281, %v171
    %v283 = vpop.permute.xlu0 %282
    %286 = vset.pattern.permute.xlu0 0
    %287 = vperm.xlu0 %286, %v172
    %v288 = vpop.permute.xlu0 %287
    %291 = vset.pattern.permute.xlu0 0
    %292 = vperm.xlu0 %291, %v173
    %v293 = vpop.permute.xlu0 %292
    %296 = vset.pattern.permute.xlu0 0
    %297 = vperm.xlu0 %296, %v174
    %v298 = vpop.permute.xlu0 %297
    %301 = vset.pattern.permute.xlu0 0
    %302 = vperm.xlu0 %301, %v175
    %v303 = vpop.permute.xlu0 %302
    %306 = vset.pattern.permute.xlu0 0
    %307 = vperm.xlu0 %306, %v176
    %v308 = vpop.permute.xlu0 %307
    %311 = vset.pattern.permute.xlu0 0
    %312 = vperm.xlu0 %311, %v177
    %v313 = vpop.permute.xlu0 %312
    %316 = vset.pattern.permute.xlu0 0
    %317 = vperm.xlu0 %316, %v178
    %v318 = vpop.permute.xlu0 %317
    %321 = vset.pattern.permute.xlu0 0
    %322 = vperm.xlu0 %321, %v179
    %v323 = vpop.permute.xlu0 %322
    %326 = vset.pattern.permute.xlu0 0
    %327 = vperm.xlu0 %326, %v180
    %v328 = vpop.permute.xlu0 %327
    %331 = vset.pattern.permute.xlu0 0
    %332 = vperm.xlu0 %331, %v181
    %v333 = vpop.permute.xlu0 %332
    %336 = vset.pattern.permute.xlu0 0
    %337 = vperm.xlu0 %336, %v182
    %v338 = vpop.permute.xlu0 %337
    %341 = vset.pattern.permute.xlu0 0
    %342 = vperm.xlu0 %341, %v183
    %v343 = vpop.permute.xlu0 %342
    %v346 = vperm.slane %v184, 0
    %v347 = vperm.slane %v184, 1
    %v350 = vadd.f32 %v188, %v346
    %v351 = vadd.f32 %v188, %v347
    %v352 = vadd.f32 %v193, %v346
    %v353 = vadd.f32 %v193, %v347
    %v354 = vadd.f32 %v198, %v346
    %v355 = vadd.f32 %v198, %v347
    %v356 = vadd.f32 %v203, %v346
    %v357 = vadd.f32 %v203, %v347
    %v358 = vadd.f32 %v208, %v346
    %v359 = vadd.f32 %v208, %v347
    %v360 = vadd.f32 %v213, %v346
    %v361 = vadd.f32 %v213, %v347
    %v362 = vadd.f32 %v218, %v346
    %v363 = vadd.f32 %v218, %v347
    %v364 = vadd.f32 %v223, %v346
    %v365 = vadd.f32 %v223, %v347
    %v366 = vadd.f32 %v228, %v346
    %v367 = vadd.f32 %v228, %v347
    %v368 = vadd.f32 %v233, %v346
    %v369 = vadd.f32 %v233, %v347
    %v370 = vadd.f32 %v238, %v346
    %v371 = vadd.f32 %v238, %v347
    %v372 = vadd.f32 %v243, %v346
    %v373 = vadd.f32 %v243, %v347
    %v374 = vadd.f32 %v248, %v346
    %v375 = vadd.f32 %v248, %v347
    %v376 = vadd.f32 %v253, %v346
    %v377 = vadd.f32 %v253, %v347
    %v378 = vadd.f32 %v258, %v346
    %v379 = vadd.f32 %v258, %v347
    %v380 = vadd.f32 %v263, %v346
    %v381 = vadd.f32 %v263, %v347
    %v382 = vadd.f32 %v268, %v346
    %v383 = vadd.f32 %v268, %v347
    %v384 = vadd.f32 %v273, %v346
    %v385 = vadd.f32 %v273, %v347
    %v386 = vadd.f32 %v278, %v346
    %v387 = vadd.f32 %v278, %v347
    %v388 = vadd.f32 %v283, %v346
    %v389 = vadd.f32 %v283, %v347
    %v390 = vadd.f32 %v288, %v346
    %v391 = vadd.f32 %v288, %v347
    %v392 = vadd.f32 %v293, %v346
    %v393 = vadd.f32 %v293, %v347
    %v394 = vadd.f32 %v298, %v346
    %v395 = vadd.f32 %v298, %v347
    %v396 = vadd.f32 %v303, %v346
    %v397 = vadd.f32 %v303, %v347
    %v398 = vadd.f32 %v308, %v346
    %v399 = vadd.f32 %v308, %v347
    %v400 = vadd.f32 %v313, %v346
    %v401 = vadd.f32 %v313, %v347
    %v402 = vadd.f32 %v318, %v346
    %v403 = vadd.f32 %v318, %v347
    %v404 = vadd.f32 %v323, %v346
    %v405 = vadd.f32 %v323, %v347
    %v406 = vadd.f32 %v328, %v346
    %v407 = vadd.f32 %v328, %v347
    %v408 = vadd.f32 %v333, %v346
    %v409 = vadd.f32 %v333, %v347
    %v410 = vadd.f32 %v338, %v346
    %v411 = vadd.f32 %v338, %v347
    %v412 = vadd.f32 %v343, %v346
    %v413 = vadd.f32 %v343, %v347
    %v414 = vtanh.pop %v350
    %v415 = vtanh.pop %v351
    %v416 = vtanh.pop %v352
    %v417 = vtanh.pop %v353
    %v418 = vtanh.pop %v354
    %v419 = vtanh.pop %v355
    %v420 = vtanh.pop %v356
    %v421 = vtanh.pop %v357
    %v422 = vtanh.pop %v358
    %v423 = vtanh.pop %v359
    %v424 = vtanh.pop %v360
    %v425 = vtanh.pop %v361
    %v426 = vtanh.pop %v362
    %v427 = vtanh.pop %v363
    %v428 = vtanh.pop %v364
    %v429 = vtanh.pop %v365
    %v430 = vtanh.pop %v366
    %v431 = vtanh.pop %v367
    %v432 = vtanh.pop %v368
    %v433 = vtanh.pop %v369
    %v434 = vtanh.pop %v370
    %v435 = vtanh.pop %v371
    %v436 = vtanh.pop %v372
    %v437 = vtanh.pop %v373
    %v438 = vtanh.pop %v374
    %v439 = vtanh.pop %v375
    %v440 = vtanh.pop %v376
    %v441 = vtanh.pop %v377
    %v442 = vtanh.pop %v378
    %v443 = vtanh.pop %v379
    %v444 = vtanh.pop %v380
    %v445 = vtanh.pop %v381
    %v446 = vtanh.pop %v382
    %v447 = vtanh.pop %v383
    %v448 = vtanh.pop %v384
    %v449 = vtanh.pop %v385
    %v450 = vtanh.pop %v386
    %v451 = vtanh.pop %v387
    %v452 = vtanh.pop %v388
    %v453 = vtanh.pop %v389
    %v454 = vtanh.pop %v390
    %v455 = vtanh.pop %v391
    %v456 = vtanh.pop %v392
    %v457 = vtanh.pop %v393
    %v458 = vtanh.pop %v394
    %v459 = vtanh.pop %v395
    %v460 = vtanh.pop %v396
    %v461 = vtanh.pop %v397
    %v462 = vtanh.pop %v398
    %v463 = vtanh.pop %v399
    %v464 = vtanh.pop %v400
    %v465 = vtanh.pop %v401
    %v466 = vtanh.pop %v402
    %v467 = vtanh.pop %v403
    %v468 = vtanh.pop %v404
    %v469 = vtanh.pop %v405
    %v470 = vtanh.pop %v406
    %v471 = vtanh.pop %v407
    %v472 = vtanh.pop %v408
    %v473 = vtanh.pop %v409
    %v474 = vtanh.pop %v410
    %v475 = vtanh.pop %v411
    %v476 = vtanh.pop %v412
    %v477 = vtanh.pop %v413
    %v478 = vld [vmem:[%s97] sm:$0xff]
    %v479 = vld [vmem:[%s97 + $0x8] sm:$0xff]
    %v480 = vld [vmem:[%s97 + $0x10] sm:$0xff]
    %v481 = vld [vmem:[%s97 + $0x18] sm:$0xff]
    %v482 = vld [vmem:[%s97 + $0x20] sm:$0xff]
    %v483 = vld [vmem:[%s97 + $0x28] sm:$0xff]
    %v484 = vld [vmem:[%s97 + $0x30] sm:$0xff]
    %v485 = vld [vmem:[%s97 + $0x38] sm:$0xff]
    %v486 = vld [vmem:[%s97 + $0x40] sm:$0xff]
    %v487 = vld [vmem:[%s97 + $0x48] sm:$0xff]
    %v488 = vld [vmem:[%s97 + $0x50] sm:$0xff]
    %v489 = vld [vmem:[%s97 + $0x58] sm:$0xff]
    %v490 = vld [vmem:[%s97 + $0x60] sm:$0xff]
    %v491 = vld [vmem:[%s97 + $0x68] sm:$0xff]
    %v492 = vld [vmem:[%s97 + $0x70] sm:$0xff]
    %v493 = vld [vmem:[%s97 + $0x78] sm:$0xff]
    %v494 = vld [vmem:[%s97 + $0x80] sm:$0xff]
    %v495 = vld [vmem:[%s97 + $0x88] sm:$0xff]
    %v496 = vld [vmem:[%s97 + $0x90] sm:$0xff]
    %v497 = vld [vmem:[%s97 + $0x98] sm:$0xff]
    %v498 = vld [vmem:[%s97 + $0xa0] sm:$0xff]
    %v499 = vld [vmem:[%s97 + $0xa8] sm:$0xff]
    %v500 = vld [vmem:[%s97 + $0xb0] sm:$0xff]
    %v501 = vld [vmem:[%s97 + $0xb8] sm:$0xff]
    %v502 = vld [vmem:[%s97 + $0xc0] sm:$0xff]
    %v503 = vld [vmem:[%s97 + $0xc8] sm:$0xff]
    %v504 = vld [vmem:[%s97 + $0xd0] sm:$0xff]
    %v505 = vld [vmem:[%s97 + $0xd8] sm:$0xff]
    %v506 = vld [vmem:[%s97 + $0xe0] sm:$0xff]
    %v507 = vld [vmem:[%s97 + $0xe8] sm:$0xff]
    %v508 = vld [vmem:[%s97 + $0xf0] sm:$0xff]
    %v509 = vld [vmem:[%s97 + $0xf8] sm:$0xff]
    %v510 = vunpack.c.l.bf16 %v478
    %v511 = vunpack.c.h.bf16 %v478
    %v512 = vunpack.c.l.bf16 %v479
    %v513 = vunpack.c.h.bf16 %v479
    %v514 = vunpack.c.l.bf16 %v480
    %v515 = vunpack.c.h.bf16 %v480
    %v516 = vunpack.c.l.bf16 %v481
    %v517 = vunpack.c.h.bf16 %v481
    %v518 = vunpack.c.l.bf16 %v482
    %v519 = vunpack.c.h.bf16 %v482
    %v520 = vunpack.c.l.bf16 %v483
    %v521 = vunpack.c.h.bf16 %v483
    %v522 = vunpack.c.l.bf16 %v484
    %v523 = vunpack.c.h.bf16 %v484
    %v524 = vunpack.c.l.bf16 %v485
    %v525 = vunpack.c.h.bf16 %v485
    %v526 = vunpack.c.l.bf16 %v486
    %v527 = vunpack.c.h.bf16 %v486
    %v528 = vunpack.c.l.bf16 %v487
    %v529 = vunpack.c.h.bf16 %v487
    %v530 = vunpack.c.l.bf16 %v488
    %v531 = vunpack.c.h.bf16 %v488
    %v532 = vunpack.c.l.bf16 %v489
    %v533 = vunpack.c.h.bf16 %v489
    %v534 = vunpack.c.l.bf16 %v490
    %v535 = vunpack.c.h.bf16 %v490
    %v536 = vunpack.c.l.bf16 %v491
    %v537 = vunpack.c.h.bf16 %v491
    %v538 = vunpack.c.l.bf16 %v492
    %v539 = vunpack.c.h.bf16 %v492
    %v540 = vunpack.c.l.bf16 %v493
    %v541 = vunpack.c.h.bf16 %v493
    %v542 = vunpack.c.l.bf16 %v494
    %v543 = vunpack.c.h.bf16 %v494
    %v544 = vunpack.c.l.bf16 %v495
    %v545 = vunpack.c.h.bf16 %v495
    %v546 = vunpack.c.l.bf16 %v496
    %v547 = vunpack.c.h.bf16 %v496
    %v548 = vunpack.c.l.bf16 %v497
    %v549 = vunpack.c.h.bf16 %v497
    %v550 = vunpack.c.l.bf16 %v498
    %v551 = vunpack.c.h.bf16 %v498
    %v552 = vunpack.c.l.bf16 %v499
    %v553 = vunpack.c.h.bf16 %v499
    %v554 = vunpack.c.l.bf16 %v500
    %v555 = vunpack.c.h.bf16 %v500
    %v556 = vunpack.c.l.bf16 %v501
    %v557 = vunpack.c.h.bf16 %v501
    %v558 = vunpack.c.l.bf16 %v502
    %v559 = vunpack.c.h.bf16 %v502
    %v560 = vunpack.c.l.bf16 %v503
    %v561 = vunpack.c.h.bf16 %v503
    %v562 = vunpack.c.l.bf16 %v504
    %v563 = vunpack.c.h.bf16 %v504
    %v564 = vunpack.c.l.bf16 %v505
    %v565 = vunpack.c.h.bf16 %v505
    %v566 = vunpack.c.l.bf16 %v506
    %v567 = vunpack.c.h.bf16 %v506
    %v568 = vunpack.c.l.bf16 %v507
    %v569 = vunpack.c.h.bf16 %v507
    %v570 = vunpack.c.l.bf16 %v508
    %v571 = vunpack.c.h.bf16 %v508
    %v572 = vunpack.c.l.bf16 %v509
    %v573 = vunpack.c.h.bf16 %v509
    %v574 = vmul.f32 %v414, %v510
    %v575 = vmul.f32 %v415, %v511
    %v576 = vmul.f32 %v416, %v512
    %v577 = vmul.f32 %v417, %v513
    %v578 = vmul.f32 %v418, %v514
    %v579 = vmul.f32 %v419, %v515
    %v580 = vmul.f32 %v420, %v516
    %v581 = vmul.f32 %v421, %v517
    %v582 = vmul.f32 %v422, %v518
    %v583 = vmul.f32 %v423, %v519
    %v584 = vmul.f32 %v424, %v520
    %v585 = vmul.f32 %v425, %v521
    %v586 = vmul.f32 %v426, %v522
    %v587 = vmul.f32 %v427, %v523
    %v588 = vmul.f32 %v428, %v524
    %v589 = vmul.f32 %v429, %v525
    %v590 = vmul.f32 %v430, %v526
    %v591 = vmul.f32 %v431, %v527
    %v592 = vmul.f32 %v432, %v528
    %v593 = vmul.f32 %v433, %v529
    %v594 = vmul.f32 %v434, %v530
    %v595 = vmul.f32 %v435, %v531
    %v596 = vmul.f32 %v436, %v532
    %v597 = vmul.f32 %v437, %v533
    %v598 = vmul.f32 %v438, %v534
    %v599 = vmul.f32 %v439, %v535
    %v600 = vmul.f32 %v440, %v536
    %v601 = vmul.f32 %v441, %v537
    %v602 = vmul.f32 %v442, %v538
    %v603 = vmul.f32 %v443, %v539
    %v604 = vmul.f32 %v444, %v540
    %v605 = vmul.f32 %v445, %v541
    %v606 = vmul.f32 %v446, %v542
    %v607 = vmul.f32 %v447, %v543
    %v608 = vmul.f32 %v448, %v544
    %v609 = vmul.f32 %v449, %v545
    %v610 = vmul.f32 %v450, %v546
    %v611 = vmul.f32 %v451, %v547
    %v612 = vmul.f32 %v452, %v548
    %v613 = vmul.f32 %v453, %v549
    %v614 = vmul.f32 %v454, %v550
    %v615 = vmul.f32 %v455, %v551
    %v616 = vmul.f32 %v456, %v552
    %v617 = vmul.f32 %v457, %v553
    %v618 = vmul.f32 %v458, %v554
    %v619 = vmul.f32 %v459, %v555
    %v620 = vmul.f32 %v460, %v556
    %v621 = vmul.f32 %v461, %v557
    %v622 = vmul.f32 %v462, %v558
    %v623 = vmul.f32 %v463, %v559
    %v624 = vmul.f32 %v464, %v560
    %v625 = vmul.f32 %v465, %v561
    %v626 = vmul.f32 %v466, %v562
    %v627 = vmul.f32 %v467, %v563
    %v628 = vmul.f32 %v468, %v564
    %v629 = vmul.f32 %v469, %v565
    %v630 = vmul.f32 %v470, %v566
    %v631 = vmul.f32 %v471, %v567
    %v632 = vmul.f32 %v472, %v568
    %v633 = vmul.f32 %v473, %v569
    %v634 = vmul.f32 %v474, %v570
    %v635 = vmul.f32 %v475, %v571
    %v636 = vmul.f32 %v476, %v572
    %v637 = vmul.f32 %v477, %v573
    %v638 = vpack.c.bf16 %v576, %v574
    %v639 = vpack.c.bf16 %v577, %v575
    %v640 = vpack.c.bf16 %v580, %v578
    %v641 = vpack.c.bf16 %v581, %v579
    %v642 = vpack.c.bf16 %v584, %v582
    %v643 = vpack.c.bf16 %v585, %v583
    %v644 = vpack.c.bf16 %v588, %v586
    %v645 = vpack.c.bf16 %v589, %v587
    %v646 = vpack.c.bf16 %v592, %v590
    %v647 = vpack.c.bf16 %v593, %v591
    %v648 = vpack.c.bf16 %v596, %v594
    %v649 = vpack.c.bf16 %v597, %v595
    %v650 = vpack.c.bf16 %v600, %v598
    %v651 = vpack.c.bf16 %v601, %v599
    %v652 = vpack.c.bf16 %v604, %v602
    %v653 = vpack.c.bf16 %v605, %v603
    %v654 = vpack.c.bf16 %v608, %v606
    %v655 = vpack.c.bf16 %v609, %v607
    %v656 = vpack.c.bf16 %v612, %v610
    %v657 = vpack.c.bf16 %v613, %v611
    %v658 = vpack.c.bf16 %v616, %v614
    %v659 = vpack.c.bf16 %v617, %v615
    %v660 = vpack.c.bf16 %v620, %v618
    %v661 = vpack.c.bf16 %v621, %v619
    %v662 = vpack.c.bf16 %v624, %v622
    %v663 = vpack.c.bf16 %v625, %v623
    %v664 = vpack.c.bf16 %v628, %v626
    %v665 = vpack.c.bf16 %v629, %v627
    %v666 = vpack.c.bf16 %v632, %v630
    %v667 = vpack.c.bf16 %v633, %v631
    %v668 = vpack.c.bf16 %v636, %v634
    %v669 = vpack.c.bf16 %v637, %v635
    %v670 = vld [vmem:[#allocation2] sm:$0xff]
    %v671 = vld [vmem:[#allocation2 + $0x8] sm:$0xff]
    %v672 = vld [vmem:[#allocation2 + $0x10] sm:$0xff]
    %v673 = vld [vmem:[#allocation2 + $0x18] sm:$0xff]
    %v674 = vld [vmem:[#allocation2 + $0x20] sm:$0xff]
    %v675 = vld [vmem:[#allocation2 + $0x28] sm:$0xff]
    %v676 = vld [vmem:[#allocation2 + $0x30] sm:$0xff]
    %v677 = vld [vmem:[#allocation2 + $0x38] sm:$0xff]
    %v678 = vld [vmem:[#allocation2 + $0x40] sm:$0xff]
    %v679 = vld [vmem:[#allocation2 + $0x48] sm:$0xff]
    %v680 = vld [vmem:[#allocation2 + $0x50] sm:$0xff]
    %v681 = vld [vmem:[#allocation2 + $0x58] sm:$0xff]
    %v682 = vld [vmem:[#allocation2 + $0x60] sm:$0xff]
    %v683 = vld [vmem:[#allocation2 + $0x68] sm:$0xff]
    %v684 = vld [vmem:[#allocation2 + $0x70] sm:$0xff]
    %v685 = vld [vmem:[#allocation2 + $0x78] sm:$0xff]
    %v686 = vld [vmem:[#allocation2 + $0x80] sm:$0xff]
    %v687 = vld [vmem:[#allocation2 + $0x88] sm:$0xff]
    %v688 = vld [vmem:[#allocation2 + $0x90] sm:$0xff]
    %v689 = vld [vmem:[#allocation2 + $0x98] sm:$0xff]
    %v690 = vld [vmem:[#allocation2 + $0xa0] sm:$0xff]
    %v691 = vld [vmem:[#allocation2 + $0xa8] sm:$0xff]
    %v692 = vld [vmem:[#allocation2 + $0xb0] sm:$0xff]
    %v693 = vld [vmem:[#allocation2 + $0xb8] sm:$0xff]
    %v694 = vld [vmem:[#allocation2 + $0xc0] sm:$0xff]
    %v695 = vld [vmem:[#allocation2 + $0xc8] sm:$0xff]
    %v696 = vld [vmem:[#allocation2 + $0xd0] sm:$0xff]
    %v697 = vld [vmem:[#allocation2 + $0xd8] sm:$0xff]
    %v698 = vld [vmem:[#allocation2 + $0xe0] sm:$0xff]
    %v699 = vld [vmem:[#allocation2 + $0xe8] sm:$0xff]
    %v700 = vld [vmem:[#allocation2 + $0xf0] sm:$0xff]
    %v701 = vld [vmem:[#allocation2 + $0xf8] sm:$0xff]
    %v702 = vld [vmem:[%s107] sm:$0xf]
    %v703 = vld [vmem:[%s107 + $0x4] sm:$0xf]
    %v704 = vld [vmem:[%s107 + $0x8] sm:$0xf]
    %v705 = vld [vmem:[%s107 + $0xc] sm:$0xf]
    %v706 = vld [vmem:[%s107 + $0x10] sm:$0xf]
    %v707 = vld [vmem:[%s107 + $0x14] sm:$0xf]
    %v708 = vld [vmem:[%s107 + $0x18] sm:$0xf]
    %v709 = vld [vmem:[%s107 + $0x1c] sm:$0xf]
    %v710 = vld [vmem:[%s107 + $0x20] sm:$0xf]
    %v711 = vld [vmem:[%s107 + $0x24] sm:$0xf]
    %v712 = vld [vmem:[%s107 + $0x28] sm:$0xf]
    %v713 = vld [vmem:[%s107 + $0x2c] sm:$0xf]
    %v714 = vld [vmem:[%s107 + $0x30] sm:$0xf]
    %v715 = vld [vmem:[%s107 + $0x34] sm:$0xf]
    %v716 = vld [vmem:[%s107 + $0x38] sm:$0xf]
    %v717 = vld [vmem:[%s107 + $0x3c] sm:$0xf]
    %v718 = vld [vmem:[%s107 + $0x40] sm:$0xf]
    %v719 = vld [vmem:[%s107 + $0x44] sm:$0xf]
    %v720 = vld [vmem:[%s107 + $0x48] sm:$0xf]
    %v721 = vld [vmem:[%s107 + $0x4c] sm:$0xf]
    %v722 = vld [vmem:[%s107 + $0x50] sm:$0xf]
    %v723 = vld [vmem:[%s107 + $0x54] sm:$0xf]
    %v724 = vld [vmem:[%s107 + $0x58] sm:$0xf]
    %v725 = vld [vmem:[%s107 + $0x5c] sm:$0xf]
    %v726 = vld [vmem:[%s107 + $0x60] sm:$0xf]
    %v727 = vld [vmem:[%s107 + $0x64] sm:$0xf]
    %v728 = vld [vmem:[%s107 + $0x68] sm:$0xf]
    %v729 = vld [vmem:[%s107 + $0x6c] sm:$0xf]
    %v730 = vld [vmem:[%s107 + $0x70] sm:$0xf]
    %v731 = vld [vmem:[%s107 + $0x74] sm:$0xf]
    %v732 = vld [vmem:[%s107 + $0x78] sm:$0xf]
    %v733 = vld [vmem:[%s107 + $0x7c] sm:$0xf]
    %v766 = vunpack.c.l.b16 %v702
    %v767 = vunpack.c.l.b16 %v703
    %v768 = vunpack.c.l.b16 %v704
    %v769 = vunpack.c.l.b16 %v705
    %v770 = vunpack.c.l.b16 %v706
    %v771 = vunpack.c.l.b16 %v707
    %v772 = vunpack.c.l.b16 %v708
    %v773 = vunpack.c.l.b16 %v709
    %v774 = vunpack.c.l.b16 %v710
    %v775 = vunpack.c.l.b16 %v711
    %v776 = vunpack.c.l.b16 %v712
    %v777 = vunpack.c.l.b16 %v713
    %v778 = vunpack.c.l.b16 %v714
    %v779 = vunpack.c.l.b16 %v715
    %v780 = vunpack.c.l.b16 %v716
    %v781 = vunpack.c.l.b16 %v717
    %v782 = vunpack.c.l.b16 %v718
    %v783 = vunpack.c.l.b16 %v719
    %v784 = vunpack.c.l.b16 %v720
    %v785 = vunpack.c.l.b16 %v721
    %v786 = vunpack.c.l.b16 %v722
    %v787 = vunpack.c.l.b16 %v723
    %v788 = vunpack.c.l.b16 %v724
    %v789 = vunpack.c.l.b16 %v725
    %v790 = vunpack.c.l.b16 %v726
    %v791 = vunpack.c.l.b16 %v727
    %v792 = vunpack.c.l.b16 %v728
    %v793 = vunpack.c.l.b16 %v729
    %v794 = vunpack.c.l.b16 %v730
    %v795 = vunpack.c.l.b16 %v731
    %v796 = vunpack.c.l.b16 %v732
    %v797 = vunpack.c.l.b16 %v733
    %v798 = vpack.c.b16 %v767, %v766
    %v799 = vpack.c.b16 %v769, %v768
    %v800 = vpack.c.b16 %v771, %v770
    %v801 = vpack.c.b16 %v773, %v772
    %v802 = vpack.c.b16 %v775, %v774
    %v803 = vpack.c.b16 %v777, %v776
    %v804 = vpack.c.b16 %v779, %v778
    %v805 = vpack.c.b16 %v781, %v780
    %v806 = vpack.c.b16 %v783, %v782
    %v807 = vpack.c.b16 %v785, %v784
    %v808 = vpack.c.b16 %v787, %v786
    %v809 = vpack.c.b16 %v789, %v788
    %v810 = vpack.c.b16 %v791, %v790
    %v811 = vpack.c.b16 %v793, %v792
    %v812 = vpack.c.b16 %v795, %v794
    %v813 = vpack.c.b16 %v797, %v796
    %830 = vmatpush.bf16.msra.mxu0 %v805
    %831 = vmatpush.bf16.msra.mxu0 %v804
    %832 = vmatpush.bf16.msra.mxu0 %v803
    %833 = vmatpush.bf16.msra.mxu0 %v802
    %834 = vmatpush.bf16.msra.mxu0 %v801
    %835 = vmatpush.bf16.msra.mxu0 %v800
    %836 = vmatpush.bf16.msra.mxu0 %v799
    %837 = vmatpush.bf16.msra.mxu0 %v798
    %838 = vmatmul.bf16.gmra.mxu0 %v638
    %v839 = vpop.f32.mrf.mxu0
    %v840 = vadd.f32 0.0, %v839
    %v841 = vpop.f32.mrf.mxu0
    %v842 = vadd.f32 0.0, %v841
    %843 = vmatmul.bf16.gmra.mxu0 %v640
    %v844 = vpop.f32.mrf.mxu0
    %v845 = vadd.f32 0.0, %v844
    %v846 = vpop.f32.mrf.mxu0
    %v847 = vadd.f32 0.0, %v846
    %848 = vmatmul.bf16.gmra.mxu0 %v642
    %v849 = vpop.f32.mrf.mxu0
    %v850 = vadd.f32 0.0, %v849
    %v851 = vpop.f32.mrf.mxu0
    %v852 = vadd.f32 0.0, %v851
    %853 = vmatmul.bf16.gmra.mxu0 %v644
    %v854 = vpop.f32.mrf.mxu0
    %v855 = vadd.f32 0.0, %v854
    %v856 = vpop.f32.mrf.mxu0
    %v857 = vadd.f32 0.0, %v856
    %858 = vmatmul.bf16.gmra.mxu0 %v646
    %v859 = vpop.f32.mrf.mxu0
    %v860 = vadd.f32 0.0, %v859
    %v861 = vpop.f32.mrf.mxu0
    %v862 = vadd.f32 0.0, %v861
    %863 = vmatmul.bf16.gmra.mxu0 %v648
    %v864 = vpop.f32.mrf.mxu0
    %v865 = vadd.f32 0.0, %v864
    %v866 = vpop.f32.mrf.mxu0
    %v867 = vadd.f32 0.0, %v866
    %868 = vmatmul.bf16.gmra.mxu0 %v650
    %v869 = vpop.f32.mrf.mxu0
    %v870 = vadd.f32 0.0, %v869
    %v871 = vpop.f32.mrf.mxu0
    %v872 = vadd.f32 0.0, %v871
    %873 = vmatmul.bf16.gmra.mxu0 %v652
    %v874 = vpop.f32.mrf.mxu0
    %v875 = vadd.f32 0.0, %v874
    %v876 = vpop.f32.mrf.mxu0
    %v877 = vadd.f32 0.0, %v876
    %878 = vmatmul.bf16.gmra.mxu0 %v654
    %v879 = vpop.f32.mrf.mxu0
    %v880 = vadd.f32 0.0, %v879
    %v881 = vpop.f32.mrf.mxu0
    %v882 = vadd.f32 0.0, %v881
    %883 = vmatmul.bf16.gmra.mxu0 %v656
    %v884 = vpop.f32.mrf.mxu0
    %v885 = vadd.f32 0.0, %v884
    %v886 = vpop.f32.mrf.mxu0
    %v887 = vadd.f32 0.0, %v886
    %888 = vmatmul.bf16.gmra.mxu0 %v658
    %v889 = vpop.f32.mrf.mxu0
    %v890 = vadd.f32 0.0, %v889
    %v891 = vpop.f32.mrf.mxu0
    %v892 = vadd.f32 0.0, %v891
    %893 = vmatmul.bf16.gmra.mxu0 %v660
    %v894 = vpop.f32.mrf.mxu0
    %v895 = vadd.f32 0.0, %v894
    %v896 = vpop.f32.mrf.mxu0
    %v897 = vadd.f32 0.0, %v896
    %898 = vmatmul.bf16.gmra.mxu0 %v662
    %v899 = vpop.f32.mrf.mxu0
    %v900 = vadd.f32 0.0, %v899
    %v901 = vpop.f32.mrf.mxu0
    %v902 = vadd.f32 0.0, %v901
    %903 = vmatmul.bf16.gmra.mxu0 %v664
    %v904 = vpop.f32.mrf.mxu0
    %v905 = vadd.f32 0.0, %v904
    %v906 = vpop.f32.mrf.mxu0
    %v907 = vadd.f32 0.0, %v906
    %908 = vmatmul.bf16.gmra.mxu0 %v666
    %v909 = vpop.f32.mrf.mxu0
    %v910 = vadd.f32 0.0, %v909
    %v911 = vpop.f32.mrf.mxu0
    %v912 = vadd.f32 0.0, %v911
    %913 = vmatmul.bf16.gmra.mxu0 %v668
    %v914 = vpop.f32.mrf.mxu0
    %v915 = vadd.f32 0.0, %v914
    %v916 = vpop.f32.mrf.mxu0
    %v917 = vadd.f32 0.0, %v916
    %918 = vdwg.mxu0
    %919 = vmatpush.bf16.msra.mxu0 %v813
    %920 = vmatpush.bf16.msra.mxu0 %v812
    %921 = vmatpush.bf16.msra.mxu0 %v811
    %922 = vmatpush.bf16.msra.mxu0 %v810
    %923 = vmatpush.bf16.msra.mxu0 %v809
    %924 = vmatpush.bf16.msra.mxu0 %v808
    %925 = vmatpush.bf16.msra.mxu0 %v807
    %926 = vmatpush.bf16.msra.mxu0 %v806
    %927 = vmatmul.bf16.gmra.mxu0 %v639
    %v928 = vpop.f32.mrf.mxu0
    %v929 = vadd.f32 %v840, %v928
    %v930 = vpop.f32.mrf.mxu0
    %v931 = vadd.f32 %v842, %v930
    %932 = vmatmul.bf16.gmra.mxu0 %v641
    %v933 = vpop.f32.mrf.mxu0
    %v934 = vadd.f32 %v845, %v933
    %v935 = vpop.f32.mrf.mxu0
    %v936 = vadd.f32 %v847, %v935
    %937 = vmatmul.bf16.gmra.mxu0 %v643
    %v938 = vpop.f32.mrf.mxu0
    %v939 = vadd.f32 %v850, %v938
    %v940 = vpop.f32.mrf.mxu0
    %v941 = vadd.f32 %v852, %v940
    %942 = vmatmul.bf16.gmra.mxu0 %v645
    %v943 = vpop.f32.mrf.mxu0
    %v944 = vadd.f32 %v855, %v943
    %v945 = vpop.f32.mrf.mxu0
    %v946 = vadd.f32 %v857, %v945
    %947 = vmatmul.bf16.gmra.mxu0 %v647
    %v948 = vpop.f32.mrf.mxu0
    %v949 = vadd.f32 %v860, %v948
    %v950 = vpop.f32.mrf.mxu0
    %v951 = vadd.f32 %v862, %v950
    %952 = vmatmul.bf16.gmra.mxu0 %v649
    %v953 = vpop.f32.mrf.mxu0
    %v954 = vadd.f32 %v865, %v953
    %v955 = vpop.f32.mrf.mxu0
    %v956 = vadd.f32 %v867, %v955
    %957 = vmatmul.bf16.gmra.mxu0 %v651
    %v958 = vpop.f32.mrf.mxu0
    %v959 = vadd.f32 %v870, %v958
    %v960 = vpop.f32.mrf.mxu0
    %v961 = vadd.f32 %v872, %v960
    %962 = vmatmul.bf16.gmra.mxu0 %v653
    %v963 = vpop.f32.mrf.mxu0
    %v964 = vadd.f32 %v875, %v963
    %v965 = vpop.f32.mrf.mxu0
    %v966 = vadd.f32 %v877, %v965
    %967 = vmatmul.bf16.gmra.mxu0 %v655
    %v968 = vpop.f32.mrf.mxu0
    %v969 = vadd.f32 %v880, %v968
    %v970 = vpop.f32.mrf.mxu0
    %v971 = vadd.f32 %v882, %v970
    %972 = vmatmul.bf16.gmra.mxu0 %v657
    %v973 = vpop.f32.mrf.mxu0
    %v974 = vadd.f32 %v885, %v973
    %v975 = vpop.f32.mrf.mxu0
    %v976 = vadd.f32 %v887, %v975
    %977 = vmatmul.bf16.gmra.mxu0 %v659
    %v978 = vpop.f32.mrf.mxu0
    %v979 = vadd.f32 %v890, %v978
    %v980 = vpop.f32.mrf.mxu0
    %v981 = vadd.f32 %v892, %v980
    %982 = vmatmul.bf16.gmra.mxu0 %v661
    %v983 = vpop.f32.mrf.mxu0
    %v984 = vadd.f32 %v895, %v983
    %v985 = vpop.f32.mrf.mxu0
    %v986 = vadd.f32 %v897, %v985
    %987 = vmatmul.bf16.gmra.mxu0 %v663
    %v988 = vpop.f32.mrf.mxu0
    %v989 = vadd.f32 %v900, %v988
    %v990 = vpop.f32.mrf.mxu0
    %v991 = vadd.f32 %v902, %v990
    %992 = vmatmul.bf16.gmra.mxu0 %v665
    %v993 = vpop.f32.mrf.mxu0
    %v994 = vadd.f32 %v905, %v993
    %v995 = vpop.f32.mrf.mxu0
    %v996 = vadd.f32 %v907, %v995
    %997 = vmatmul.bf16.gmra.mxu0 %v667
    %v998 = vpop.f32.mrf.mxu0
    %v999 = vadd.f32 %v910, %v998
    %v1000 = vpop.f32.mrf.mxu0
    %v1001 = vadd.f32 %v912, %v1000
    %1002 = vmatmul.bf16.gmra.mxu0 %v669
    %v1003 = vpop.f32.mrf.mxu0
    %v1004 = vadd.f32 %v915, %v1003
    %v1005 = vpop.f32.mrf.mxu0
    %v1006 = vadd.f32 %v917, %v1005
    %1007 = vdwg.mxu0
    %v1008 = vadd.f32 %v670, %v929
    %v1009 = vadd.f32 %v671, %v931
    %v1010 = vadd.f32 %v672, %v934
    %v1011 = vadd.f32 %v673, %v936
    %v1012 = vadd.f32 %v674, %v939
    %v1013 = vadd.f32 %v675, %v941
    %v1014 = vadd.f32 %v676, %v944
    %v1015 = vadd.f32 %v677, %v946
    %v1016 = vadd.f32 %v678, %v949
    %v1017 = vadd.f32 %v679, %v951
    %v1018 = vadd.f32 %v680, %v954
    %v1019 = vadd.f32 %v681, %v956
    %v1020 = vadd.f32 %v682, %v959
    %v1021 = vadd.f32 %v683, %v961
    %v1022 = vadd.f32 %v684, %v964
    %v1023 = vadd.f32 %v685, %v966
    %v1024 = vadd.f32 %v686, %v969
    %v1025 = vadd.f32 %v687, %v971
    %v1026 = vadd.f32 %v688, %v974
    %v1027 = vadd.f32 %v689, %v976
    %v1028 = vadd.f32 %v690, %v979
    %v1029 = vadd.f32 %v691, %v981
    %v1030 = vadd.f32 %v692, %v984
    %v1031 = vadd.f32 %v693, %v986
    %v1032 = vadd.f32 %v694, %v989
    %v1033 = vadd.f32 %v695, %v991
    %v1034 = vadd.f32 %v696, %v994
    %v1035 = vadd.f32 %v697, %v996
    %v1036 = vadd.f32 %v698, %v999
    %v1037 = vadd.f32 %v699, %v1001
    %v1038 = vadd.f32 %v700, %v1004
    %v1039 = vadd.f32 %v701, %v1006
    %1040 = vst [vmem:[#allocation2] sm:$0xff] %v1008
    %1041 = vst [vmem:[#allocation2 + $0x8] sm:$0xff] %v1009
    %1042 = vst [vmem:[#allocation2 + $0x10] sm:$0xff] %v1010
    %1043 = vst [vmem:[#allocation2 + $0x18] sm:$0xff] %v1011
    %1044 = vst [vmem:[#allocation2 + $0x20] sm:$0xff] %v1012
    %1045 = vst [vmem:[#allocation2 + $0x28] sm:$0xff] %v1013
    %1046 = vst [vmem:[#allocation2 + $0x30] sm:$0xff] %v1014
    %1047 = vst [vmem:[#allocation2 + $0x38] sm:$0xff] %v1015
    %1048 = vst [vmem:[#allocation2 + $0x40] sm:$0xff] %v1016
    %1049 = vst [vmem:[#allocation2 + $0x48] sm:$0xff] %v1017
    %1050 = vst [vmem:[#allocation2 + $0x50] sm:$0xff] %v1018
    %1051 = vst [vmem:[#allocation2 + $0x58] sm:$0xff] %v1019
    %1052 = vst [vmem:[#allocation2 + $0x60] sm:$0xff] %v1020
    %1053 = vst [vmem:[#allocation2 + $0x68] sm:$0xff] %v1021
    %1054 = vst [vmem:[#allocation2 + $0x70] sm:$0xff] %v1022
    %1055 = vst [vmem:[#allocation2 + $0x78] sm:$0xff] %v1023
    %1056 = vst [vmem:[#allocation2 + $0x80] sm:$0xff] %v1024
    %1057 = vst [vmem:[#allocation2 + $0x88] sm:$0xff] %v1025
    %1058 = vst [vmem:[#allocation2 + $0x90] sm:$0xff] %v1026
    %1059 = vst [vmem:[#allocation2 + $0x98] sm:$0xff] %v1027
    %1060 = vst [vmem:[#allocation2 + $0xa0] sm:$0xff] %v1028
    %1061 = vst [vmem:[#allocation2 + $0xa8] sm:$0xff] %v1029
    %1062 = vst [vmem:[#allocation2 + $0xb0] sm:$0xff] %v1030
    %1063 = vst [vmem:[#allocation2 + $0xb8] sm:$0xff] %v1031
    %1064 = vst [vmem:[#allocation2 + $0xc0] sm:$0xff] %v1032
    %1065 = vst [vmem:[#allocation2 + $0xc8] sm:$0xff] %v1033
    %1066 = vst [vmem:[#allocation2 + $0xd0] sm:$0xff] %v1034
    %1067 = vst [vmem:[#allocation2 + $0xd8] sm:$0xff] %v1035
    %1068 = vst [vmem:[#allocation2 + $0xe0] sm:$0xff] %v1036
    %1069 = vst [vmem:[#allocation2 + $0xe8] sm:$0xff] %v1037
    %1070 = vst [vmem:[#allocation2 + $0xf0] sm:$0xff] %v1038
    %1071 = vst [vmem:[#allocation2 + $0xf8] sm:$0xff] %v1039
  $region37: #{fagcn_forward.4} parent=0 // pred_fallthru
    _
  // Predicated region
  $region38: #{fagcn_forward.4} parent=0 // pred_check
    %p1072 = pneg %p111
  $region39: #{fagcn_forward.4} parent=0 // pred_check_branch
    %1074 = sbr.rel (%p1072) target = $region41
  $region40: #{fagcn_forward.4} parent=0 // pred_region
    %v1075 = vld [vmem:[#allocation2] sm:$0xff]
    %v1076 = vld [vmem:[#allocation2 + $0x8] sm:$0xff]
    %v1077 = vld [vmem:[#allocation2 + $0x10] sm:$0xff]
    %v1078 = vld [vmem:[#allocation2 + $0x18] sm:$0xff]
    %v1079 = vld [vmem:[#allocation2 + $0x20] sm:$0xff]
    %v1080 = vld [vmem:[#allocation2 + $0x28] sm:$0xff]
    %v1081 = vld [vmem:[#allocation2 + $0x30] sm:$0xff]
    %v1082 = vld [vmem:[#allocation2 + $0x38] sm:$0xff]
    %v1083 = vld [vmem:[#allocation2 + $0x40] sm:$0xff]
    %v1084 = vld [vmem:[#allocation2 + $0x48] sm:$0xff]
    %v1085 = vld [vmem:[#allocation2 + $0x50] sm:$0xff]
    %v1086 = vld [vmem:[#allocation2 + $0x58] sm:$0xff]
    %v1087 = vld [vmem:[#allocation2 + $0x60] sm:$0xff]
    %v1088 = vld [vmem:[#allocation2 + $0x68] sm:$0xff]
    %v1089 = vld [vmem:[#allocation2 + $0x70] sm:$0xff]
    %v1090 = vld [vmem:[#allocation2 + $0x78] sm:$0xff]
    %v1091 = vld [vmem:[#allocation2 + $0x80] sm:$0xff]
    %v1092 = vld [vmem:[#allocation2 + $0x88] sm:$0xff]
    %v1093 = vld [vmem:[#allocation2 + $0x90] sm:$0xff]
    %v1094 = vld [vmem:[#allocation2 + $0x98] sm:$0xff]
    %v1095 = vld [vmem:[#allocation2 + $0xa0] sm:$0xff]
    %v1096 = vld [vmem:[#allocation2 + $0xa8] sm:$0xff]
    %v1097 = vld [vmem:[#allocation2 + $0xb0] sm:$0xff]
    %v1098 = vld [vmem:[#allocation2 + $0xb8] sm:$0xff]
    %v1099 = vld [vmem:[#allocation2 + $0xc0] sm:$0xff]
    %v1100 = vld [vmem:[#allocation2 + $0xc8] sm:$0xff]
    %v1101 = vld [vmem:[#allocation2 + $0xd0] sm:$0xff]
    %v1102 = vld [vmem:[#allocation2 + $0xd8] sm:$0xff]
    %v1103 = vld [vmem:[#allocation2 + $0xe0] sm:$0xff]
    %v1104 = vld [vmem:[#allocation2 + $0xe8] sm:$0xff]
    %v1105 = vld [vmem:[#allocation2 + $0xf0] sm:$0xff]
    %v1106 = vld [vmem:[#allocation2 + $0xf8] sm:$0xff]
    %v1107 = vld [vmem:[%s6] sm:$0xff]
    %v1108 = vld [vmem:[%s6 + $0x8] sm:$0xff]
    %v1109 = vld [vmem:[%s6 + $0x10] sm:$0xff]
    %v1110 = vld [vmem:[%s6 + $0x18] sm:$0xff]
    %v1111 = vld [vmem:[%s6 + $0x20] sm:$0xff]
    %v1112 = vld [vmem:[%s6 + $0x28] sm:$0xff]
    %v1113 = vld [vmem:[%s6 + $0x30] sm:$0xff]
    %v1114 = vld [vmem:[%s6 + $0x38] sm:$0xff]
    %v1115 = vld [vmem:[%s6 + $0x40] sm:$0xff]
    %v1116 = vld [vmem:[%s6 + $0x48] sm:$0xff]
    %v1117 = vld [vmem:[%s6 + $0x50] sm:$0xff]
    %v1118 = vld [vmem:[%s6 + $0x58] sm:$0xff]
    %v1119 = vld [vmem:[%s6 + $0x60] sm:$0xff]
    %v1120 = vld [vmem:[%s6 + $0x68] sm:$0xff]
    %v1121 = vld [vmem:[%s6 + $0x70] sm:$0xff]
    %v1122 = vld [vmem:[%s6 + $0x78] sm:$0xff]
    %v1123 = vld [vmem:[%s6 + $0x80] sm:$0xff]
    %v1124 = vld [vmem:[%s6 + $0x88] sm:$0xff]
    %v1125 = vld [vmem:[%s6 + $0x90] sm:$0xff]
    %v1126 = vld [vmem:[%s6 + $0x98] sm:$0xff]
    %v1127 = vld [vmem:[%s6 + $0xa0] sm:$0xff]
    %v1128 = vld [vmem:[%s6 + $0xa8] sm:$0xff]
    %v1129 = vld [vmem:[%s6 + $0xb0] sm:$0xff]
    %v1130 = vld [vmem:[%s6 + $0xb8] sm:$0xff]
    %v1131 = vld [vmem:[%s6 + $0xc0] sm:$0xff]
    %v1132 = vld [vmem:[%s6 + $0xc8] sm:$0xff]
    %v1133 = vld [vmem:[%s6 + $0xd0] sm:$0xff]
    %v1134 = vld [vmem:[%s6 + $0xd8] sm:$0xff]
    %v1135 = vld [vmem:[%s6 + $0xe0] sm:$0xff]
    %v1136 = vld [vmem:[%s6 + $0xe8] sm:$0xff]
    %v1137 = vld [vmem:[%s6 + $0xf0] sm:$0xff]
    %v1138 = vld [vmem:[%s6 + $0xf8] sm:$0xff]
    %v1139 = vmul.f32 %v1107, 0.1
    %v1140 = vmul.f32 %v1108, 0.1
    %v1141 = vmul.f32 %v1109, 0.1
    %v1142 = vmul.f32 %v1110, 0.1
    %v1143 = vmul.f32 %v1111, 0.1
    %v1144 = vmul.f32 %v1112, 0.1
    %v1145 = vmul.f32 %v1113, 0.1
    %v1146 = vmul.f32 %v1114, 0.1
    %v1147 = vmul.f32 %v1115, 0.1
    %v1148 = vmul.f32 %v1116, 0.1
    %v1149 = vmul.f32 %v1117, 0.1
    %v1150 = vmul.f32 %v1118, 0.1
    %v1151 = vmul.f32 %v1119, 0.1
    %v1152 = vmul.f32 %v1120, 0.1
    %v1153 = vmul.f32 %v1121, 0.1
    %v1154 = vmul.f32 %v1122, 0.1
    %v1155 = vmul.f32 %v1123, 0.1
    %v1156 = vmul.f32 %v1124, 0.1
    %v1157 = vmul.f32 %v1125, 0.1
    %v1158 = vmul.f32 %v1126, 0.1
    %v1159 = vmul.f32 %v1127, 0.1
    %v1160 = vmul.f32 %v1128, 0.1
    %v1161 = vmul.f32 %v1129, 0.1
    %v1162 = vmul.f32 %v1130, 0.1
    %v1163 = vmul.f32 %v1131, 0.1
    %v1164 = vmul.f32 %v1132, 0.1
    %v1165 = vmul.f32 %v1133, 0.1
    %v1166 = vmul.f32 %v1134, 0.1
    %v1167 = vmul.f32 %v1135, 0.1
    %v1168 = vmul.f32 %v1136, 0.1
    %v1169 = vmul.f32 %v1137, 0.1
    %v1170 = vmul.f32 %v1138, 0.1
    %v1171 = vadd.f32 %v1075, %v1139
    %v1172 = vadd.f32 %v1076, %v1140
    %v1173 = vadd.f32 %v1077, %v1141
    %v1174 = vadd.f32 %v1078, %v1142
    %v1175 = vadd.f32 %v1079, %v1143
    %v1176 = vadd.f32 %v1080, %v1144
    %v1177 = vadd.f32 %v1081, %v1145
    %v1178 = vadd.f32 %v1082, %v1146
    %v1179 = vadd.f32 %v1083, %v1147
    %v1180 = vadd.f32 %v1084, %v1148
    %v1181 = vadd.f32 %v1085, %v1149
    %v1182 = vadd.f32 %v1086, %v1150
    %v1183 = vadd.f32 %v1087, %v1151
    %v1184 = vadd.f32 %v1088, %v1152
    %v1185 = vadd.f32 %v1089, %v1153
    %v1186 = vadd.f32 %v1090, %v1154
    %v1187 = vadd.f32 %v1091, %v1155
    %v1188 = vadd.f32 %v1092, %v1156
    %v1189 = vadd.f32 %v1093, %v1157
    %v1190 = vadd.f32 %v1094, %v1158
    %v1191 = vadd.f32 %v1095, %v1159
    %v1192 = vadd.f32 %v1096, %v1160
    %v1193 = vadd.f32 %v1097, %v1161
    %v1194 = vadd.f32 %v1098, %v1162
    %v1195 = vadd.f32 %v1099, %v1163
    %v1196 = vadd.f32 %v1100, %v1164
    %v1197 = vadd.f32 %v1101, %v1165
    %v1198 = vadd.f32 %v1102, %v1166
    %v1199 = vadd.f32 %v1103, %v1167
    %v1200 = vadd.f32 %v1104, %v1168
    %v1201 = vadd.f32 %v1105, %v1169
    %v1202 = vadd.f32 %v1106, %v1170
    %v1203 = vpack.c.bf16 %v1171, %v1171
    %v1204 = vpack.c.bf16 %v1172, %v1172
    %v1205 = vpack.c.bf16 %v1173, %v1173
    %v1206 = vpack.c.bf16 %v1174, %v1174
    %v1207 = vpack.c.bf16 %v1175, %v1175
    %v1208 = vpack.c.bf16 %v1176, %v1176
    %v1209 = vpack.c.bf16 %v1177, %v1177
    %v1210 = vpack.c.bf16 %v1178, %v1178
    %v1211 = vpack.c.bf16 %v1179, %v1179
    %v1212 = vpack.c.bf16 %v1180, %v1180
    %v1213 = vpack.c.bf16 %v1181, %v1181
    %v1214 = vpack.c.bf16 %v1182, %v1182
    %v1215 = vpack.c.bf16 %v1183, %v1183
    %v1216 = vpack.c.bf16 %v1184, %v1184
    %v1217 = vpack.c.bf16 %v1185, %v1185
    %v1218 = vpack.c.bf16 %v1186, %v1186
    %v1219 = vpack.c.bf16 %v1187, %v1187
    %v1220 = vpack.c.bf16 %v1188, %v1188
    %v1221 = vpack.c.bf16 %v1189, %v1189
    %v1222 = vpack.c.bf16 %v1190, %v1190
    %v1223 = vpack.c.bf16 %v1191, %v1191
    %v1224 = vpack.c.bf16 %v1192, %v1192
    %v1225 = vpack.c.bf16 %v1193, %v1193
    %v1226 = vpack.c.bf16 %v1194, %v1194
    %v1227 = vpack.c.bf16 %v1195, %v1195
    %v1228 = vpack.c.bf16 %v1196, %v1196
    %v1229 = vpack.c.bf16 %v1197, %v1197
    %v1230 = vpack.c.bf16 %v1198, %v1198
    %v1231 = vpack.c.bf16 %v1199, %v1199
    %v1232 = vpack.c.bf16 %v1200, %v1200
    %v1233 = vpack.c.bf16 %v1201, %v1201
    %v1234 = vpack.c.bf16 %v1202, %v1202
    %1235 = vst [vmem:[%s9] sm:$0xf] %v1203
    %1236 = vst [vmem:[%s9 + $0x4] sm:$0xf] %v1204
    %1237 = vst [vmem:[%s9 + $0x8] sm:$0xf] %v1205
    %1238 = vst [vmem:[%s9 + $0xc] sm:$0xf] %v1206
    %1239 = vst [vmem:[%s9 + $0x10] sm:$0xf] %v1207
    %1240 = vst [vmem:[%s9 + $0x14] sm:$0xf] %v1208
    %1241 = vst [vmem:[%s9 + $0x18] sm:$0xf] %v1209
    %1242 = vst [vmem:[%s9 + $0x1c] sm:$0xf] %v1210
    %1243 = vst [vmem:[%s9 + $0x20] sm:$0xf] %v1211
    %1244 = vst [vmem:[%s9 + $0x24] sm:$0xf] %v1212
    %1245 = vst [vmem:[%s9 + $0x28] sm:$0xf] %v1213
    %1246 = vst [vmem:[%s9 + $0x2c] sm:$0xf] %v1214
    %1247 = vst [vmem:[%s9 + $0x30] sm:$0xf] %v1215
    %1248 = vst [vmem:[%s9 + $0x34] sm:$0xf] %v1216
    %1249 = vst [vmem:[%s9 + $0x38] sm:$0xf] %v1217
    %1250 = vst [vmem:[%s9 + $0x3c] sm:$0xf] %v1218
    %1251 = vst [vmem:[%s9 + $0x40] sm:$0xf] %v1219
    %1252 = vst [vmem:[%s9 + $0x44] sm:$0xf] %v1220
    %1253 = vst [vmem:[%s9 + $0x48] sm:$0xf] %v1221
    %1254 = vst [vmem:[%s9 + $0x4c] sm:$0xf] %v1222
    %1255 = vst [vmem:[%s9 + $0x50] sm:$0xf] %v1223
    %1256 = vst [vmem:[%s9 + $0x54] sm:$0xf] %v1224
    %1257 = vst [vmem:[%s9 + $0x58] sm:$0xf] %v1225
    %1258 = vst [vmem:[%s9 + $0x5c] sm:$0xf] %v1226
    %1259 = vst [vmem:[%s9 + $0x60] sm:$0xf] %v1227
    %1260 = vst [vmem:[%s9 + $0x64] sm:$0xf] %v1228
    %1261 = vst [vmem:[%s9 + $0x68] sm:$0xf] %v1229
    %1262 = vst [vmem:[%s9 + $0x6c] sm:$0xf] %v1230
    %1263 = vst [vmem:[%s9 + $0x70] sm:$0xf] %v1231
    %1264 = vst [vmem:[%s9 + $0x74] sm:$0xf] %v1232
    %1265 = vst [vmem:[%s9 + $0x78] sm:$0xf] %v1233
    %1266 = vst [vmem:[%s9 + $0x7c] sm:$0xf] %v1234
    %v1267 = vld [vmem:[%s7] sm:$0x1]
    %v1269 = vperm.slane %v1267, 0
    %v1271 = vmul.f32 %v1171, %v1269
    %v1272 = vmul.f32 %v1172, %v1269
    %v1273 = vmul.f32 %v1173, %v1269
    %v1274 = vmul.f32 %v1174, %v1269
    %v1275 = vmul.f32 %v1175, %v1269
    %v1276 = vmul.f32 %v1176, %v1269
    %v1277 = vmul.f32 %v1177, %v1269
    %v1278 = vmul.f32 %v1178, %v1269
    %v1279 = vmul.f32 %v1179, %v1269
    %v1280 = vmul.f32 %v1180, %v1269
    %v1281 = vmul.f32 %v1181, %v1269
    %v1282 = vmul.f32 %v1182, %v1269
    %v1283 = vmul.f32 %v1183, %v1269
    %v1284 = vmul.f32 %v1184, %v1269
    %v1285 = vmul.f32 %v1185, %v1269
    %v1286 = vmul.f32 %v1186, %v1269
    %v1287 = vmul.f32 %v1187, %v1269
    %v1288 = vmul.f32 %v1188, %v1269
    %v1289 = vmul.f32 %v1189, %v1269
    %v1290 = vmul.f32 %v1190, %v1269
    %v1291 = vmul.f32 %v1191, %v1269
    %v1292 = vmul.f32 %v1192, %v1269
    %v1293 = vmul.f32 %v1193, %v1269
    %v1294 = vmul.f32 %v1194, %v1269
    %v1295 = vmul.f32 %v1195, %v1269
    %v1296 = vmul.f32 %v1196, %v1269
    %v1297 = vmul.f32 %v1197, %v1269
    %v1298 = vmul.f32 %v1198, %v1269
    %v1299 = vmul.f32 %v1199, %v1269
    %v1300 = vmul.f32 %v1200, %v1269
    %v1301 = vmul.f32 %v1201, %v1269
    %v1302 = vmul.f32 %v1202, %v1269
    %1303 = vadd.xlane.f32.xlu0 %v1271
    %v1304 = vpop.xlane.xlu0 %1303
    %1305 = vadd.xlane.f32.xlu0 %v1272
    %v1306 = vpop.xlane.xlu0 %1305
    %1307 = vadd.xlane.f32.xlu0 %v1273
    %v1308 = vpop.xlane.xlu0 %1307
    %1309 = vadd.xlane.f32.xlu0 %v1274
    %v1310 = vpop.xlane.xlu0 %1309
    %1311 = vadd.xlane.f32.xlu0 %v1275
    %v1312 = vpop.xlane.xlu0 %1311
    %1313 = vadd.xlane.f32.xlu0 %v1276
    %v1314 = vpop.xlane.xlu0 %1313
    %1315 = vadd.xlane.f32.xlu0 %v1277
    %v1316 = vpop.xlane.xlu0 %1315
    %1317 = vadd.xlane.f32.xlu0 %v1278
    %v1318 = vpop.xlane.xlu0 %1317
    %1319 = vadd.xlane.f32.xlu0 %v1279
    %v1320 = vpop.xlane.xlu0 %1319
    %1321 = vadd.xlane.f32.xlu0 %v1280
    %v1322 = vpop.xlane.xlu0 %1321
    %1323 = vadd.xlane.f32.xlu0 %v1281
    %v1324 = vpop.xlane.xlu0 %1323
    %1325 = vadd.xlane.f32.xlu0 %v1282
    %v1326 = vpop.xlane.xlu0 %1325
    %1327 = vadd.xlane.f32.xlu0 %v1283
    %v1328 = vpop.xlane.xlu0 %1327
    %1329 = vadd.xlane.f32.xlu0 %v1284
    %v1330 = vpop.xlane.xlu0 %1329
    %1331 = vadd.xlane.f32.xlu0 %v1285
    %v1332 = vpop.xlane.xlu0 %1331
    %1333 = vadd.xlane.f32.xlu0 %v1286
    %v1334 = vpop.xlane.xlu0 %1333
    %1335 = vadd.xlane.f32.xlu0 %v1287
    %v1336 = vpop.xlane.xlu0 %1335
    %1337 = vadd.xlane.f32.xlu0 %v1288
    %v1338 = vpop.xlane.xlu0 %1337
    %1339 = vadd.xlane.f32.xlu0 %v1289
    %v1340 = vpop.xlane.xlu0 %1339
    %1341 = vadd.xlane.f32.xlu0 %v1290
    %v1342 = vpop.xlane.xlu0 %1341
    %1343 = vadd.xlane.f32.xlu0 %v1291
    %v1344 = vpop.xlane.xlu0 %1343
    %1345 = vadd.xlane.f32.xlu0 %v1292
    %v1346 = vpop.xlane.xlu0 %1345
    %1347 = vadd.xlane.f32.xlu0 %v1293
    %v1348 = vpop.xlane.xlu0 %1347
    %1349 = vadd.xlane.f32.xlu0 %v1294
    %v1350 = vpop.xlane.xlu0 %1349
    %1351 = vadd.xlane.f32.xlu0 %v1295
    %v1352 = vpop.xlane.xlu0 %1351
    %1353 = vadd.xlane.f32.xlu0 %v1296
    %v1354 = vpop.xlane.xlu0 %1353
    %1355 = vadd.xlane.f32.xlu0 %v1297
    %v1356 = vpop.xlane.xlu0 %1355
    %1357 = vadd.xlane.f32.xlu0 %v1298
    %v1358 = vpop.xlane.xlu0 %1357
    %1359 = vadd.xlane.f32.xlu0 %v1299
    %v1360 = vpop.xlane.xlu0 %1359
    %1361 = vadd.xlane.f32.xlu0 %v1300
    %v1362 = vpop.xlane.xlu0 %1361
    %1363 = vadd.xlane.f32.xlu0 %v1301
    %v1364 = vpop.xlane.xlu0 %1363
    %1365 = vadd.xlane.f32.xlu0 %v1302
    %v1366 = vpop.xlane.xlu0 %1365
    %vm1367 = vcmask 7168
    %1368 = vst.msk [vmem:[%s10] sm:$0xff] %vm1367, %v1304
    %1369 = vst.msk [vmem:[%s10 + $0x8] sm:$0xff] %vm1367, %v1306
    %1370 = vst.msk [vmem:[%s10 + $0x10] sm:$0xff] %vm1367, %v1308
    %1371 = vst.msk [vmem:[%s10 + $0x18] sm:$0xff] %vm1367, %v1310
    %1372 = vst.msk [vmem:[%s10 + $0x20] sm:$0xff] %vm1367, %v1312
    %1373 = vst.msk [vmem:[%s10 + $0x28] sm:$0xff] %vm1367, %v1314
    %1374 = vst.msk [vmem:[%s10 + $0x30] sm:$0xff] %vm1367, %v1316
    %1375 = vst.msk [vmem:[%s10 + $0x38] sm:$0xff] %vm1367, %v1318
    %1376 = vst.msk [vmem:[%s10 + $0x40] sm:$0xff] %vm1367, %v1320
    %1377 = vst.msk [vmem:[%s10 + $0x48] sm:$0xff] %vm1367, %v1322
    %1378 = vst.msk [vmem:[%s10 + $0x50] sm:$0xff] %vm1367, %v1324
    %1379 = vst.msk [vmem:[%s10 + $0x58] sm:$0xff] %vm1367, %v1326
    %1380 = vst.msk [vmem:[%s10 + $0x60] sm:$0xff] %vm1367, %v1328
    %1381 = vst.msk [vmem:[%s10 + $0x68] sm:$0xff] %vm1367, %v1330
    %1382 = vst.msk [vmem:[%s10 + $0x70] sm:$0xff] %vm1367, %v1332
    %1383 = vst.msk [vmem:[%s10 + $0x78] sm:$0xff] %vm1367, %v1334
    %1384 = vst.msk [vmem:[%s10 + $0x80] sm:$0xff] %vm1367, %v1336
    %1385 = vst.msk [vmem:[%s10 + $0x88] sm:$0xff] %vm1367, %v1338
    %1386 = vst.msk [vmem:[%s10 + $0x90] sm:$0xff] %vm1367, %v1340
    %1387 = vst.msk [vmem:[%s10 + $0x98] sm:$0xff] %vm1367, %v1342
    %1388 = vst.msk [vmem:[%s10 + $0xa0] sm:$0xff] %vm1367, %v1344
    %1389 = vst.msk [vmem:[%s10 + $0xa8] sm:$0xff] %vm1367, %v1346
    %1390 = vst.msk [vmem:[%s10 + $0xb0] sm:$0xff] %vm1367, %v1348
    %1391 = vst.msk [vmem:[%s10 + $0xb8] sm:$0xff] %vm1367, %v1350
    %1392 = vst.msk [vmem:[%s10 + $0xc0] sm:$0xff] %vm1367, %v1352
    %1393 = vst.msk [vmem:[%s10 + $0xc8] sm:$0xff] %vm1367, %v1354
    %1394 = vst.msk [vmem:[%s10 + $0xd0] sm:$0xff] %vm1367, %v1356
    %1395 = vst.msk [vmem:[%s10 + $0xd8] sm:$0xff] %vm1367, %v1358
    %1396 = vst.msk [vmem:[%s10 + $0xe0] sm:$0xff] %vm1367, %v1360
    %1397 = vst.msk [vmem:[%s10 + $0xe8] sm:$0xff] %vm1367, %v1362
    %1398 = vst.msk [vmem:[%s10 + $0xf0] sm:$0xff] %vm1367, %v1364
    %1399 = vst.msk [vmem:[%s10 + $0xf8] sm:$0xff] %vm1367, %v1366
    %v1400 = vld [vmem:[%s8] sm:$0x1]
    %v1402 = vperm.slane %v1400, 0
    %v1404 = vmul.f32 %v1171, %v1402
    %v1405 = vmul.f32 %v1172, %v1402
    %v1406 = vmul.f32 %v1173, %v1402
    %v1407 = vmul.f32 %v1174, %v1402
    %v1408 = vmul.f32 %v1175, %v1402
    %v1409 = vmul.f32 %v1176, %v1402
    %v1410 = vmul.f32 %v1177, %v1402
    %v1411 = vmul.f32 %v1178, %v1402
    %v1412 = vmul.f32 %v1179, %v1402
    %v1413 = vmul.f32 %v1180, %v1402
    %v1414 = vmul.f32 %v1181, %v1402
    %v1415 = vmul.f32 %v1182, %v1402
    %v1416 = vmul.f32 %v1183, %v1402
    %v1417 = vmul.f32 %v1184, %v1402
    %v1418 = vmul.f32 %v1185, %v1402
    %v1419 = vmul.f32 %v1186, %v1402
    %v1420 = vmul.f32 %v1187, %v1402
    %v1421 = vmul.f32 %v1188, %v1402
    %v1422 = vmul.f32 %v1189, %v1402
    %v1423 = vmul.f32 %v1190, %v1402
    %v1424 = vmul.f32 %v1191, %v1402
    %v1425 = vmul.f32 %v1192, %v1402
    %v1426 = vmul.f32 %v1193, %v1402
    %v1427 = vmul.f32 %v1194, %v1402
    %v1428 = vmul.f32 %v1195, %v1402
    %v1429 = vmul.f32 %v1196, %v1402
    %v1430 = vmul.f32 %v1197, %v1402
    %v1431 = vmul.f32 %v1198, %v1402
    %v1432 = vmul.f32 %v1199, %v1402
    %v1433 = vmul.f32 %v1200, %v1402
    %v1434 = vmul.f32 %v1201, %v1402
    %v1435 = vmul.f32 %v1202, %v1402
    %1436 = vadd.xlane.f32.xlu0 %v1404
    %v1437 = vpop.xlane.xlu0 %1436
    %1438 = vadd.xlane.f32.xlu0 %v1405
    %v1439 = vpop.xlane.xlu0 %1438
    %1440 = vadd.xlane.f32.xlu0 %v1406
    %v1441 = vpop.xlane.xlu0 %1440
    %1442 = vadd.xlane.f32.xlu0 %v1407
    %v1443 = vpop.xlane.xlu0 %1442
    %1444 = vadd.xlane.f32.xlu0 %v1408
    %v1445 = vpop.xlane.xlu0 %1444
    %1446 = vadd.xlane.f32.xlu0 %v1409
    %v1447 = vpop.xlane.xlu0 %1446
    %1448 = vadd.xlane.f32.xlu0 %v1410
    %v1449 = vpop.xlane.xlu0 %1448
    %1450 = vadd.xlane.f32.xlu0 %v1411
    %v1451 = vpop.xlane.xlu0 %1450
    %1452 = vadd.xlane.f32.xlu0 %v1412
    %v1453 = vpop.xlane.xlu0 %1452
    %1454 = vadd.xlane.f32.xlu0 %v1413
    %v1455 = vpop.xlane.xlu0 %1454
    %1456 = vadd.xlane.f32.xlu0 %v1414
    %v1457 = vpop.xlane.xlu0 %1456
    %1458 = vadd.xlane.f32.xlu0 %v1415
    %v1459 = vpop.xlane.xlu0 %1458
    %1460 = vadd.xlane.f32.xlu0 %v1416
    %v1461 = vpop.xlane.xlu0 %1460
    %1462 = vadd.xlane.f32.xlu0 %v1417
    %v1463 = vpop.xlane.xlu0 %1462
    %1464 = vadd.xlane.f32.xlu0 %v1418
    %v1465 = vpop.xlane.xlu0 %1464
    %1466 = vadd.xlane.f32.xlu0 %v1419
    %v1467 = vpop.xlane.xlu0 %1466
    %1468 = vadd.xlane.f32.xlu0 %v1420
    %v1469 = vpop.xlane.xlu0 %1468
    %1470 = vadd.xlane.f32.xlu0 %v1421
    %v1471 = vpop.xlane.xlu0 %1470
    %1472 = vadd.xlane.f32.xlu0 %v1422
    %v1473 = vpop.xlane.xlu0 %1472
    %1474 = vadd.xlane.f32.xlu0 %v1423
    %v1475 = vpop.xlane.xlu0 %1474
    %1476 = vadd.xlane.f32.xlu0 %v1424
    %v1477 = vpop.xlane.xlu0 %1476
    %1478 = vadd.xlane.f32.xlu0 %v1425
    %v1479 = vpop.xlane.xlu0 %1478
    %1480 = vadd.xlane.f32.xlu0 %v1426
    %v1481 = vpop.xlane.xlu0 %1480
    %1482 = vadd.xlane.f32.xlu0 %v1427
    %v1483 = vpop.xlane.xlu0 %1482
    %1484 = vadd.xlane.f32.xlu0 %v1428
    %v1485 = vpop.xlane.xlu0 %1484
    %1486 = vadd.xlane.f32.xlu0 %v1429
    %v1487 = vpop.xlane.xlu0 %1486
    %1488 = vadd.xlane.f32.xlu0 %v1430
    %v1489 = vpop.xlane.xlu0 %1488
    %1490 = vadd.xlane.f32.xlu0 %v1431
    %v1491 = vpop.xlane.xlu0 %1490
    %1492 = vadd.xlane.f32.xlu0 %v1432
    %v1493 = vpop.xlane.xlu0 %1492
    %1494 = vadd.xlane.f32.xlu0 %v1433
    %v1495 = vpop.xlane.xlu0 %1494
    %1496 = vadd.xlane.f32.xlu0 %v1434
    %v1497 = vpop.xlane.xlu0 %1496
    %1498 = vadd.xlane.f32.xlu0 %v1435
    %v1499 = vpop.xlane.xlu0 %1498
    %1500 = vst.msk [vmem:[%s11] sm:$0xff] %vm1367, %v1437
    %1501 = vst.msk [vmem:[%s11 + $0x8] sm:$0xff] %vm1367, %v1439
    %1502 = vst.msk [vmem:[%s11 + $0x10] sm:$0xff] %vm1367, %v1441
    %1503 = vst.msk [vmem:[%s11 + $0x18] sm:$0xff] %vm1367, %v1443
    %1504 = vst.msk [vmem:[%s11 + $0x20] sm:$0xff] %vm1367, %v1445
    %1505 = vst.msk [vmem:[%s11 + $0x28] sm:$0xff] %vm1367, %v1447
    %1506 = vst.msk [vmem:[%s11 + $0x30] sm:$0xff] %vm1367, %v1449
    %1507 = vst.msk [vmem:[%s11 + $0x38] sm:$0xff] %vm1367, %v1451
    %1508 = vst.msk [vmem:[%s11 + $0x40] sm:$0xff] %vm1367, %v1453
    %1509 = vst.msk [vmem:[%s11 + $0x48] sm:$0xff] %vm1367, %v1455
    %1510 = vst.msk [vmem:[%s11 + $0x50] sm:$0xff] %vm1367, %v1457
    %1511 = vst.msk [vmem:[%s11 + $0x58] sm:$0xff] %vm1367, %v1459
    %1512 = vst.msk [vmem:[%s11 + $0x60] sm:$0xff] %vm1367, %v1461
    %1513 = vst.msk [vmem:[%s11 + $0x68] sm:$0xff] %vm1367, %v1463
    %1514 = vst.msk [vmem:[%s11 + $0x70] sm:$0xff] %vm1367, %v1465
    %1515 = vst.msk [vmem:[%s11 + $0x78] sm:$0xff] %vm1367, %v1467
    %1516 = vst.msk [vmem:[%s11 + $0x80] sm:$0xff] %vm1367, %v1469
    %1517 = vst.msk [vmem:[%s11 + $0x88] sm:$0xff] %vm1367, %v1471
    %1518 = vst.msk [vmem:[%s11 + $0x90] sm:$0xff] %vm1367, %v1473
    %1519 = vst.msk [vmem:[%s11 + $0x98] sm:$0xff] %vm1367, %v1475
    %1520 = vst.msk [vmem:[%s11 + $0xa0] sm:$0xff] %vm1367, %v1477
    %1521 = vst.msk [vmem:[%s11 + $0xa8] sm:$0xff] %vm1367, %v1479
    %1522 = vst.msk [vmem:[%s11 + $0xb0] sm:$0xff] %vm1367, %v1481
    %1523 = vst.msk [vmem:[%s11 + $0xb8] sm:$0xff] %vm1367, %v1483
    %1524 = vst.msk [vmem:[%s11 + $0xc0] sm:$0xff] %vm1367, %v1485
    %1525 = vst.msk [vmem:[%s11 + $0xc8] sm:$0xff] %vm1367, %v1487
    %1526 = vst.msk [vmem:[%s11 + $0xd0] sm:$0xff] %vm1367, %v1489
    %1527 = vst.msk [vmem:[%s11 + $0xd8] sm:$0xff] %vm1367, %v1491
    %1528 = vst.msk [vmem:[%s11 + $0xe0] sm:$0xff] %vm1367, %v1493
    %1529 = vst.msk [vmem:[%s11 + $0xe8] sm:$0xff] %vm1367, %v1495
    %1530 = vst.msk [vmem:[%s11 + $0xf0] sm:$0xff] %vm1367, %v1497
    %1531 = vst.msk [vmem:[%s11 + $0xf8] sm:$0xff] %vm1367, %v1499
  $region41: #{fagcn_forward.4} parent=0 // pred_fallthru
    _
  // Predicated region
  $region42: #{fagcn_forward.4} parent=0 // pred_check
    _
  $region43: #{fagcn_forward.4} parent=0 // pred_check_branch
    %1533 = sbr.rel (0) target = $region45
  $region44: #{fagcn_forward.4} parent=0 // pred_region
    _
  $region45: #{fagcn_forward.4} parent=0 // pred_fallthru
    _
  // Predicated region
  $region46: #{fagcn_forward.4} parent=0 // pred_check
    _
  $region47: #{fagcn_forward.4} parent=0 // pred_check_branch
    %1535 = sbr.rel (0) target = $region49
  $region48: #{fagcn_forward.4} parent=0 // pred_region
    _
  $region49: #{fagcn_forward.4} parent=0 // pred_fallthru
    _
  // Predicated region
  $region50: #{fagcn_forward.4} parent=0 // pred_check
    _
  $region51: #{fagcn_forward.4} parent=0 // pred_check_branch
    %1537 = sbr.rel (0) target = $region53
  $region52: #{fagcn_forward.4} parent=0 // pred_region
    _
  $region53: #{fagcn_forward.4} parent=0 // pred_fallthru
    _
  // Predicated region
  $region54: #{fagcn_forward.4} parent=0 // pred_check
    _
  $region55: #{fagcn_forward.4} parent=0 // pred_check_branch
    %1539 = sbr.rel (0) target = $region57
  $region56: #{fagcn_forward.4} parent=0 // pred_region
    _
  $region57: #{fagcn_forward.4} parent=0 // pred_fallthru
    _
  // Predicated region
  $region58: #{fagcn_forward.4} parent=0 // pred_check
    _
  $region59: #{fagcn_forward.4} parent=0 // pred_check_branch
    %1541 = sbr.rel (0) target = $region61
  $region60: #{fagcn_forward.4} parent=0 // pred_region
    _
  $region61: #{fagcn_forward.4} parent=0 // pred_fallthru
    _
  // Predicated region
  $region62: #{fagcn_forward.4} parent=0 // pred_check
    _
  $region63: #{fagcn_forward.4} parent=0 // pred_check_branch
    %1543 = sbr.rel (0) target = $region65
  $region64: #{fagcn_forward.4} parent=0 // pred_region
    _
  $region65: #{fagcn_forward.4} parent=0 // pred_fallthru
    _

// kernel: fagcn_forward.5
$region0: #{fagcn_forward.5}
  #allocation0 [shape = 'u32[]', space=smem, size = 0x4, offset = 0x4, fixed_abs, tag = 'smem constant byte address 0x4 - core index']
  #allocation1 [shape = 'u32[72,128]{1,0:T(1,128)}', space=vmem, size = 0x9000, scoped, tag = 'internal scratch']
  #allocation2 [shape = 'f32[256,128]{1,0:T(8,128)}', space=vmem, size = 0x20000, scoped, tag = 'scratch operand']
  #allocation3 [shape = 's32[1]{0}', space=sflag, size = 0x4, scoped, tag = 'scoped memory for fagcn_forward.5']
  #allocation4 [shape = 's32[1]{0:T(128)S(6)}', space=smem, size = 0x200, scoped, tag = 'prefetched SMEM operand 0']
  #allocation5 [shape = 's32[1]{0:T(128)S(6)}', space=smem, size = 0x200, scoped, tag = 'prefetched SMEM operand 1']
  %s0 = inlined_call_operand.<no memory space> [shape: s32[1], index: 0, kind: input, shape index: {}]
  %s1 = inlined_call_operand.<no memory space> [shape: s32[1], index: 1, kind: input, shape index: {}]
  %s2 = inlined_call_operand.vmem [shape: f32[256,1], index: 2, kind: input, shape index: {}]
  %s3 = inlined_call_operand.vmem [shape: f32[1,256], index: 3, kind: input, shape index: {}]
  %s4 = inlined_call_operand.vmem [shape: bf16[256,256], index: 4, kind: input, shape index: {}]
  %s5 = inlined_call_operand.vmem [shape: bf16[256,128], index: 5, kind: input, shape index: {}]
  %s6 = inlined_call_operand.vmem [shape: f32[256,128], index: 6, kind: input, shape index: {}]
  %s7 = inlined_call_operand.vmem [shape: bf16[128,128], index: 7, kind: input, shape index: {}]
  %s8 = inlined_call_operand.vmem [shape: f32[1,128], index: 8, kind: input, shape index: {}]
  %s9 = inlined_call_operand.vmem [shape: f32[256,128], index: 9, kind: output, shape index: {}]
  %s10 = sld [smem:[#allocation0]]
  $region50: #{fagcn_forward.5} parent=0
    _
  %s12 = ssub.s32 1, %s10
  %s13 = scalar_select 0, %s12, %s10
  %14 = sst [smem:[#allocation4]] %s0
  %15 = sst [smem:[#allocation5]] %s1
  // Predicated region
  $region2: #{fagcn_forward.5} parent=0 // pred_check
    _
  $region3: #{fagcn_forward.5} parent=0 // pred_check_branch
    %17 = sbr.rel (0) target = $region5
  $region4: #{fagcn_forward.5} parent=0 // pred_region
    _
  $region5: #{fagcn_forward.5} parent=0 // pred_fallthru
    _
  // Predicated region
  $region6: #{fagcn_forward.5} parent=0 // pred_check
    _
  $region7: #{fagcn_forward.5} parent=0 // pred_check_branch
    %19 = sbr.rel (0) target = $region9
  $region8: #{fagcn_forward.5} parent=0 // pred_region
    %s20 = sadd.s32 0, 0
    %s21 = sld [smem:[#allocation4 + %s20]]
    %s22 = smul.u32 2, %s21
    %p23 = scmp.lt.s32.totalorder %s22, 1
    %s24 = scalar_select %p23, %s22, 1
    %s25 = scalar_lea.vmem %s3, %s24
    %s26 = sadd.s32 0, 0
    %s27 = sld [smem:[#allocation4 + %s26]]
    %s28 = smul.u32 2, %s27
  $region9: #{fagcn_forward.5} parent=0 // pred_fallthru
    _
  // Predicated region
  $region10: #{fagcn_forward.5} parent=0 // pred_check
    _
  $region11: #{fagcn_forward.5} parent=0 // pred_check_branch
    %30 = sbr.rel (0) target = $region13
  $region12: #{fagcn_forward.5} parent=0 // pred_region
    %s31 = sadd.s32 0, 0
    %s32 = sld [smem:[#allocation4 + %s31]]
    %s33 = smul.u32 2, %s32
    %p34 = scmp.lt.s32.totalorder %s33, 1
    %s35 = scalar_select %p34, %s33, 1
    %s36 = smul.addr %s35, 4
    %s37 = scalar_lea.vmem %s4, %s36
    %s38 = sadd.s32 0, 0
    %s39 = sld [smem:[#allocation4 + %s38]]
    %s40 = smul.u32 2, %s39
  $region13: #{fagcn_forward.5} parent=0 // pred_fallthru
    _
  // Predicated region
  $region14: #{fagcn_forward.5} parent=0 // pred_check
    _
  $region15: #{fagcn_forward.5} parent=0 // pred_check_branch
    %42 = sbr.rel (0) target = $region17
  $region16: #{fagcn_forward.5} parent=0 // pred_region
    %s43 = sadd.s32 0, 0
    %s44 = sld [smem:[#allocation4 + %s43]]
    %s45 = smul.u32 32, %s44
    %p46 = scmp.lt.s32.totalorder %s45, 31
    %s47 = scalar_select %p46, %s45, 31
    %s48 = smul.addr %s47, 4
    %s49 = scalar_lea.vmem %s5, %s48
    %s50 = sadd.s32 0, 0
    %s51 = sld [smem:[#allocation4 + %s50]]
    %s52 = smul.u32 32, %s51
  $region17: #{fagcn_forward.5} parent=0 // pred_fallthru
    _
  // Predicated region
  $region18: #{fagcn_forward.5} parent=0 // pred_check
    _
  $region19: #{fagcn_forward.5} parent=0 // pred_check_branch
    %54 = sbr.rel (0) target = $region21
  $region20: #{fagcn_forward.5} parent=0 // pred_region
    _
  $region21: #{fagcn_forward.5} parent=0 // pred_fallthru
    _
  // Predicated region
  $region22: #{fagcn_forward.5} parent=0 // pred_check
    _
  $region23: #{fagcn_forward.5} parent=0 // pred_check_branch
    %56 = sbr.rel (0) target = $region25
  $region24: #{fagcn_forward.5} parent=0 // pred_region
    _
  $region25: #{fagcn_forward.5} parent=0 // pred_fallthru
    _
  // Predicated region
  $region26: #{fagcn_forward.5} parent=0 // pred_check
    _
  $region27: #{fagcn_forward.5} parent=0 // pred_check_branch
    %58 = sbr.rel (0) target = $region29
  $region28: #{fagcn_forward.5} parent=0 // pred_region
    _
  $region29: #{fagcn_forward.5} parent=0 // pred_fallthru
    _
  %s59 = sadd.s32 0, 0
  %s60 = sld [smem:[#allocation4 + %s59]]
  %s61 = smul.u32 2, %s60
  %p62 = scmp.lt.s32.totalorder %s61, 1
  %s63 = scalar_select %p62, %s61, 1
  %s64 = scalar_lea.vmem %s3, %s63
  %s65 = sadd.s32 0, 0
  %s66 = sld [smem:[#allocation4 + %s65]]
  %s67 = smul.u32 2, %s66
  %p68 = scmp.lt.s32.totalorder %s67, 1
  %s69 = scalar_select %p68, %s67, 1
  %s70 = smul.addr %s69, 4
  %s71 = scalar_lea.vmem %s4, %s70
  %s72 = sadd.s32 0, 0
  %s73 = sld [smem:[#allocation4 + %s72]]
  %s74 = smul.u32 32, %s73
  %p75 = scmp.lt.s32.totalorder %s74, 31
  %s76 = scalar_select %p75, %s74, 31
  %s77 = smul.addr %s76, 4
  %s78 = scalar_lea.vmem %s5, %s77
  %s79 = sadd.s32 0, 0
  %s80 = sld [smem:[#allocation4 + %s79]]
  %s81 = smul.u32 2, %s80
  %p82 = scmp.lt.s32.totalorder %s81, 1
  %s83 = scalar_select %p82, %s81, 1
  %s84 = scalar_lea.vmem %s3, %s83
  %s85 = sadd.s32 0, 0
  %s86 = sld [smem:[#allocation4 + %s85]]
  %s87 = smul.u32 2, %s86
  %s88 = sadd.s32 0, 0
  %s89 = sld [smem:[#allocation4 + %s88]]
  %s90 = smul.u32 2, %s89
  %p91 = scmp.lt.s32.totalorder %s90, 1
  %s92 = scalar_select %p91, %s90, 1
  %s93 = smul.addr %s92, 4
  %s94 = scalar_lea.vmem %s4, %s93
  %s95 = sadd.s32 0, 0
  %s96 = sld [smem:[#allocation4 + %s95]]
  %s97 = smul.u32 2, %s96
  %s98 = sadd.s32 0, 0
  %s99 = sld [smem:[#allocation4 + %s98]]
  %s100 = smul.u32 32, %s99
  %p101 = scmp.lt.s32.totalorder %s100, 31
  %s102 = scalar_select %p101, %s100, 31
  %s103 = smul.addr %s102, 4
  %s104 = scalar_lea.vmem %s5, %s103
  %s105 = sadd.s32 0, 0
  %s106 = sld [smem:[#allocation4 + %s105]]
  %s107 = smul.u32 32, %s106
  %p108 = scmp.eq.s32.totalorder 0, 0
  // Predicated region
  $region30: #{fagcn_forward.5} parent=0 // pred_check
    %p109 = pneg %p108
  $region31: #{fagcn_forward.5} parent=0 // pred_check_branch
    %111 = sbr.rel (%p109) target = $region33
  $region32: #{fagcn_forward.5} parent=0 // pred_region
    %112 = vst [vmem:[#allocation2] sm:$0xff] 0.0
    %113 = vst [vmem:[#allocation2 + $0x8] sm:$0xff] 0.0
    %114 = vst [vmem:[#allocation2 + $0x10] sm:$0xff] 0.0
    %115 = vst [vmem:[#allocation2 + $0x18] sm:$0xff] 0.0
    %116 = vst [vmem:[#allocation2 + $0x20] sm:$0xff] 0.0
    %117 = vst [vmem:[#allocation2 + $0x28] sm:$0xff] 0.0
    %118 = vst [vmem:[#allocation2 + $0x30] sm:$0xff] 0.0
    %119 = vst [vmem:[#allocation2 + $0x38] sm:$0xff] 0.0
    %120 = vst [vmem:[#allocation2 + $0x40] sm:$0xff] 0.0
    %121 = vst [vmem:[#allocation2 + $0x48] sm:$0xff] 0.0
    %122 = vst [vmem:[#allocation2 + $0x50] sm:$0xff] 0.0
    %123 = vst [vmem:[#allocation2 + $0x58] sm:$0xff] 0.0
    %124 = vst [vmem:[#allocation2 + $0x60] sm:$0xff] 0.0
    %125 = vst [vmem:[#allocation2 + $0x68] sm:$0xff] 0.0
    %126 = vst [vmem:[#allocation2 + $0x70] sm:$0xff] 0.0
    %127 = vst [vmem:[#allocation2 + $0x78] sm:$0xff] 0.0
    %128 = vst [vmem:[#allocation2 + $0x80] sm:$0xff] 0.0
    %129 = vst [vmem:[#allocation2 + $0x88] sm:$0xff] 0.0
    %130 = vst [vmem:[#allocation2 + $0x90] sm:$0xff] 0.0
    %131 = vst [vmem:[#allocation2 + $0x98] sm:$0xff] 0.0
    %132 = vst [vmem:[#allocation2 + $0xa0] sm:$0xff] 0.0
    %133 = vst [vmem:[#allocation2 + $0xa8] sm:$0xff] 0.0
    %134 = vst [vmem:[#allocation2 + $0xb0] sm:$0xff] 0.0
    %135 = vst [vmem:[#allocation2 + $0xb8] sm:$0xff] 0.0
    %136 = vst [vmem:[#allocation2 + $0xc0] sm:$0xff] 0.0
    %137 = vst [vmem:[#allocation2 + $0xc8] sm:$0xff] 0.0
    %138 = vst [vmem:[#allocation2 + $0xd0] sm:$0xff] 0.0
    %139 = vst [vmem:[#allocation2 + $0xd8] sm:$0xff] 0.0
    %140 = vst [vmem:[#allocation2 + $0xe0] sm:$0xff] 0.0
    %141 = vst [vmem:[#allocation2 + $0xe8] sm:$0xff] 0.0
    %142 = vst [vmem:[#allocation2 + $0xf0] sm:$0xff] 0.0
    %143 = vst [vmem:[#allocation2 + $0xf8] sm:$0xff] 0.0
  $region33: #{fagcn_forward.5} parent=0 // pred_fallthru
    _
  %s144 = sld [smem:[#allocation5]]
  %p145 = scmp.lt.s32.totalorder 0, %s144
  // Predicated region
  $region34: #{fagcn_forward.5} parent=0 // pred_check
    %p146 = pneg %p145
  $region35: #{fagcn_forward.5} parent=0 // pred_check_branch
    %148 = sbr.rel (%p146) target = $region37
  $region36: #{fagcn_forward.5} parent=0 // pred_region
    %v149 = vld [vmem:[%s2] sm:$0xff]
    %v150 = vld [vmem:[%s2 + $0x8] sm:$0xff]
    %v151 = vld [vmem:[%s2 + $0x10] sm:$0xff]
    %v152 = vld [vmem:[%s2 + $0x18] sm:$0xff]
    %v153 = vld [vmem:[%s2 + $0x20] sm:$0xff]
    %v154 = vld [vmem:[%s2 + $0x28] sm:$0xff]
    %v155 = vld [vmem:[%s2 + $0x30] sm:$0xff]
    %v156 = vld [vmem:[%s2 + $0x38] sm:$0xff]
    %v157 = vld [vmem:[%s2 + $0x40] sm:$0xff]
    %v158 = vld [vmem:[%s2 + $0x48] sm:$0xff]
    %v159 = vld [vmem:[%s2 + $0x50] sm:$0xff]
    %v160 = vld [vmem:[%s2 + $0x58] sm:$0xff]
    %v161 = vld [vmem:[%s2 + $0x60] sm:$0xff]
    %v162 = vld [vmem:[%s2 + $0x68] sm:$0xff]
    %v163 = vld [vmem:[%s2 + $0x70] sm:$0xff]
    %v164 = vld [vmem:[%s2 + $0x78] sm:$0xff]
    %v165 = vld [vmem:[%s2 + $0x80] sm:$0xff]
    %v166 = vld [vmem:[%s2 + $0x88] sm:$0xff]
    %v167 = vld [vmem:[%s2 + $0x90] sm:$0xff]
    %v168 = vld [vmem:[%s2 + $0x98] sm:$0xff]
    %v169 = vld [vmem:[%s2 + $0xa0] sm:$0xff]
    %v170 = vld [vmem:[%s2 + $0xa8] sm:$0xff]
    %v171 = vld [vmem:[%s2 + $0xb0] sm:$0xff]
    %v172 = vld [vmem:[%s2 + $0xb8] sm:$0xff]
    %v173 = vld [vmem:[%s2 + $0xc0] sm:$0xff]
    %v174 = vld [vmem:[%s2 + $0xc8] sm:$0xff]
    %v175 = vld [vmem:[%s2 + $0xd0] sm:$0xff]
    %v176 = vld [vmem:[%s2 + $0xd8] sm:$0xff]
    %v177 = vld [vmem:[%s2 + $0xe0] sm:$0xff]
    %v178 = vld [vmem:[%s2 + $0xe8] sm:$0xff]
    %v179 = vld [vmem:[%s2 + $0xf0] sm:$0xff]
    %v180 = vld [vmem:[%s2 + $0xf8] sm:$0xff]
    %v181 = vld [vmem:[%s84] sm:$0x3]
    %183 = vset.pattern.permute.xlu0 0
    %184 = vperm.xlu0 %183, %v149
    %v185 = vpop.permute.xlu0 %184
    %188 = vset.pattern.permute.xlu0 0
    %189 = vperm.xlu0 %188, %v150
    %v190 = vpop.permute.xlu0 %189
    %193 = vset.pattern.permute.xlu0 0
    %194 = vperm.xlu0 %193, %v151
    %v195 = vpop.permute.xlu0 %194
    %198 = vset.pattern.permute.xlu0 0
    %199 = vperm.xlu0 %198, %v152
    %v200 = vpop.permute.xlu0 %199
    %203 = vset.pattern.permute.xlu0 0
    %204 = vperm.xlu0 %203, %v153
    %v205 = vpop.permute.xlu0 %204
    %208 = vset.pattern.permute.xlu0 0
    %209 = vperm.xlu0 %208, %v154
    %v210 = vpop.permute.xlu0 %209
    %213 = vset.pattern.permute.xlu0 0
    %214 = vperm.xlu0 %213, %v155
    %v215 = vpop.permute.xlu0 %214
    %218 = vset.pattern.permute.xlu0 0
    %219 = vperm.xlu0 %218, %v156
    %v220 = vpop.permute.xlu0 %219
    %223 = vset.pattern.permute.xlu0 0
    %224 = vperm.xlu0 %223, %v157
    %v225 = vpop.permute.xlu0 %224
    %228 = vset.pattern.permute.xlu0 0
    %229 = vperm.xlu0 %228, %v158
    %v230 = vpop.permute.xlu0 %229
    %233 = vset.pattern.permute.xlu0 0
    %234 = vperm.xlu0 %233, %v159
    %v235 = vpop.permute.xlu0 %234
    %238 = vset.pattern.permute.xlu0 0
    %239 = vperm.xlu0 %238, %v160
    %v240 = vpop.permute.xlu0 %239
    %243 = vset.pattern.permute.xlu0 0
    %244 = vperm.xlu0 %243, %v161
    %v245 = vpop.permute.xlu0 %244
    %248 = vset.pattern.permute.xlu0 0
    %249 = vperm.xlu0 %248, %v162
    %v250 = vpop.permute.xlu0 %249
    %253 = vset.pattern.permute.xlu0 0
    %254 = vperm.xlu0 %253, %v163
    %v255 = vpop.permute.xlu0 %254
    %258 = vset.pattern.permute.xlu0 0
    %259 = vperm.xlu0 %258, %v164
    %v260 = vpop.permute.xlu0 %259
    %263 = vset.pattern.permute.xlu0 0
    %264 = vperm.xlu0 %263, %v165
    %v265 = vpop.permute.xlu0 %264
    %268 = vset.pattern.permute.xlu0 0
    %269 = vperm.xlu0 %268, %v166
    %v270 = vpop.permute.xlu0 %269
    %273 = vset.pattern.permute.xlu0 0
    %274 = vperm.xlu0 %273, %v167
    %v275 = vpop.permute.xlu0 %274
    %278 = vset.pattern.permute.xlu0 0
    %279 = vperm.xlu0 %278, %v168
    %v280 = vpop.permute.xlu0 %279
    %283 = vset.pattern.permute.xlu0 0
    %284 = vperm.xlu0 %283, %v169
    %v285 = vpop.permute.xlu0 %284
    %288 = vset.pattern.permute.xlu0 0
    %289 = vperm.xlu0 %288, %v170
    %v290 = vpop.permute.xlu0 %289
    %293 = vset.pattern.permute.xlu0 0
    %294 = vperm.xlu0 %293, %v171
    %v295 = vpop.permute.xlu0 %294
    %298 = vset.pattern.permute.xlu0 0
    %299 = vperm.xlu0 %298, %v172
    %v300 = vpop.permute.xlu0 %299
    %303 = vset.pattern.permute.xlu0 0
    %304 = vperm.xlu0 %303, %v173
    %v305 = vpop.permute.xlu0 %304
    %308 = vset.pattern.permute.xlu0 0
    %309 = vperm.xlu0 %308, %v174
    %v310 = vpop.permute.xlu0 %309
    %313 = vset.pattern.permute.xlu0 0
    %314 = vperm.xlu0 %313, %v175
    %v315 = vpop.permute.xlu0 %314
    %318 = vset.pattern.permute.xlu0 0
    %319 = vperm.xlu0 %318, %v176
    %v320 = vpop.permute.xlu0 %319
    %323 = vset.pattern.permute.xlu0 0
    %324 = vperm.xlu0 %323, %v177
    %v325 = vpop.permute.xlu0 %324
    %328 = vset.pattern.permute.xlu0 0
    %329 = vperm.xlu0 %328, %v178
    %v330 = vpop.permute.xlu0 %329
    %333 = vset.pattern.permute.xlu0 0
    %334 = vperm.xlu0 %333, %v179
    %v335 = vpop.permute.xlu0 %334
    %338 = vset.pattern.permute.xlu0 0
    %339 = vperm.xlu0 %338, %v180
    %v340 = vpop.permute.xlu0 %339
    %v343 = vperm.slane %v181, 0
    %v344 = vperm.slane %v181, 1
    %v347 = vadd.f32 %v185, %v343
    %v348 = vadd.f32 %v185, %v344
    %v349 = vadd.f32 %v190, %v343
    %v350 = vadd.f32 %v190, %v344
    %v351 = vadd.f32 %v195, %v343
    %v352 = vadd.f32 %v195, %v344
    %v353 = vadd.f32 %v200, %v343
    %v354 = vadd.f32 %v200, %v344
    %v355 = vadd.f32 %v205, %v343
    %v356 = vadd.f32 %v205, %v344
    %v357 = vadd.f32 %v210, %v343
    %v358 = vadd.f32 %v210, %v344
    %v359 = vadd.f32 %v215, %v343
    %v360 = vadd.f32 %v215, %v344
    %v361 = vadd.f32 %v220, %v343
    %v362 = vadd.f32 %v220, %v344
    %v363 = vadd.f32 %v225, %v343
    %v364 = vadd.f32 %v225, %v344
    %v365 = vadd.f32 %v230, %v343
    %v366 = vadd.f32 %v230, %v344
    %v367 = vadd.f32 %v235, %v343
    %v368 = vadd.f32 %v235, %v344
    %v369 = vadd.f32 %v240, %v343
    %v370 = vadd.f32 %v240, %v344
    %v371 = vadd.f32 %v245, %v343
    %v372 = vadd.f32 %v245, %v344
    %v373 = vadd.f32 %v250, %v343
    %v374 = vadd.f32 %v250, %v344
    %v375 = vadd.f32 %v255, %v343
    %v376 = vadd.f32 %v255, %v344
    %v377 = vadd.f32 %v260, %v343
    %v378 = vadd.f32 %v260, %v344
    %v379 = vadd.f32 %v265, %v343
    %v380 = vadd.f32 %v265, %v344
    %v381 = vadd.f32 %v270, %v343
    %v382 = vadd.f32 %v270, %v344
    %v383 = vadd.f32 %v275, %v343
    %v384 = vadd.f32 %v275, %v344
    %v385 = vadd.f32 %v280, %v343
    %v386 = vadd.f32 %v280, %v344
    %v387 = vadd.f32 %v285, %v343
    %v388 = vadd.f32 %v285, %v344
    %v389 = vadd.f32 %v290, %v343
    %v390 = vadd.f32 %v290, %v344
    %v391 = vadd.f32 %v295, %v343
    %v392 = vadd.f32 %v295, %v344
    %v393 = vadd.f32 %v300, %v343
    %v394 = vadd.f32 %v300, %v344
    %v395 = vadd.f32 %v305, %v343
    %v396 = vadd.f32 %v305, %v344
    %v397 = vadd.f32 %v310, %v343
    %v398 = vadd.f32 %v310, %v344
    %v399 = vadd.f32 %v315, %v343
    %v400 = vadd.f32 %v315, %v344
    %v401 = vadd.f32 %v320, %v343
    %v402 = vadd.f32 %v320, %v344
    %v403 = vadd.f32 %v325, %v343
    %v404 = vadd.f32 %v325, %v344
    %v405 = vadd.f32 %v330, %v343
    %v406 = vadd.f32 %v330, %v344
    %v407 = vadd.f32 %v335, %v343
    %v408 = vadd.f32 %v335, %v344
    %v409 = vadd.f32 %v340, %v343
    %v410 = vadd.f32 %v340, %v344
    %v411 = vtanh.pop %v347
    %v412 = vtanh.pop %v348
    %v413 = vtanh.pop %v349
    %v414 = vtanh.pop %v350
    %v415 = vtanh.pop %v351
    %v416 = vtanh.pop %v352
    %v417 = vtanh.pop %v353
    %v418 = vtanh.pop %v354
    %v419 = vtanh.pop %v355
    %v420 = vtanh.pop %v356
    %v421 = vtanh.pop %v357
    %v422 = vtanh.pop %v358
    %v423 = vtanh.pop %v359
    %v424 = vtanh.pop %v360
    %v425 = vtanh.pop %v361
    %v426 = vtanh.pop %v362
    %v427 = vtanh.pop %v363
    %v428 = vtanh.pop %v364
    %v429 = vtanh.pop %v365
    %v430 = vtanh.pop %v366
    %v431 = vtanh.pop %v367
    %v432 = vtanh.pop %v368
    %v433 = vtanh.pop %v369
    %v434 = vtanh.pop %v370
    %v435 = vtanh.pop %v371
    %v436 = vtanh.pop %v372
    %v437 = vtanh.pop %v373
    %v438 = vtanh.pop %v374
    %v439 = vtanh.pop %v375
    %v440 = vtanh.pop %v376
    %v441 = vtanh.pop %v377
    %v442 = vtanh.pop %v378
    %v443 = vtanh.pop %v379
    %v444 = vtanh.pop %v380
    %v445 = vtanh.pop %v381
    %v446 = vtanh.pop %v382
    %v447 = vtanh.pop %v383
    %v448 = vtanh.pop %v384
    %v449 = vtanh.pop %v385
    %v450 = vtanh.pop %v386
    %v451 = vtanh.pop %v387
    %v452 = vtanh.pop %v388
    %v453 = vtanh.pop %v389
    %v454 = vtanh.pop %v390
    %v455 = vtanh.pop %v391
    %v456 = vtanh.pop %v392
    %v457 = vtanh.pop %v393
    %v458 = vtanh.pop %v394
    %v459 = vtanh.pop %v395
    %v460 = vtanh.pop %v396
    %v461 = vtanh.pop %v397
    %v462 = vtanh.pop %v398
    %v463 = vtanh.pop %v399
    %v464 = vtanh.pop %v400
    %v465 = vtanh.pop %v401
    %v466 = vtanh.pop %v402
    %v467 = vtanh.pop %v403
    %v468 = vtanh.pop %v404
    %v469 = vtanh.pop %v405
    %v470 = vtanh.pop %v406
    %v471 = vtanh.pop %v407
    %v472 = vtanh.pop %v408
    %v473 = vtanh.pop %v409
    %v474 = vtanh.pop %v410
    %v475 = vld [vmem:[%s94] sm:$0xff]
    %v476 = vld [vmem:[%s94 + $0x8] sm:$0xff]
    %v477 = vld [vmem:[%s94 + $0x10] sm:$0xff]
    %v478 = vld [vmem:[%s94 + $0x18] sm:$0xff]
    %v479 = vld [vmem:[%s94 + $0x20] sm:$0xff]
    %v480 = vld [vmem:[%s94 + $0x28] sm:$0xff]
    %v481 = vld [vmem:[%s94 + $0x30] sm:$0xff]
    %v482 = vld [vmem:[%s94 + $0x38] sm:$0xff]
    %v483 = vld [vmem:[%s94 + $0x40] sm:$0xff]
    %v484 = vld [vmem:[%s94 + $0x48] sm:$0xff]
    %v485 = vld [vmem:[%s94 + $0x50] sm:$0xff]
    %v486 = vld [vmem:[%s94 + $0x58] sm:$0xff]
    %v487 = vld [vmem:[%s94 + $0x60] sm:$0xff]
    %v488 = vld [vmem:[%s94 + $0x68] sm:$0xff]
    %v489 = vld [vmem:[%s94 + $0x70] sm:$0xff]
    %v490 = vld [vmem:[%s94 + $0x78] sm:$0xff]
    %v491 = vld [vmem:[%s94 + $0x80] sm:$0xff]
    %v492 = vld [vmem:[%s94 + $0x88] sm:$0xff]
    %v493 = vld [vmem:[%s94 + $0x90] sm:$0xff]
    %v494 = vld [vmem:[%s94 + $0x98] sm:$0xff]
    %v495 = vld [vmem:[%s94 + $0xa0] sm:$0xff]
    %v496 = vld [vmem:[%s94 + $0xa8] sm:$0xff]
    %v497 = vld [vmem:[%s94 + $0xb0] sm:$0xff]
    %v498 = vld [vmem:[%s94 + $0xb8] sm:$0xff]
    %v499 = vld [vmem:[%s94 + $0xc0] sm:$0xff]
    %v500 = vld [vmem:[%s94 + $0xc8] sm:$0xff]
    %v501 = vld [vmem:[%s94 + $0xd0] sm:$0xff]
    %v502 = vld [vmem:[%s94 + $0xd8] sm:$0xff]
    %v503 = vld [vmem:[%s94 + $0xe0] sm:$0xff]
    %v504 = vld [vmem:[%s94 + $0xe8] sm:$0xff]
    %v505 = vld [vmem:[%s94 + $0xf0] sm:$0xff]
    %v506 = vld [vmem:[%s94 + $0xf8] sm:$0xff]
    %v507 = vunpack.c.l.bf16 %v475
    %v508 = vunpack.c.h.bf16 %v475
    %v509 = vunpack.c.l.bf16 %v476
    %v510 = vunpack.c.h.bf16 %v476
    %v511 = vunpack.c.l.bf16 %v477
    %v512 = vunpack.c.h.bf16 %v477
    %v513 = vunpack.c.l.bf16 %v478
    %v514 = vunpack.c.h.bf16 %v478
    %v515 = vunpack.c.l.bf16 %v479
    %v516 = vunpack.c.h.bf16 %v479
    %v517 = vunpack.c.l.bf16 %v480
    %v518 = vunpack.c.h.bf16 %v480
    %v519 = vunpack.c.l.bf16 %v481
    %v520 = vunpack.c.h.bf16 %v481
    %v521 = vunpack.c.l.bf16 %v482
    %v522 = vunpack.c.h.bf16 %v482
    %v523 = vunpack.c.l.bf16 %v483
    %v524 = vunpack.c.h.bf16 %v483
    %v525 = vunpack.c.l.bf16 %v484
    %v526 = vunpack.c.h.bf16 %v484
    %v527 = vunpack.c.l.bf16 %v485
    %v528 = vunpack.c.h.bf16 %v485
    %v529 = vunpack.c.l.bf16 %v486
    %v530 = vunpack.c.h.bf16 %v486
    %v531 = vunpack.c.l.bf16 %v487
    %v532 = vunpack.c.h.bf16 %v487
    %v533 = vunpack.c.l.bf16 %v488
    %v534 = vunpack.c.h.bf16 %v488
    %v535 = vunpack.c.l.bf16 %v489
    %v536 = vunpack.c.h.bf16 %v489
    %v537 = vunpack.c.l.bf16 %v490
    %v538 = vunpack.c.h.bf16 %v490
    %v539 = vunpack.c.l.bf16 %v491
    %v540 = vunpack.c.h.bf16 %v491
    %v541 = vunpack.c.l.bf16 %v492
    %v542 = vunpack.c.h.bf16 %v492
    %v543 = vunpack.c.l.bf16 %v493
    %v544 = vunpack.c.h.bf16 %v493
    %v545 = vunpack.c.l.bf16 %v494
    %v546 = vunpack.c.h.bf16 %v494
    %v547 = vunpack.c.l.bf16 %v495
    %v548 = vunpack.c.h.bf16 %v495
    %v549 = vunpack.c.l.bf16 %v496
    %v550 = vunpack.c.h.bf16 %v496
    %v551 = vunpack.c.l.bf16 %v497
    %v552 = vunpack.c.h.bf16 %v497
    %v553 = vunpack.c.l.bf16 %v498
    %v554 = vunpack.c.h.bf16 %v498
    %v555 = vunpack.c.l.bf16 %v499
    %v556 = vunpack.c.h.bf16 %v499
    %v557 = vunpack.c.l.bf16 %v500
    %v558 = vunpack.c.h.bf16 %v500
    %v559 = vunpack.c.l.bf16 %v501
    %v560 = vunpack.c.h.bf16 %v501
    %v561 = vunpack.c.l.bf16 %v502
    %v562 = vunpack.c.h.bf16 %v502
    %v563 = vunpack.c.l.bf16 %v503
    %v564 = vunpack.c.h.bf16 %v503
    %v565 = vunpack.c.l.bf16 %v504
    %v566 = vunpack.c.h.bf16 %v504
    %v567 = vunpack.c.l.bf16 %v505
    %v568 = vunpack.c.h.bf16 %v505
    %v569 = vunpack.c.l.bf16 %v506
    %v570 = vunpack.c.h.bf16 %v506
    %v571 = vmul.f32 %v411, %v507
    %v572 = vmul.f32 %v412, %v508
    %v573 = vmul.f32 %v413, %v509
    %v574 = vmul.f32 %v414, %v510
    %v575 = vmul.f32 %v415, %v511
    %v576 = vmul.f32 %v416, %v512
    %v577 = vmul.f32 %v417, %v513
    %v578 = vmul.f32 %v418, %v514
    %v579 = vmul.f32 %v419, %v515
    %v580 = vmul.f32 %v420, %v516
    %v581 = vmul.f32 %v421, %v517
    %v582 = vmul.f32 %v422, %v518
    %v583 = vmul.f32 %v423, %v519
    %v584 = vmul.f32 %v424, %v520
    %v585 = vmul.f32 %v425, %v521
    %v586 = vmul.f32 %v426, %v522
    %v587 = vmul.f32 %v427, %v523
    %v588 = vmul.f32 %v428, %v524
    %v589 = vmul.f32 %v429, %v525
    %v590 = vmul.f32 %v430, %v526
    %v591 = vmul.f32 %v431, %v527
    %v592 = vmul.f32 %v432, %v528
    %v593 = vmul.f32 %v433, %v529
    %v594 = vmul.f32 %v434, %v530
    %v595 = vmul.f32 %v435, %v531
    %v596 = vmul.f32 %v436, %v532
    %v597 = vmul.f32 %v437, %v533
    %v598 = vmul.f32 %v438, %v534
    %v599 = vmul.f32 %v439, %v535
    %v600 = vmul.f32 %v440, %v536
    %v601 = vmul.f32 %v441, %v537
    %v602 = vmul.f32 %v442, %v538
    %v603 = vmul.f32 %v443, %v539
    %v604 = vmul.f32 %v444, %v540
    %v605 = vmul.f32 %v445, %v541
    %v606 = vmul.f32 %v446, %v542
    %v607 = vmul.f32 %v447, %v543
    %v608 = vmul.f32 %v448, %v544
    %v609 = vmul.f32 %v449, %v545
    %v610 = vmul.f32 %v450, %v546
    %v611 = vmul.f32 %v451, %v547
    %v612 = vmul.f32 %v452, %v548
    %v613 = vmul.f32 %v453, %v549
    %v614 = vmul.f32 %v454, %v550
    %v615 = vmul.f32 %v455, %v551
    %v616 = vmul.f32 %v456, %v552
    %v617 = vmul.f32 %v457, %v553
    %v618 = vmul.f32 %v458, %v554
    %v619 = vmul.f32 %v459, %v555
    %v620 = vmul.f32 %v460, %v556
    %v621 = vmul.f32 %v461, %v557
    %v622 = vmul.f32 %v462, %v558
    %v623 = vmul.f32 %v463, %v559
    %v624 = vmul.f32 %v464, %v560
    %v625 = vmul.f32 %v465, %v561
    %v626 = vmul.f32 %v466, %v562
    %v627 = vmul.f32 %v467, %v563
    %v628 = vmul.f32 %v468, %v564
    %v629 = vmul.f32 %v469, %v565
    %v630 = vmul.f32 %v470, %v566
    %v631 = vmul.f32 %v471, %v567
    %v632 = vmul.f32 %v472, %v568
    %v633 = vmul.f32 %v473, %v569
    %v634 = vmul.f32 %v474, %v570
    %v635 = vpack.c.bf16 %v573, %v571
    %v636 = vpack.c.bf16 %v574, %v572
    %v637 = vpack.c.bf16 %v577, %v575
    %v638 = vpack.c.bf16 %v578, %v576
    %v639 = vpack.c.bf16 %v581, %v579
    %v640 = vpack.c.bf16 %v582, %v580
    %v641 = vpack.c.bf16 %v585, %v583
    %v642 = vpack.c.bf16 %v586, %v584
    %v643 = vpack.c.bf16 %v589, %v587
    %v644 = vpack.c.bf16 %v590, %v588
    %v645 = vpack.c.bf16 %v593, %v591
    %v646 = vpack.c.bf16 %v594, %v592
    %v647 = vpack.c.bf16 %v597, %v595
    %v648 = vpack.c.bf16 %v598, %v596
    %v649 = vpack.c.bf16 %v601, %v599
    %v650 = vpack.c.bf16 %v602, %v600
    %v651 = vpack.c.bf16 %v605, %v603
    %v652 = vpack.c.bf16 %v606, %v604
    %v653 = vpack.c.bf16 %v609, %v607
    %v654 = vpack.c.bf16 %v610, %v608
    %v655 = vpack.c.bf16 %v613, %v611
    %v656 = vpack.c.bf16 %v614, %v612
    %v657 = vpack.c.bf16 %v617, %v615
    %v658 = vpack.c.bf16 %v618, %v616
    %v659 = vpack.c.bf16 %v621, %v619
    %v660 = vpack.c.bf16 %v622, %v620
    %v661 = vpack.c.bf16 %v625, %v623
    %v662 = vpack.c.bf16 %v626, %v624
    %v663 = vpack.c.bf16 %v629, %v627
    %v664 = vpack.c.bf16 %v630, %v628
    %v665 = vpack.c.bf16 %v633, %v631
    %v666 = vpack.c.bf16 %v634, %v632
    %v667 = vld [vmem:[#allocation2] sm:$0xff]
    %v668 = vld [vmem:[#allocation2 + $0x8] sm:$0xff]
    %v669 = vld [vmem:[#allocation2 + $0x10] sm:$0xff]
    %v670 = vld [vmem:[#allocation2 + $0x18] sm:$0xff]
    %v671 = vld [vmem:[#allocation2 + $0x20] sm:$0xff]
    %v672 = vld [vmem:[#allocation2 + $0x28] sm:$0xff]
    %v673 = vld [vmem:[#allocation2 + $0x30] sm:$0xff]
    %v674 = vld [vmem:[#allocation2 + $0x38] sm:$0xff]
    %v675 = vld [vmem:[#allocation2 + $0x40] sm:$0xff]
    %v676 = vld [vmem:[#allocation2 + $0x48] sm:$0xff]
    %v677 = vld [vmem:[#allocation2 + $0x50] sm:$0xff]
    %v678 = vld [vmem:[#allocation2 + $0x58] sm:$0xff]
    %v679 = vld [vmem:[#allocation2 + $0x60] sm:$0xff]
    %v680 = vld [vmem:[#allocation2 + $0x68] sm:$0xff]
    %v681 = vld [vmem:[#allocation2 + $0x70] sm:$0xff]
    %v682 = vld [vmem:[#allocation2 + $0x78] sm:$0xff]
    %v683 = vld [vmem:[#allocation2 + $0x80] sm:$0xff]
    %v684 = vld [vmem:[#allocation2 + $0x88] sm:$0xff]
    %v685 = vld [vmem:[#allocation2 + $0x90] sm:$0xff]
    %v686 = vld [vmem:[#allocation2 + $0x98] sm:$0xff]
    %v687 = vld [vmem:[#allocation2 + $0xa0] sm:$0xff]
    %v688 = vld [vmem:[#allocation2 + $0xa8] sm:$0xff]
    %v689 = vld [vmem:[#allocation2 + $0xb0] sm:$0xff]
    %v690 = vld [vmem:[#allocation2 + $0xb8] sm:$0xff]
    %v691 = vld [vmem:[#allocation2 + $0xc0] sm:$0xff]
    %v692 = vld [vmem:[#allocation2 + $0xc8] sm:$0xff]
    %v693 = vld [vmem:[#allocation2 + $0xd0] sm:$0xff]
    %v694 = vld [vmem:[#allocation2 + $0xd8] sm:$0xff]
    %v695 = vld [vmem:[#allocation2 + $0xe0] sm:$0xff]
    %v696 = vld [vmem:[#allocation2 + $0xe8] sm:$0xff]
    %v697 = vld [vmem:[#allocation2 + $0xf0] sm:$0xff]
    %v698 = vld [vmem:[#allocation2 + $0xf8] sm:$0xff]
    %v699 = vld [vmem:[%s104] sm:$0xf]
    %v700 = vld [vmem:[%s104 + $0x4] sm:$0xf]
    %v701 = vld [vmem:[%s104 + $0x8] sm:$0xf]
    %v702 = vld [vmem:[%s104 + $0xc] sm:$0xf]
    %v703 = vld [vmem:[%s104 + $0x10] sm:$0xf]
    %v704 = vld [vmem:[%s104 + $0x14] sm:$0xf]
    %v705 = vld [vmem:[%s104 + $0x18] sm:$0xf]
    %v706 = vld [vmem:[%s104 + $0x1c] sm:$0xf]
    %v707 = vld [vmem:[%s104 + $0x20] sm:$0xf]
    %v708 = vld [vmem:[%s104 + $0x24] sm:$0xf]
    %v709 = vld [vmem:[%s104 + $0x28] sm:$0xf]
    %v710 = vld [vmem:[%s104 + $0x2c] sm:$0xf]
    %v711 = vld [vmem:[%s104 + $0x30] sm:$0xf]
    %v712 = vld [vmem:[%s104 + $0x34] sm:$0xf]
    %v713 = vld [vmem:[%s104 + $0x38] sm:$0xf]
    %v714 = vld [vmem:[%s104 + $0x3c] sm:$0xf]
    %v715 = vld [vmem:[%s104 + $0x40] sm:$0xf]
    %v716 = vld [vmem:[%s104 + $0x44] sm:$0xf]
    %v717 = vld [vmem:[%s104 + $0x48] sm:$0xf]
    %v718 = vld [vmem:[%s104 + $0x4c] sm:$0xf]
    %v719 = vld [vmem:[%s104 + $0x50] sm:$0xf]
    %v720 = vld [vmem:[%s104 + $0x54] sm:$0xf]
    %v721 = vld [vmem:[%s104 + $0x58] sm:$0xf]
    %v722 = vld [vmem:[%s104 + $0x5c] sm:$0xf]
    %v723 = vld [vmem:[%s104 + $0x60] sm:$0xf]
    %v724 = vld [vmem:[%s104 + $0x64] sm:$0xf]
    %v725 = vld [vmem:[%s104 + $0x68] sm:$0xf]
    %v726 = vld [vmem:[%s104 + $0x6c] sm:$0xf]
    %v727 = vld [vmem:[%s104 + $0x70] sm:$0xf]
    %v728 = vld [vmem:[%s104 + $0x74] sm:$0xf]
    %v729 = vld [vmem:[%s104 + $0x78] sm:$0xf]
    %v730 = vld [vmem:[%s104 + $0x7c] sm:$0xf]
    %v763 = vunpack.c.l.b16 %v699
    %v764 = vunpack.c.l.b16 %v700
    %v765 = vunpack.c.l.b16 %v701
    %v766 = vunpack.c.l.b16 %v702
    %v767 = vunpack.c.l.b16 %v703
    %v768 = vunpack.c.l.b16 %v704
    %v769 = vunpack.c.l.b16 %v705
    %v770 = vunpack.c.l.b16 %v706
    %v771 = vunpack.c.l.b16 %v707
    %v772 = vunpack.c.l.b16 %v708
    %v773 = vunpack.c.l.b16 %v709
    %v774 = vunpack.c.l.b16 %v710
    %v775 = vunpack.c.l.b16 %v711
    %v776 = vunpack.c.l.b16 %v712
    %v777 = vunpack.c.l.b16 %v713
    %v778 = vunpack.c.l.b16 %v714
    %v779 = vunpack.c.l.b16 %v715
    %v780 = vunpack.c.l.b16 %v716
    %v781 = vunpack.c.l.b16 %v717
    %v782 = vunpack.c.l.b16 %v718
    %v783 = vunpack.c.l.b16 %v719
    %v784 = vunpack.c.l.b16 %v720
    %v785 = vunpack.c.l.b16 %v721
    %v786 = vunpack.c.l.b16 %v722
    %v787 = vunpack.c.l.b16 %v723
    %v788 = vunpack.c.l.b16 %v724
    %v789 = vunpack.c.l.b16 %v725
    %v790 = vunpack.c.l.b16 %v726
    %v791 = vunpack.c.l.b16 %v727
    %v792 = vunpack.c.l.b16 %v728
    %v793 = vunpack.c.l.b16 %v729
    %v794 = vunpack.c.l.b16 %v730
    %v795 = vpack.c.b16 %v764, %v763
    %v796 = vpack.c.b16 %v766, %v765
    %v797 = vpack.c.b16 %v768, %v767
    %v798 = vpack.c.b16 %v770, %v769
    %v799 = vpack.c.b16 %v772, %v771
    %v800 = vpack.c.b16 %v774, %v773
    %v801 = vpack.c.b16 %v776, %v775
    %v802 = vpack.c.b16 %v778, %v777
    %v803 = vpack.c.b16 %v780, %v779
    %v804 = vpack.c.b16 %v782, %v781
    %v805 = vpack.c.b16 %v784, %v783
    %v806 = vpack.c.b16 %v786, %v785
    %v807 = vpack.c.b16 %v788, %v787
    %v808 = vpack.c.b16 %v790, %v789
    %v809 = vpack.c.b16 %v792, %v791
    %v810 = vpack.c.b16 %v794, %v793
    %827 = vmatpush.bf16.msra.mxu0 %v802
    %828 = vmatpush.bf16.msra.mxu0 %v801
    %829 = vmatpush.bf16.msra.mxu0 %v800
    %830 = vmatpush.bf16.msra.mxu0 %v799
    %831 = vmatpush.bf16.msra.mxu0 %v798
    %832 = vmatpush.bf16.msra.mxu0 %v797
    %833 = vmatpush.bf16.msra.mxu0 %v796
    %834 = vmatpush.bf16.msra.mxu0 %v795
    %835 = vmatmul.bf16.gmra.mxu0 %v635
    %v836 = vpop.f32.mrf.mxu0
    %v837 = vadd.f32 0.0, %v836
    %v838 = vpop.f32.mrf.mxu0
    %v839 = vadd.f32 0.0, %v838
    %840 = vmatmul.bf16.gmra.mxu0 %v637
    %v841 = vpop.f32.mrf.mxu0
    %v842 = vadd.f32 0.0, %v841
    %v843 = vpop.f32.mrf.mxu0
    %v844 = vadd.f32 0.0, %v843
    %845 = vmatmul.bf16.gmra.mxu0 %v639
    %v846 = vpop.f32.mrf.mxu0
    %v847 = vadd.f32 0.0, %v846
    %v848 = vpop.f32.mrf.mxu0
    %v849 = vadd.f32 0.0, %v848
    %850 = vmatmul.bf16.gmra.mxu0 %v641
    %v851 = vpop.f32.mrf.mxu0
    %v852 = vadd.f32 0.0, %v851
    %v853 = vpop.f32.mrf.mxu0
    %v854 = vadd.f32 0.0, %v853
    %855 = vmatmul.bf16.gmra.mxu0 %v643
    %v856 = vpop.f32.mrf.mxu0
    %v857 = vadd.f32 0.0, %v856
    %v858 = vpop.f32.mrf.mxu0
    %v859 = vadd.f32 0.0, %v858
    %860 = vmatmul.bf16.gmra.mxu0 %v645
    %v861 = vpop.f32.mrf.mxu0
    %v862 = vadd.f32 0.0, %v861
    %v863 = vpop.f32.mrf.mxu0
    %v864 = vadd.f32 0.0, %v863
    %865 = vmatmul.bf16.gmra.mxu0 %v647
    %v866 = vpop.f32.mrf.mxu0
    %v867 = vadd.f32 0.0, %v866
    %v868 = vpop.f32.mrf.mxu0
    %v869 = vadd.f32 0.0, %v868
    %870 = vmatmul.bf16.gmra.mxu0 %v649
    %v871 = vpop.f32.mrf.mxu0
    %v872 = vadd.f32 0.0, %v871
    %v873 = vpop.f32.mrf.mxu0
    %v874 = vadd.f32 0.0, %v873
    %875 = vmatmul.bf16.gmra.mxu0 %v651
    %v876 = vpop.f32.mrf.mxu0
    %v877 = vadd.f32 0.0, %v876
    %v878 = vpop.f32.mrf.mxu0
    %v879 = vadd.f32 0.0, %v878
    %880 = vmatmul.bf16.gmra.mxu0 %v653
    %v881 = vpop.f32.mrf.mxu0
    %v882 = vadd.f32 0.0, %v881
    %v883 = vpop.f32.mrf.mxu0
    %v884 = vadd.f32 0.0, %v883
    %885 = vmatmul.bf16.gmra.mxu0 %v655
    %v886 = vpop.f32.mrf.mxu0
    %v887 = vadd.f32 0.0, %v886
    %v888 = vpop.f32.mrf.mxu0
    %v889 = vadd.f32 0.0, %v888
    %890 = vmatmul.bf16.gmra.mxu0 %v657
    %v891 = vpop.f32.mrf.mxu0
    %v892 = vadd.f32 0.0, %v891
    %v893 = vpop.f32.mrf.mxu0
    %v894 = vadd.f32 0.0, %v893
    %895 = vmatmul.bf16.gmra.mxu0 %v659
    %v896 = vpop.f32.mrf.mxu0
    %v897 = vadd.f32 0.0, %v896
    %v898 = vpop.f32.mrf.mxu0
    %v899 = vadd.f32 0.0, %v898
    %900 = vmatmul.bf16.gmra.mxu0 %v661
    %v901 = vpop.f32.mrf.mxu0
    %v902 = vadd.f32 0.0, %v901
    %v903 = vpop.f32.mrf.mxu0
    %v904 = vadd.f32 0.0, %v903
    %905 = vmatmul.bf16.gmra.mxu0 %v663
    %v906 = vpop.f32.mrf.mxu0
    %v907 = vadd.f32 0.0, %v906
    %v908 = vpop.f32.mrf.mxu0
    %v909 = vadd.f32 0.0, %v908
    %910 = vmatmul.bf16.gmra.mxu0 %v665
    %v911 = vpop.f32.mrf.mxu0
    %v912 = vadd.f32 0.0, %v911
    %v913 = vpop.f32.mrf.mxu0
    %v914 = vadd.f32 0.0, %v913
    %915 = vdwg.mxu0
    %916 = vmatpush.bf16.msra.mxu0 %v810
    %917 = vmatpush.bf16.msra.mxu0 %v809
    %918 = vmatpush.bf16.msra.mxu0 %v808
    %919 = vmatpush.bf16.msra.mxu0 %v807
    %920 = vmatpush.bf16.msra.mxu0 %v806
    %921 = vmatpush.bf16.msra.mxu0 %v805
    %922 = vmatpush.bf16.msra.mxu0 %v804
    %923 = vmatpush.bf16.msra.mxu0 %v803
    %924 = vmatmul.bf16.gmra.mxu0 %v636
    %v925 = vpop.f32.mrf.mxu0
    %v926 = vadd.f32 %v837, %v925
    %v927 = vpop.f32.mrf.mxu0
    %v928 = vadd.f32 %v839, %v927
    %929 = vmatmul.bf16.gmra.mxu0 %v638
    %v930 = vpop.f32.mrf.mxu0
    %v931 = vadd.f32 %v842, %v930
    %v932 = vpop.f32.mrf.mxu0
    %v933 = vadd.f32 %v844, %v932
    %934 = vmatmul.bf16.gmra.mxu0 %v640
    %v935 = vpop.f32.mrf.mxu0
    %v936 = vadd.f32 %v847, %v935
    %v937 = vpop.f32.mrf.mxu0
    %v938 = vadd.f32 %v849, %v937
    %939 = vmatmul.bf16.gmra.mxu0 %v642
    %v940 = vpop.f32.mrf.mxu0
    %v941 = vadd.f32 %v852, %v940
    %v942 = vpop.f32.mrf.mxu0
    %v943 = vadd.f32 %v854, %v942
    %944 = vmatmul.bf16.gmra.mxu0 %v644
    %v945 = vpop.f32.mrf.mxu0
    %v946 = vadd.f32 %v857, %v945
    %v947 = vpop.f32.mrf.mxu0
    %v948 = vadd.f32 %v859, %v947
    %949 = vmatmul.bf16.gmra.mxu0 %v646
    %v950 = vpop.f32.mrf.mxu0
    %v951 = vadd.f32 %v862, %v950
    %v952 = vpop.f32.mrf.mxu0
    %v953 = vadd.f32 %v864, %v952
    %954 = vmatmul.bf16.gmra.mxu0 %v648
    %v955 = vpop.f32.mrf.mxu0
    %v956 = vadd.f32 %v867, %v955
    %v957 = vpop.f32.mrf.mxu0
    %v958 = vadd.f32 %v869, %v957
    %959 = vmatmul.bf16.gmra.mxu0 %v650
    %v960 = vpop.f32.mrf.mxu0
    %v961 = vadd.f32 %v872, %v960
    %v962 = vpop.f32.mrf.mxu0
    %v963 = vadd.f32 %v874, %v962
    %964 = vmatmul.bf16.gmra.mxu0 %v652
    %v965 = vpop.f32.mrf.mxu0
    %v966 = vadd.f32 %v877, %v965
    %v967 = vpop.f32.mrf.mxu0
    %v968 = vadd.f32 %v879, %v967
    %969 = vmatmul.bf16.gmra.mxu0 %v654
    %v970 = vpop.f32.mrf.mxu0
    %v971 = vadd.f32 %v882, %v970
    %v972 = vpop.f32.mrf.mxu0
    %v973 = vadd.f32 %v884, %v972
    %974 = vmatmul.bf16.gmra.mxu0 %v656
    %v975 = vpop.f32.mrf.mxu0
    %v976 = vadd.f32 %v887, %v975
    %v977 = vpop.f32.mrf.mxu0
    %v978 = vadd.f32 %v889, %v977
    %979 = vmatmul.bf16.gmra.mxu0 %v658
    %v980 = vpop.f32.mrf.mxu0
    %v981 = vadd.f32 %v892, %v980
    %v982 = vpop.f32.mrf.mxu0
    %v983 = vadd.f32 %v894, %v982
    %984 = vmatmul.bf16.gmra.mxu0 %v660
    %v985 = vpop.f32.mrf.mxu0
    %v986 = vadd.f32 %v897, %v985
    %v987 = vpop.f32.mrf.mxu0
    %v988 = vadd.f32 %v899, %v987
    %989 = vmatmul.bf16.gmra.mxu0 %v662
    %v990 = vpop.f32.mrf.mxu0
    %v991 = vadd.f32 %v902, %v990
    %v992 = vpop.f32.mrf.mxu0
    %v993 = vadd.f32 %v904, %v992
    %994 = vmatmul.bf16.gmra.mxu0 %v664
    %v995 = vpop.f32.mrf.mxu0
    %v996 = vadd.f32 %v907, %v995
    %v997 = vpop.f32.mrf.mxu0
    %v998 = vadd.f32 %v909, %v997
    %999 = vmatmul.bf16.gmra.mxu0 %v666
    %v1000 = vpop.f32.mrf.mxu0
    %v1001 = vadd.f32 %v912, %v1000
    %v1002 = vpop.f32.mrf.mxu0
    %v1003 = vadd.f32 %v914, %v1002
    %1004 = vdwg.mxu0
    %v1005 = vadd.f32 %v667, %v926
    %v1006 = vadd.f32 %v668, %v928
    %v1007 = vadd.f32 %v669, %v931
    %v1008 = vadd.f32 %v670, %v933
    %v1009 = vadd.f32 %v671, %v936
    %v1010 = vadd.f32 %v672, %v938
    %v1011 = vadd.f32 %v673, %v941
    %v1012 = vadd.f32 %v674, %v943
    %v1013 = vadd.f32 %v675, %v946
    %v1014 = vadd.f32 %v676, %v948
    %v1015 = vadd.f32 %v677, %v951
    %v1016 = vadd.f32 %v678, %v953
    %v1017 = vadd.f32 %v679, %v956
    %v1018 = vadd.f32 %v680, %v958
    %v1019 = vadd.f32 %v681, %v961
    %v1020 = vadd.f32 %v682, %v963
    %v1021 = vadd.f32 %v683, %v966
    %v1022 = vadd.f32 %v684, %v968
    %v1023 = vadd.f32 %v685, %v971
    %v1024 = vadd.f32 %v686, %v973
    %v1025 = vadd.f32 %v687, %v976
    %v1026 = vadd.f32 %v688, %v978
    %v1027 = vadd.f32 %v689, %v981
    %v1028 = vadd.f32 %v690, %v983
    %v1029 = vadd.f32 %v691, %v986
    %v1030 = vadd.f32 %v692, %v988
    %v1031 = vadd.f32 %v693, %v991
    %v1032 = vadd.f32 %v694, %v993
    %v1033 = vadd.f32 %v695, %v996
    %v1034 = vadd.f32 %v696, %v998
    %v1035 = vadd.f32 %v697, %v1001
    %v1036 = vadd.f32 %v698, %v1003
    %1037 = vst [vmem:[#allocation2] sm:$0xff] %v1005
    %1038 = vst [vmem:[#allocation2 + $0x8] sm:$0xff] %v1006
    %1039 = vst [vmem:[#allocation2 + $0x10] sm:$0xff] %v1007
    %1040 = vst [vmem:[#allocation2 + $0x18] sm:$0xff] %v1008
    %1041 = vst [vmem:[#allocation2 + $0x20] sm:$0xff] %v1009
    %1042 = vst [vmem:[#allocation2 + $0x28] sm:$0xff] %v1010
    %1043 = vst [vmem:[#allocation2 + $0x30] sm:$0xff] %v1011
    %1044 = vst [vmem:[#allocation2 + $0x38] sm:$0xff] %v1012
    %1045 = vst [vmem:[#allocation2 + $0x40] sm:$0xff] %v1013
    %1046 = vst [vmem:[#allocation2 + $0x48] sm:$0xff] %v1014
    %1047 = vst [vmem:[#allocation2 + $0x50] sm:$0xff] %v1015
    %1048 = vst [vmem:[#allocation2 + $0x58] sm:$0xff] %v1016
    %1049 = vst [vmem:[#allocation2 + $0x60] sm:$0xff] %v1017
    %1050 = vst [vmem:[#allocation2 + $0x68] sm:$0xff] %v1018
    %1051 = vst [vmem:[#allocation2 + $0x70] sm:$0xff] %v1019
    %1052 = vst [vmem:[#allocation2 + $0x78] sm:$0xff] %v1020
    %1053 = vst [vmem:[#allocation2 + $0x80] sm:$0xff] %v1021
    %1054 = vst [vmem:[#allocation2 + $0x88] sm:$0xff] %v1022
    %1055 = vst [vmem:[#allocation2 + $0x90] sm:$0xff] %v1023
    %1056 = vst [vmem:[#allocation2 + $0x98] sm:$0xff] %v1024
    %1057 = vst [vmem:[#allocation2 + $0xa0] sm:$0xff] %v1025
    %1058 = vst [vmem:[#allocation2 + $0xa8] sm:$0xff] %v1026
    %1059 = vst [vmem:[#allocation2 + $0xb0] sm:$0xff] %v1027
    %1060 = vst [vmem:[#allocation2 + $0xb8] sm:$0xff] %v1028
    %1061 = vst [vmem:[#allocation2 + $0xc0] sm:$0xff] %v1029
    %1062 = vst [vmem:[#allocation2 + $0xc8] sm:$0xff] %v1030
    %1063 = vst [vmem:[#allocation2 + $0xd0] sm:$0xff] %v1031
    %1064 = vst [vmem:[#allocation2 + $0xd8] sm:$0xff] %v1032
    %1065 = vst [vmem:[#allocation2 + $0xe0] sm:$0xff] %v1033
    %1066 = vst [vmem:[#allocation2 + $0xe8] sm:$0xff] %v1034
    %1067 = vst [vmem:[#allocation2 + $0xf0] sm:$0xff] %v1035
    %1068 = vst [vmem:[#allocation2 + $0xf8] sm:$0xff] %v1036
  $region37: #{fagcn_forward.5} parent=0 // pred_fallthru
    _
  // Predicated region
  $region38: #{fagcn_forward.5} parent=0 // pred_check
    %p1069 = pneg %p108
  $region39: #{fagcn_forward.5} parent=0 // pred_check_branch
    %1071 = sbr.rel (%p1069) target = $region41
  $region40: #{fagcn_forward.5} parent=0 // pred_region
    %v1072 = vld [vmem:[#allocation2] sm:$0xff]
    %v1073 = vld [vmem:[#allocation2 + $0x8] sm:$0xff]
    %v1074 = vld [vmem:[#allocation2 + $0x10] sm:$0xff]
    %v1075 = vld [vmem:[#allocation2 + $0x18] sm:$0xff]
    %v1076 = vld [vmem:[#allocation2 + $0x20] sm:$0xff]
    %v1077 = vld [vmem:[#allocation2 + $0x28] sm:$0xff]
    %v1078 = vld [vmem:[#allocation2 + $0x30] sm:$0xff]
    %v1079 = vld [vmem:[#allocation2 + $0x38] sm:$0xff]
    %v1080 = vld [vmem:[#allocation2 + $0x40] sm:$0xff]
    %v1081 = vld [vmem:[#allocation2 + $0x48] sm:$0xff]
    %v1082 = vld [vmem:[#allocation2 + $0x50] sm:$0xff]
    %v1083 = vld [vmem:[#allocation2 + $0x58] sm:$0xff]
    %v1084 = vld [vmem:[#allocation2 + $0x60] sm:$0xff]
    %v1085 = vld [vmem:[#allocation2 + $0x68] sm:$0xff]
    %v1086 = vld [vmem:[#allocation2 + $0x70] sm:$0xff]
    %v1087 = vld [vmem:[#allocation2 + $0x78] sm:$0xff]
    %v1088 = vld [vmem:[#allocation2 + $0x80] sm:$0xff]
    %v1089 = vld [vmem:[#allocation2 + $0x88] sm:$0xff]
    %v1090 = vld [vmem:[#allocation2 + $0x90] sm:$0xff]
    %v1091 = vld [vmem:[#allocation2 + $0x98] sm:$0xff]
    %v1092 = vld [vmem:[#allocation2 + $0xa0] sm:$0xff]
    %v1093 = vld [vmem:[#allocation2 + $0xa8] sm:$0xff]
    %v1094 = vld [vmem:[#allocation2 + $0xb0] sm:$0xff]
    %v1095 = vld [vmem:[#allocation2 + $0xb8] sm:$0xff]
    %v1096 = vld [vmem:[#allocation2 + $0xc0] sm:$0xff]
    %v1097 = vld [vmem:[#allocation2 + $0xc8] sm:$0xff]
    %v1098 = vld [vmem:[#allocation2 + $0xd0] sm:$0xff]
    %v1099 = vld [vmem:[#allocation2 + $0xd8] sm:$0xff]
    %v1100 = vld [vmem:[#allocation2 + $0xe0] sm:$0xff]
    %v1101 = vld [vmem:[#allocation2 + $0xe8] sm:$0xff]
    %v1102 = vld [vmem:[#allocation2 + $0xf0] sm:$0xff]
    %v1103 = vld [vmem:[#allocation2 + $0xf8] sm:$0xff]
    %v1104 = vld [vmem:[%s6] sm:$0xff]
    %v1105 = vld [vmem:[%s6 + $0x8] sm:$0xff]
    %v1106 = vld [vmem:[%s6 + $0x10] sm:$0xff]
    %v1107 = vld [vmem:[%s6 + $0x18] sm:$0xff]
    %v1108 = vld [vmem:[%s6 + $0x20] sm:$0xff]
    %v1109 = vld [vmem:[%s6 + $0x28] sm:$0xff]
    %v1110 = vld [vmem:[%s6 + $0x30] sm:$0xff]
    %v1111 = vld [vmem:[%s6 + $0x38] sm:$0xff]
    %v1112 = vld [vmem:[%s6 + $0x40] sm:$0xff]
    %v1113 = vld [vmem:[%s6 + $0x48] sm:$0xff]
    %v1114 = vld [vmem:[%s6 + $0x50] sm:$0xff]
    %v1115 = vld [vmem:[%s6 + $0x58] sm:$0xff]
    %v1116 = vld [vmem:[%s6 + $0x60] sm:$0xff]
    %v1117 = vld [vmem:[%s6 + $0x68] sm:$0xff]
    %v1118 = vld [vmem:[%s6 + $0x70] sm:$0xff]
    %v1119 = vld [vmem:[%s6 + $0x78] sm:$0xff]
    %v1120 = vld [vmem:[%s6 + $0x80] sm:$0xff]
    %v1121 = vld [vmem:[%s6 + $0x88] sm:$0xff]
    %v1122 = vld [vmem:[%s6 + $0x90] sm:$0xff]
    %v1123 = vld [vmem:[%s6 + $0x98] sm:$0xff]
    %v1124 = vld [vmem:[%s6 + $0xa0] sm:$0xff]
    %v1125 = vld [vmem:[%s6 + $0xa8] sm:$0xff]
    %v1126 = vld [vmem:[%s6 + $0xb0] sm:$0xff]
    %v1127 = vld [vmem:[%s6 + $0xb8] sm:$0xff]
    %v1128 = vld [vmem:[%s6 + $0xc0] sm:$0xff]
    %v1129 = vld [vmem:[%s6 + $0xc8] sm:$0xff]
    %v1130 = vld [vmem:[%s6 + $0xd0] sm:$0xff]
    %v1131 = vld [vmem:[%s6 + $0xd8] sm:$0xff]
    %v1132 = vld [vmem:[%s6 + $0xe0] sm:$0xff]
    %v1133 = vld [vmem:[%s6 + $0xe8] sm:$0xff]
    %v1134 = vld [vmem:[%s6 + $0xf0] sm:$0xff]
    %v1135 = vld [vmem:[%s6 + $0xf8] sm:$0xff]
    %v1136 = vmul.f32 %v1104, 0.1
    %v1137 = vmul.f32 %v1105, 0.1
    %v1138 = vmul.f32 %v1106, 0.1
    %v1139 = vmul.f32 %v1107, 0.1
    %v1140 = vmul.f32 %v1108, 0.1
    %v1141 = vmul.f32 %v1109, 0.1
    %v1142 = vmul.f32 %v1110, 0.1
    %v1143 = vmul.f32 %v1111, 0.1
    %v1144 = vmul.f32 %v1112, 0.1
    %v1145 = vmul.f32 %v1113, 0.1
    %v1146 = vmul.f32 %v1114, 0.1
    %v1147 = vmul.f32 %v1115, 0.1
    %v1148 = vmul.f32 %v1116, 0.1
    %v1149 = vmul.f32 %v1117, 0.1
    %v1150 = vmul.f32 %v1118, 0.1
    %v1151 = vmul.f32 %v1119, 0.1
    %v1152 = vmul.f32 %v1120, 0.1
    %v1153 = vmul.f32 %v1121, 0.1
    %v1154 = vmul.f32 %v1122, 0.1
    %v1155 = vmul.f32 %v1123, 0.1
    %v1156 = vmul.f32 %v1124, 0.1
    %v1157 = vmul.f32 %v1125, 0.1
    %v1158 = vmul.f32 %v1126, 0.1
    %v1159 = vmul.f32 %v1127, 0.1
    %v1160 = vmul.f32 %v1128, 0.1
    %v1161 = vmul.f32 %v1129, 0.1
    %v1162 = vmul.f32 %v1130, 0.1
    %v1163 = vmul.f32 %v1131, 0.1
    %v1164 = vmul.f32 %v1132, 0.1
    %v1165 = vmul.f32 %v1133, 0.1
    %v1166 = vmul.f32 %v1134, 0.1
    %v1167 = vmul.f32 %v1135, 0.1
    %v1168 = vadd.f32 %v1072, %v1136
    %v1169 = vadd.f32 %v1073, %v1137
    %v1170 = vadd.f32 %v1074, %v1138
    %v1171 = vadd.f32 %v1075, %v1139
    %v1172 = vadd.f32 %v1076, %v1140
    %v1173 = vadd.f32 %v1077, %v1141
    %v1174 = vadd.f32 %v1078, %v1142
    %v1175 = vadd.f32 %v1079, %v1143
    %v1176 = vadd.f32 %v1080, %v1144
    %v1177 = vadd.f32 %v1081, %v1145
    %v1178 = vadd.f32 %v1082, %v1146
    %v1179 = vadd.f32 %v1083, %v1147
    %v1180 = vadd.f32 %v1084, %v1148
    %v1181 = vadd.f32 %v1085, %v1149
    %v1182 = vadd.f32 %v1086, %v1150
    %v1183 = vadd.f32 %v1087, %v1151
    %v1184 = vadd.f32 %v1088, %v1152
    %v1185 = vadd.f32 %v1089, %v1153
    %v1186 = vadd.f32 %v1090, %v1154
    %v1187 = vadd.f32 %v1091, %v1155
    %v1188 = vadd.f32 %v1092, %v1156
    %v1189 = vadd.f32 %v1093, %v1157
    %v1190 = vadd.f32 %v1094, %v1158
    %v1191 = vadd.f32 %v1095, %v1159
    %v1192 = vadd.f32 %v1096, %v1160
    %v1193 = vadd.f32 %v1097, %v1161
    %v1194 = vadd.f32 %v1098, %v1162
    %v1195 = vadd.f32 %v1099, %v1163
    %v1196 = vadd.f32 %v1100, %v1164
    %v1197 = vadd.f32 %v1101, %v1165
    %v1198 = vadd.f32 %v1102, %v1166
    %v1199 = vadd.f32 %v1103, %v1167
    %v1200 = vpack.c.bf16 %v1169, %v1168
    %v1201 = vpack.c.bf16 %v1171, %v1170
    %v1202 = vpack.c.bf16 %v1173, %v1172
    %v1203 = vpack.c.bf16 %v1175, %v1174
    %v1204 = vpack.c.bf16 %v1177, %v1176
    %v1205 = vpack.c.bf16 %v1179, %v1178
    %v1206 = vpack.c.bf16 %v1181, %v1180
    %v1207 = vpack.c.bf16 %v1183, %v1182
    %v1208 = vpack.c.bf16 %v1185, %v1184
    %v1209 = vpack.c.bf16 %v1187, %v1186
    %v1210 = vpack.c.bf16 %v1189, %v1188
    %v1211 = vpack.c.bf16 %v1191, %v1190
    %v1212 = vpack.c.bf16 %v1193, %v1192
    %v1213 = vpack.c.bf16 %v1195, %v1194
    %v1214 = vpack.c.bf16 %v1197, %v1196
    %v1215 = vpack.c.bf16 %v1199, %v1198
    %v1216 = vld [vmem:[%s7] sm:$0xf]
    %v1217 = vld [vmem:[%s7 + $0x4] sm:$0xf]
    %v1218 = vld [vmem:[%s7 + $0x8] sm:$0xf]
    %v1219 = vld [vmem:[%s7 + $0xc] sm:$0xf]
    %v1220 = vld [vmem:[%s7 + $0x10] sm:$0xf]
    %v1221 = vld [vmem:[%s7 + $0x14] sm:$0xf]
    %v1222 = vld [vmem:[%s7 + $0x18] sm:$0xf]
    %v1223 = vld [vmem:[%s7 + $0x1c] sm:$0xf]
    %v1224 = vld [vmem:[%s7 + $0x20] sm:$0xf]
    %v1225 = vld [vmem:[%s7 + $0x24] sm:$0xf]
    %v1226 = vld [vmem:[%s7 + $0x28] sm:$0xf]
    %v1227 = vld [vmem:[%s7 + $0x2c] sm:$0xf]
    %v1228 = vld [vmem:[%s7 + $0x30] sm:$0xf]
    %v1229 = vld [vmem:[%s7 + $0x34] sm:$0xf]
    %v1230 = vld [vmem:[%s7 + $0x38] sm:$0xf]
    %v1231 = vld [vmem:[%s7 + $0x3c] sm:$0xf]
    %v1232 = vld [vmem:[%s8] sm:$0x1]
    %v1234 = vperm.slane %v1232, 0
    %v1252 = vunpack.c.l.b16 %v1216
    %v1253 = vunpack.c.l.b16 %v1217
    %v1254 = vunpack.c.l.b16 %v1218
    %v1255 = vunpack.c.l.b16 %v1219
    %v1256 = vunpack.c.l.b16 %v1220
    %v1257 = vunpack.c.l.b16 %v1221
    %v1258 = vunpack.c.l.b16 %v1222
    %v1259 = vunpack.c.l.b16 %v1223
    %v1260 = vunpack.c.l.b16 %v1224
    %v1261 = vunpack.c.l.b16 %v1225
    %v1262 = vunpack.c.l.b16 %v1226
    %v1263 = vunpack.c.l.b16 %v1227
    %v1264 = vunpack.c.l.b16 %v1228
    %v1265 = vunpack.c.l.b16 %v1229
    %v1266 = vunpack.c.l.b16 %v1230
    %v1267 = vunpack.c.l.b16 %v1231
    %v1268 = vpack.c.b16 %v1253, %v1252
    %v1269 = vpack.c.b16 %v1255, %v1254
    %v1270 = vpack.c.b16 %v1257, %v1256
    %v1271 = vpack.c.b16 %v1259, %v1258
    %v1272 = vpack.c.b16 %v1261, %v1260
    %v1273 = vpack.c.b16 %v1263, %v1262
    %v1274 = vpack.c.b16 %v1265, %v1264
    %v1275 = vpack.c.b16 %v1267, %v1266
    %1284 = vmatpush.bf16.msra.mxu0 %v1275
    %1285 = vmatpush.bf16.msra.mxu0 %v1274
    %1286 = vmatpush.bf16.msra.mxu0 %v1273
    %1287 = vmatpush.bf16.msra.mxu0 %v1272
    %1288 = vmatpush.bf16.msra.mxu0 %v1271
    %1289 = vmatpush.bf16.msra.mxu0 %v1270
    %1290 = vmatpush.bf16.msra.mxu0 %v1269
    %1291 = vmatpush.bf16.msra.mxu0 %v1268
    %1292 = vmatmul.bf16.gmra.mxu0 %v1200
    %v1293 = vpop.f32.mrf.mxu0
    %v1294 = vadd.f32 %v1234, %v1293
    %v1295 = vpop.f32.mrf.mxu0
    %v1296 = vadd.f32 %v1234, %v1295
    %1297 = vmatmul.bf16.gmra.mxu0 %v1201
    %v1298 = vpop.f32.mrf.mxu0
    %v1299 = vadd.f32 %v1234, %v1298
    %v1300 = vpop.f32.mrf.mxu0
    %v1301 = vadd.f32 %v1234, %v1300
    %1302 = vmatmul.bf16.gmra.mxu0 %v1202
    %v1303 = vpop.f32.mrf.mxu0
    %v1304 = vadd.f32 %v1234, %v1303
    %v1305 = vpop.f32.mrf.mxu0
    %v1306 = vadd.f32 %v1234, %v1305
    %1307 = vmatmul.bf16.gmra.mxu0 %v1203
    %v1308 = vpop.f32.mrf.mxu0
    %v1309 = vadd.f32 %v1234, %v1308
    %v1310 = vpop.f32.mrf.mxu0
    %v1311 = vadd.f32 %v1234, %v1310
    %1312 = vmatmul.bf16.gmra.mxu0 %v1204
    %v1313 = vpop.f32.mrf.mxu0
    %v1314 = vadd.f32 %v1234, %v1313
    %v1315 = vpop.f32.mrf.mxu0
    %v1316 = vadd.f32 %v1234, %v1315
    %1317 = vmatmul.bf16.gmra.mxu0 %v1205
    %v1318 = vpop.f32.mrf.mxu0
    %v1319 = vadd.f32 %v1234, %v1318
    %v1320 = vpop.f32.mrf.mxu0
    %v1321 = vadd.f32 %v1234, %v1320
    %1322 = vmatmul.bf16.gmra.mxu0 %v1206
    %v1323 = vpop.f32.mrf.mxu0
    %v1324 = vadd.f32 %v1234, %v1323
    %v1325 = vpop.f32.mrf.mxu0
    %v1326 = vadd.f32 %v1234, %v1325
    %1327 = vmatmul.bf16.gmra.mxu0 %v1207
    %v1328 = vpop.f32.mrf.mxu0
    %v1329 = vadd.f32 %v1234, %v1328
    %v1330 = vpop.f32.mrf.mxu0
    %v1331 = vadd.f32 %v1234, %v1330
    %1332 = vmatmul.bf16.gmra.mxu0 %v1208
    %v1333 = vpop.f32.mrf.mxu0
    %v1334 = vadd.f32 %v1234, %v1333
    %v1335 = vpop.f32.mrf.mxu0
    %v1336 = vadd.f32 %v1234, %v1335
    %1337 = vmatmul.bf16.gmra.mxu0 %v1209
    %v1338 = vpop.f32.mrf.mxu0
    %v1339 = vadd.f32 %v1234, %v1338
    %v1340 = vpop.f32.mrf.mxu0
    %v1341 = vadd.f32 %v1234, %v1340
    %1342 = vmatmul.bf16.gmra.mxu0 %v1210
    %v1343 = vpop.f32.mrf.mxu0
    %v1344 = vadd.f32 %v1234, %v1343
    %v1345 = vpop.f32.mrf.mxu0
    %v1346 = vadd.f32 %v1234, %v1345
    %1347 = vmatmul.bf16.gmra.mxu0 %v1211
    %v1348 = vpop.f32.mrf.mxu0
    %v1349 = vadd.f32 %v1234, %v1348
    %v1350 = vpop.f32.mrf.mxu0
    %v1351 = vadd.f32 %v1234, %v1350
    %1352 = vmatmul.bf16.gmra.mxu0 %v1212
    %v1353 = vpop.f32.mrf.mxu0
    %v1354 = vadd.f32 %v1234, %v1353
    %v1355 = vpop.f32.mrf.mxu0
    %v1356 = vadd.f32 %v1234, %v1355
    %1357 = vmatmul.bf16.gmra.mxu0 %v1213
    %v1358 = vpop.f32.mrf.mxu0
    %v1359 = vadd.f32 %v1234, %v1358
    %v1360 = vpop.f32.mrf.mxu0
    %v1361 = vadd.f32 %v1234, %v1360
    %1362 = vmatmul.bf16.gmra.mxu0 %v1214
    %v1363 = vpop.f32.mrf.mxu0
    %v1364 = vadd.f32 %v1234, %v1363
    %v1365 = vpop.f32.mrf.mxu0
    %v1366 = vadd.f32 %v1234, %v1365
    %1367 = vmatmul.bf16.gmra.mxu0 %v1215
    %v1368 = vpop.f32.mrf.mxu0
    %v1369 = vadd.f32 %v1234, %v1368
    %v1370 = vpop.f32.mrf.mxu0
    %v1371 = vadd.f32 %v1234, %v1370
    %1372 = vdwg.mxu0
    %v1373 = vlaneseq
    %v1374 = vand.u32 %v1373, 127
    %vm1375 = vcmp.lt.s32.totalorder %v1374, 4
    %v1376 = vsel %vm1375, %v1294, -1e+30
    %v1377 = vsel %vm1375, %v1296, -1e+30
    %v1378 = vsel %vm1375, %v1299, -1e+30
    %v1379 = vsel %vm1375, %v1301, -1e+30
    %v1380 = vsel %vm1375, %v1304, -1e+30
    %v1381 = vsel %vm1375, %v1306, -1e+30
    %v1382 = vsel %vm1375, %v1309, -1e+30
    %v1383 = vsel %vm1375, %v1311, -1e+30
    %v1384 = vsel %vm1375, %v1314, -1e+30
    %v1385 = vsel %vm1375, %v1316, -1e+30
    %v1386 = vsel %vm1375, %v1319, -1e+30
    %v1387 = vsel %vm1375, %v1321, -1e+30
    %v1388 = vsel %vm1375, %v1324, -1e+30
    %v1389 = vsel %vm1375, %v1326, -1e+30
    %v1390 = vsel %vm1375, %v1329, -1e+30
    %v1391 = vsel %vm1375, %v1331, -1e+30
    %v1392 = vsel %vm1375, %v1334, -1e+30
    %v1393 = vsel %vm1375, %v1336, -1e+30
    %v1394 = vsel %vm1375, %v1339, -1e+30
    %v1395 = vsel %vm1375, %v1341, -1e+30
    %v1396 = vsel %vm1375, %v1344, -1e+30
    %v1397 = vsel %vm1375, %v1346, -1e+30
    %v1398 = vsel %vm1375, %v1349, -1e+30
    %v1399 = vsel %vm1375, %v1351, -1e+30
    %v1400 = vsel %vm1375, %v1354, -1e+30
    %v1401 = vsel %vm1375, %v1356, -1e+30
    %v1402 = vsel %vm1375, %v1359, -1e+30
    %v1403 = vsel %vm1375, %v1361, -1e+30
    %v1404 = vsel %vm1375, %v1364, -1e+30
    %v1405 = vsel %vm1375, %v1366, -1e+30
    %v1406 = vsel %vm1375, %v1369, -1e+30
    %v1407 = vsel %vm1375, %v1371, -1e+30
    %1408 = vmax.xlane.f32.xlu0 %v1376
    %v1409 = vpop.xlane.xlu0 %1408
    %1410 = vmax.xlane.f32.xlu0 %v1377
    %v1411 = vpop.xlane.xlu0 %1410
    %1412 = vmax.xlane.f32.xlu0 %v1378
    %v1413 = vpop.xlane.xlu0 %1412
    %1414 = vmax.xlane.f32.xlu0 %v1379
    %v1415 = vpop.xlane.xlu0 %1414
    %1416 = vmax.xlane.f32.xlu0 %v1380
    %v1417 = vpop.xlane.xlu0 %1416
    %1418 = vmax.xlane.f32.xlu0 %v1381
    %v1419 = vpop.xlane.xlu0 %1418
    %1420 = vmax.xlane.f32.xlu0 %v1382
    %v1421 = vpop.xlane.xlu0 %1420
    %1422 = vmax.xlane.f32.xlu0 %v1383
    %v1423 = vpop.xlane.xlu0 %1422
    %1424 = vmax.xlane.f32.xlu0 %v1384
    %v1425 = vpop.xlane.xlu0 %1424
    %1426 = vmax.xlane.f32.xlu0 %v1385
    %v1427 = vpop.xlane.xlu0 %1426
    %1428 = vmax.xlane.f32.xlu0 %v1386
    %v1429 = vpop.xlane.xlu0 %1428
    %1430 = vmax.xlane.f32.xlu0 %v1387
    %v1431 = vpop.xlane.xlu0 %1430
    %1432 = vmax.xlane.f32.xlu0 %v1388
    %v1433 = vpop.xlane.xlu0 %1432
    %1434 = vmax.xlane.f32.xlu0 %v1389
    %v1435 = vpop.xlane.xlu0 %1434
    %1436 = vmax.xlane.f32.xlu0 %v1390
    %v1437 = vpop.xlane.xlu0 %1436
    %1438 = vmax.xlane.f32.xlu0 %v1391
    %v1439 = vpop.xlane.xlu0 %1438
    %1440 = vmax.xlane.f32.xlu0 %v1392
    %v1441 = vpop.xlane.xlu0 %1440
    %1442 = vmax.xlane.f32.xlu0 %v1393
    %v1443 = vpop.xlane.xlu0 %1442
    %1444 = vmax.xlane.f32.xlu0 %v1394
    %v1445 = vpop.xlane.xlu0 %1444
    %1446 = vmax.xlane.f32.xlu0 %v1395
    %v1447 = vpop.xlane.xlu0 %1446
    %1448 = vmax.xlane.f32.xlu0 %v1396
    %v1449 = vpop.xlane.xlu0 %1448
    %1450 = vmax.xlane.f32.xlu0 %v1397
    %v1451 = vpop.xlane.xlu0 %1450
    %1452 = vmax.xlane.f32.xlu0 %v1398
    %v1453 = vpop.xlane.xlu0 %1452
    %1454 = vmax.xlane.f32.xlu0 %v1399
    %v1455 = vpop.xlane.xlu0 %1454
    %1456 = vmax.xlane.f32.xlu0 %v1400
    %v1457 = vpop.xlane.xlu0 %1456
    %1458 = vmax.xlane.f32.xlu0 %v1401
    %v1459 = vpop.xlane.xlu0 %1458
    %1460 = vmax.xlane.f32.xlu0 %v1402
    %v1461 = vpop.xlane.xlu0 %1460
    %1462 = vmax.xlane.f32.xlu0 %v1403
    %v1463 = vpop.xlane.xlu0 %1462
    %1464 = vmax.xlane.f32.xlu0 %v1404
    %v1465 = vpop.xlane.xlu0 %1464
    %1466 = vmax.xlane.f32.xlu0 %v1405
    %v1467 = vpop.xlane.xlu0 %1466
    %1468 = vmax.xlane.f32.xlu0 %v1406
    %v1469 = vpop.xlane.xlu0 %1468
    %1470 = vmax.xlane.f32.xlu0 %v1407
    %v1471 = vpop.xlane.xlu0 %1470
    %v1472 = vsub.f32 %v1376, %v1409
    %v1473 = vsub.f32 %v1377, %v1411
    %v1474 = vsub.f32 %v1378, %v1413
    %v1475 = vsub.f32 %v1379, %v1415
    %v1476 = vsub.f32 %v1380, %v1417
    %v1477 = vsub.f32 %v1381, %v1419
    %v1478 = vsub.f32 %v1382, %v1421
    %v1479 = vsub.f32 %v1383, %v1423
    %v1480 = vsub.f32 %v1384, %v1425
    %v1481 = vsub.f32 %v1385, %v1427
    %v1482 = vsub.f32 %v1386, %v1429
    %v1483 = vsub.f32 %v1387, %v1431
    %v1484 = vsub.f32 %v1388, %v1433
    %v1485 = vsub.f32 %v1389, %v1435
    %v1486 = vsub.f32 %v1390, %v1437
    %v1487 = vsub.f32 %v1391, %v1439
    %v1488 = vsub.f32 %v1392, %v1441
    %v1489 = vsub.f32 %v1393, %v1443
    %v1490 = vsub.f32 %v1394, %v1445
    %v1491 = vsub.f32 %v1395, %v1447
    %v1492 = vsub.f32 %v1396, %v1449
    %v1493 = vsub.f32 %v1397, %v1451
    %v1494 = vsub.f32 %v1398, %v1453
    %v1495 = vsub.f32 %v1399, %v1455
    %v1496 = vsub.f32 %v1400, %v1457
    %v1497 = vsub.f32 %v1401, %v1459
    %v1498 = vsub.f32 %v1402, %v1461
    %v1499 = vsub.f32 %v1403, %v1463
    %v1500 = vsub.f32 %v1404, %v1465
    %v1501 = vsub.f32 %v1405, %v1467
    %v1502 = vsub.f32 %v1406, %v1469
    %v1503 = vsub.f32 %v1407, %v1471
    %v1504 = vmul.f32 %v1472, 1.442695
    %v1505 = vpow.pop %v1504
    %v1506 = vmul.f32 %v1473, 1.442695
    %v1507 = vpow.pop %v1506
    %v1508 = vmul.f32 %v1474, 1.442695
    %v1509 = vpow.pop %v1508
    %v1510 = vmul.f32 %v1475, 1.442695
    %v1511 = vpow.pop %v1510
    %v1512 = vmul.f32 %v1476, 1.442695
    %v1513 = vpow.pop %v1512
    %v1514 = vmul.f32 %v1477, 1.442695
    %v1515 = vpow.pop %v1514
    %v1516 = vmul.f32 %v1478, 1.442695
    %v1517 = vpow.pop %v1516
    %v1518 = vmul.f32 %v1479, 1.442695
    %v1519 = vpow.pop %v1518
    %v1520 = vmul.f32 %v1480, 1.442695
    %v1521 = vpow.pop %v1520
    %v1522 = vmul.f32 %v1481, 1.442695
    %v1523 = vpow.pop %v1522
    %v1524 = vmul.f32 %v1482, 1.442695
    %v1525 = vpow.pop %v1524
    %v1526 = vmul.f32 %v1483, 1.442695
    %v1527 = vpow.pop %v1526
    %v1528 = vmul.f32 %v1484, 1.442695
    %v1529 = vpow.pop %v1528
    %v1530 = vmul.f32 %v1485, 1.442695
    %v1531 = vpow.pop %v1530
    %v1532 = vmul.f32 %v1486, 1.442695
    %v1533 = vpow.pop %v1532
    %v1534 = vmul.f32 %v1487, 1.442695
    %v1535 = vpow.pop %v1534
    %v1536 = vmul.f32 %v1488, 1.442695
    %v1537 = vpow.pop %v1536
    %v1538 = vmul.f32 %v1489, 1.442695
    %v1539 = vpow.pop %v1538
    %v1540 = vmul.f32 %v1490, 1.442695
    %v1541 = vpow.pop %v1540
    %v1542 = vmul.f32 %v1491, 1.442695
    %v1543 = vpow.pop %v1542
    %v1544 = vmul.f32 %v1492, 1.442695
    %v1545 = vpow.pop %v1544
    %v1546 = vmul.f32 %v1493, 1.442695
    %v1547 = vpow.pop %v1546
    %v1548 = vmul.f32 %v1494, 1.442695
    %v1549 = vpow.pop %v1548
    %v1550 = vmul.f32 %v1495, 1.442695
    %v1551 = vpow.pop %v1550
    %v1552 = vmul.f32 %v1496, 1.442695
    %v1553 = vpow.pop %v1552
    %v1554 = vmul.f32 %v1497, 1.442695
    %v1555 = vpow.pop %v1554
    %v1556 = vmul.f32 %v1498, 1.442695
    %v1557 = vpow.pop %v1556
    %v1558 = vmul.f32 %v1499, 1.442695
    %v1559 = vpow.pop %v1558
    %v1560 = vmul.f32 %v1500, 1.442695
    %v1561 = vpow.pop %v1560
    %v1562 = vmul.f32 %v1501, 1.442695
    %v1563 = vpow.pop %v1562
    %v1564 = vmul.f32 %v1502, 1.442695
    %v1565 = vpow.pop %v1564
    %v1566 = vmul.f32 %v1503, 1.442695
    %v1567 = vpow.pop %v1566
    %1568 = vadd.xlane.f32.xlu0 %v1505
    %v1569 = vpop.xlane.xlu0 %1568
    %1570 = vadd.xlane.f32.xlu0 %v1507
    %v1571 = vpop.xlane.xlu0 %1570
    %1572 = vadd.xlane.f32.xlu0 %v1509
    %v1573 = vpop.xlane.xlu0 %1572
    %1574 = vadd.xlane.f32.xlu0 %v1511
    %v1575 = vpop.xlane.xlu0 %1574
    %1576 = vadd.xlane.f32.xlu0 %v1513
    %v1577 = vpop.xlane.xlu0 %1576
    %1578 = vadd.xlane.f32.xlu0 %v1515
    %v1579 = vpop.xlane.xlu0 %1578
    %1580 = vadd.xlane.f32.xlu0 %v1517
    %v1581 = vpop.xlane.xlu0 %1580
    %1582 = vadd.xlane.f32.xlu0 %v1519
    %v1583 = vpop.xlane.xlu0 %1582
    %1584 = vadd.xlane.f32.xlu0 %v1521
    %v1585 = vpop.xlane.xlu0 %1584
    %1586 = vadd.xlane.f32.xlu0 %v1523
    %v1587 = vpop.xlane.xlu0 %1586
    %1588 = vadd.xlane.f32.xlu0 %v1525
    %v1589 = vpop.xlane.xlu0 %1588
    %1590 = vadd.xlane.f32.xlu0 %v1527
    %v1591 = vpop.xlane.xlu0 %1590
    %1592 = vadd.xlane.f32.xlu0 %v1529
    %v1593 = vpop.xlane.xlu0 %1592
    %1594 = vadd.xlane.f32.xlu0 %v1531
    %v1595 = vpop.xlane.xlu0 %1594
    %1596 = vadd.xlane.f32.xlu0 %v1533
    %v1597 = vpop.xlane.xlu0 %1596
    %1598 = vadd.xlane.f32.xlu0 %v1535
    %v1599 = vpop.xlane.xlu0 %1598
    %1600 = vadd.xlane.f32.xlu0 %v1537
    %v1601 = vpop.xlane.xlu0 %1600
    %1602 = vadd.xlane.f32.xlu0 %v1539
    %v1603 = vpop.xlane.xlu0 %1602
    %1604 = vadd.xlane.f32.xlu0 %v1541
    %v1605 = vpop.xlane.xlu0 %1604
    %1606 = vadd.xlane.f32.xlu0 %v1543
    %v1607 = vpop.xlane.xlu0 %1606
    %1608 = vadd.xlane.f32.xlu0 %v1545
    %v1609 = vpop.xlane.xlu0 %1608
    %1610 = vadd.xlane.f32.xlu0 %v1547
    %v1611 = vpop.xlane.xlu0 %1610
    %1612 = vadd.xlane.f32.xlu0 %v1549
    %v1613 = vpop.xlane.xlu0 %1612
    %1614 = vadd.xlane.f32.xlu0 %v1551
    %v1615 = vpop.xlane.xlu0 %1614
    %1616 = vadd.xlane.f32.xlu0 %v1553
    %v1617 = vpop.xlane.xlu0 %1616
    %1618 = vadd.xlane.f32.xlu0 %v1555
    %v1619 = vpop.xlane.xlu0 %1618
    %1620 = vadd.xlane.f32.xlu0 %v1557
    %v1621 = vpop.xlane.xlu0 %1620
    %1622 = vadd.xlane.f32.xlu0 %v1559
    %v1623 = vpop.xlane.xlu0 %1622
    %1624 = vadd.xlane.f32.xlu0 %v1561
    %v1625 = vpop.xlane.xlu0 %1624
    %1626 = vadd.xlane.f32.xlu0 %v1563
    %v1627 = vpop.xlane.xlu0 %1626
    %1628 = vadd.xlane.f32.xlu0 %v1565
    %v1629 = vpop.xlane.xlu0 %1628
    %1630 = vadd.xlane.f32.xlu0 %v1567
    %v1631 = vpop.xlane.xlu0 %1630
    %v1632 = vlog2.pop %v1569
    %v1633 = vmul.f32 %v1632, 0.6931472
    %v1634 = vlog2.pop %v1571
    %v1635 = vmul.f32 %v1634, 0.6931472
    %v1636 = vlog2.pop %v1573
    %v1637 = vmul.f32 %v1636, 0.6931472
    %v1638 = vlog2.pop %v1575
    %v1639 = vmul.f32 %v1638, 0.6931472
    %v1640 = vlog2.pop %v1577
    %v1641 = vmul.f32 %v1640, 0.6931472
    %v1642 = vlog2.pop %v1579
    %v1643 = vmul.f32 %v1642, 0.6931472
    %v1644 = vlog2.pop %v1581
    %v1645 = vmul.f32 %v1644, 0.6931472
    %v1646 = vlog2.pop %v1583
    %v1647 = vmul.f32 %v1646, 0.6931472
    %v1648 = vlog2.pop %v1585
    %v1649 = vmul.f32 %v1648, 0.6931472
    %v1650 = vlog2.pop %v1587
    %v1651 = vmul.f32 %v1650, 0.6931472
    %v1652 = vlog2.pop %v1589
    %v1653 = vmul.f32 %v1652, 0.6931472
    %v1654 = vlog2.pop %v1591
    %v1655 = vmul.f32 %v1654, 0.6931472
    %v1656 = vlog2.pop %v1593
    %v1657 = vmul.f32 %v1656, 0.6931472
    %v1658 = vlog2.pop %v1595
    %v1659 = vmul.f32 %v1658, 0.6931472
    %v1660 = vlog2.pop %v1597
    %v1661 = vmul.f32 %v1660, 0.6931472
    %v1662 = vlog2.pop %v1599
    %v1663 = vmul.f32 %v1662, 0.6931472
    %v1664 = vlog2.pop %v1601
    %v1665 = vmul.f32 %v1664, 0.6931472
    %v1666 = vlog2.pop %v1603
    %v1667 = vmul.f32 %v1666, 0.6931472
    %v1668 = vlog2.pop %v1605
    %v1669 = vmul.f32 %v1668, 0.6931472
    %v1670 = vlog2.pop %v1607
    %v1671 = vmul.f32 %v1670, 0.6931472
    %v1672 = vlog2.pop %v1609
    %v1673 = vmul.f32 %v1672, 0.6931472
    %v1674 = vlog2.pop %v1611
    %v1675 = vmul.f32 %v1674, 0.6931472
    %v1676 = vlog2.pop %v1613
    %v1677 = vmul.f32 %v1676, 0.6931472
    %v1678 = vlog2.pop %v1615
    %v1679 = vmul.f32 %v1678, 0.6931472
    %v1680 = vlog2.pop %v1617
    %v1681 = vmul.f32 %v1680, 0.6931472
    %v1682 = vlog2.pop %v1619
    %v1683 = vmul.f32 %v1682, 0.6931472
    %v1684 = vlog2.pop %v1621
    %v1685 = vmul.f32 %v1684, 0.6931472
    %v1686 = vlog2.pop %v1623
    %v1687 = vmul.f32 %v1686, 0.6931472
    %v1688 = vlog2.pop %v1625
    %v1689 = vmul.f32 %v1688, 0.6931472
    %v1690 = vlog2.pop %v1627
    %v1691 = vmul.f32 %v1690, 0.6931472
    %v1692 = vlog2.pop %v1629
    %v1693 = vmul.f32 %v1692, 0.6931472
    %v1694 = vlog2.pop %v1631
    %v1695 = vmul.f32 %v1694, 0.6931472
    %v1696 = vsub.f32 %v1472, %v1633
    %v1697 = vsub.f32 %v1473, %v1635
    %v1698 = vsub.f32 %v1474, %v1637
    %v1699 = vsub.f32 %v1475, %v1639
    %v1700 = vsub.f32 %v1476, %v1641
    %v1701 = vsub.f32 %v1477, %v1643
    %v1702 = vsub.f32 %v1478, %v1645
    %v1703 = vsub.f32 %v1479, %v1647
    %v1704 = vsub.f32 %v1480, %v1649
    %v1705 = vsub.f32 %v1481, %v1651
    %v1706 = vsub.f32 %v1482, %v1653
    %v1707 = vsub.f32 %v1483, %v1655
    %v1708 = vsub.f32 %v1484, %v1657
    %v1709 = vsub.f32 %v1485, %v1659
    %v1710 = vsub.f32 %v1486, %v1661
    %v1711 = vsub.f32 %v1487, %v1663
    %v1712 = vsub.f32 %v1488, %v1665
    %v1713 = vsub.f32 %v1489, %v1667
    %v1714 = vsub.f32 %v1490, %v1669
    %v1715 = vsub.f32 %v1491, %v1671
    %v1716 = vsub.f32 %v1492, %v1673
    %v1717 = vsub.f32 %v1493, %v1675
    %v1718 = vsub.f32 %v1494, %v1677
    %v1719 = vsub.f32 %v1495, %v1679
    %v1720 = vsub.f32 %v1496, %v1681
    %v1721 = vsub.f32 %v1497, %v1683
    %v1722 = vsub.f32 %v1498, %v1685
    %v1723 = vsub.f32 %v1499, %v1687
    %v1724 = vsub.f32 %v1500, %v1689
    %v1725 = vsub.f32 %v1501, %v1691
    %v1726 = vsub.f32 %v1502, %v1693
    %v1727 = vsub.f32 %v1503, %v1695
    %1728 = vst [vmem:[%s9] sm:$0xff] %v1696
    %1729 = vst [vmem:[%s9 + $0x8] sm:$0xff] %v1697
    %1730 = vst [vmem:[%s9 + $0x10] sm:$0xff] %v1698
    %1731 = vst [vmem:[%s9 + $0x18] sm:$0xff] %v1699
    %1732 = vst [vmem:[%s9 + $0x20] sm:$0xff] %v1700
    %1733 = vst [vmem:[%s9 + $0x28] sm:$0xff] %v1701
    %1734 = vst [vmem:[%s9 + $0x30] sm:$0xff] %v1702
    %1735 = vst [vmem:[%s9 + $0x38] sm:$0xff] %v1703
    %1736 = vst [vmem:[%s9 + $0x40] sm:$0xff] %v1704
    %1737 = vst [vmem:[%s9 + $0x48] sm:$0xff] %v1705
    %1738 = vst [vmem:[%s9 + $0x50] sm:$0xff] %v1706
    %1739 = vst [vmem:[%s9 + $0x58] sm:$0xff] %v1707
    %1740 = vst [vmem:[%s9 + $0x60] sm:$0xff] %v1708
    %1741 = vst [vmem:[%s9 + $0x68] sm:$0xff] %v1709
    %1742 = vst [vmem:[%s9 + $0x70] sm:$0xff] %v1710
    %1743 = vst [vmem:[%s9 + $0x78] sm:$0xff] %v1711
    %1744 = vst [vmem:[%s9 + $0x80] sm:$0xff] %v1712
    %1745 = vst [vmem:[%s9 + $0x88] sm:$0xff] %v1713
    %1746 = vst [vmem:[%s9 + $0x90] sm:$0xff] %v1714
    %1747 = vst [vmem:[%s9 + $0x98] sm:$0xff] %v1715
    %1748 = vst [vmem:[%s9 + $0xa0] sm:$0xff] %v1716
    %1749 = vst [vmem:[%s9 + $0xa8] sm:$0xff] %v1717
    %1750 = vst [vmem:[%s9 + $0xb0] sm:$0xff] %v1718
    %1751 = vst [vmem:[%s9 + $0xb8] sm:$0xff] %v1719
    %1752 = vst [vmem:[%s9 + $0xc0] sm:$0xff] %v1720
    %1753 = vst [vmem:[%s9 + $0xc8] sm:$0xff] %v1721
    %1754 = vst [vmem:[%s9 + $0xd0] sm:$0xff] %v1722
    %1755 = vst [vmem:[%s9 + $0xd8] sm:$0xff] %v1723
    %1756 = vst [vmem:[%s9 + $0xe0] sm:$0xff] %v1724
    %1757 = vst [vmem:[%s9 + $0xe8] sm:$0xff] %v1725
    %1758 = vst [vmem:[%s9 + $0xf0] sm:$0xff] %v1726
    %1759 = vst [vmem:[%s9 + $0xf8] sm:$0xff] %v1727
  $region41: #{fagcn_forward.5} parent=0 // pred_fallthru
    _
  // Predicated region
  $region42: #{fagcn_forward.5} parent=0 // pred_check
    _
  $region43: #{fagcn_forward.5} parent=0 // pred_check_branch
    %1761 = sbr.rel (0) target = $region45
  $region44: #{fagcn_forward.5} parent=0 // pred_region
    _
  $region45: #{fagcn_forward.5} parent=0 // pred_fallthru
    _
  // Predicated region
  $region46: #{fagcn_forward.5} parent=0 // pred_check
    _
  $region47: #{fagcn_forward.5} parent=0 // pred_check_branch
    %1763 = sbr.rel (0) target = $region49
  $region48: #{fagcn_forward.5} parent=0 // pred_region
    _
  $region49: #{fagcn_forward.5} parent=0 // pred_fallthru
    _

</llo_original>
